<compile_context>
chip_gen: v7x
topology: tpu7x:2x2x1
jax: 0.10.0
libtpu: 0.0.40
codegen_flags: <defaults>
</compile_context>

<pallas_src>
import functools

import jax
import jax.numpy as jnp
from jax.experimental import pallas as pl
from jax.experimental.pallas import tpu as pltpu


def _round_up(x, m):
    return (x + m - 1) // m * m


def _largest_divisor_leq(n, cap):
    cap = max(1, min(n, cap))
    for d in range(cap, 0, -1):
        if n % d == 0:
            return d
    return 1


def _compiler_params(block_bytes, dim_semantics):
    # Double-buffered blocks must fit the scoped-VMEM budget; only raise the limit when
    # the default (32 MiB v6e/v7x, 16 MiB v5e) would not cover it.
    need = 2 * block_bytes + (2 << 20)
    kwargs = dict(dimension_semantics=dim_semantics)
    if need > (32 << 20):
        kwargs["vmem_limit_bytes"] = int(min(need, 64 << 20))
    return pltpu.CompilerParams(**kwargs)


# ---------------- fused 3x3 conv + bias + ReLU ----------------

def _conv3x3_relu_kernel(x_ref, w_ref, b_ref, o_ref, *, taps):
    """Fused 9-tap 3x3 conv: one MXU dot per image.

    x_ref: (NB, s*s, C_in_p, L)  bf16  phase-split, spatially flattened padded input
    w_ref: (C_out, 9*C_in_p)     bf16  tap-major packed weights
    b_ref: (C_out, 1)            f32
    o_ref: (NB, C_out, T)        f32   T = round_up(h_out*ws, 128); garbage cols sliced outside
    """
    w = w_ref[...]
    bias = b_ref[...]
    nb = o_ref.shape[0]
    t = o_ref.shape[2]
    for bi in range(nb):                        # static unroll; weights stay resident
        xb = x_ref[bi]                          # (s*s, C_in_p, L) bf16
        # Gather the 9 taps into one contraction operand -> single dot, K = 9*C_in_p.
        xcat = jnp.concatenate(
            [xb[pq, :, off:off + t] for pq, off in taps], axis=0)       # (9*C_in_p, T)
        acc = jnp.dot(w, xcat, preferred_element_type=jnp.float32)      # (C_out, T) f32
        o_ref[bi] = jnp.maximum(acc + bias, 0.0)


def conv3x3_relu(x, w, b, stride):
    """relu(conv2d(x, w, padding=1, stride=stride) + b) on NCHW input.

    x: (N, C_in, H, W) f32;  w: (C_out, C_in, 3, 3) f32;  b: (C_out,) f32.
    Returns (N, C_out, H_out, W_out) f32.
    """
    n, c_in, h, w_sp = x.shape
    c_out = w.shape[0]
    pad = 1
    h_out = (h + 2 * pad - 3) // stride + 1
    w_out = (w_sp + 2 * pad - 3) // stride + 1
    hp, wp = h + 2 * pad, w_sp + 2 * pad
    hs = -(-hp // stride)
    ws = -(-wp // stride)

    c_in_p = _round_up(c_in, 8)           # aligned tap chunks for the in-kernel bf16 concat
    t_valid = h_out * ws                  # valid flat-output length (garbage cols at [w_out, ws))
    t_pad = _round_up(t_valid, 128)       # lane-dense (unmasked) output stores
    max_off = (2 // stride) * ws + (2 // stride)
    l_min = hs * ws
    l_need = max(l_min, max_off + t_pad)
    hs2 = hs + -(-(l_need - l_min) // ws)  # extra zero rows so every tap slice stays in bounds
    l = hs2 * ws

    # Single pad: channel round-up + conv halo + stride-phase / flat-L slack folded together.
    # Cast to bf16 here so the re-layout copy and the kernel DMA are half-width.
    xp = jnp.pad(x.astype(jnp.bfloat16),
                 ((0, 0), (0, c_in_p - c_in),
                  (pad, pad + hs2 * stride - hp),
                  (pad, pad + ws * stride - wp)))
    xph = xp.reshape(n, c_in_p, hs2, stride, ws, stride)
    xflat = xph.transpose(0, 3, 5, 1, 2, 4).reshape(n, stride * stride, c_in_p, l)

    # Weights packed tap-major: column block k (= kh*3+kw) of (C_out, 9*C_in_p) is w[:, :, kh, kw].
    wpad = jnp.pad(w, ((0, 0), (0, c_in_p - c_in), (0, 0), (0, 0)))
    w_flat = wpad.transpose(0, 2, 3, 1).reshape(c_out, 9 * c_in_p).astype(jnp.bfloat16)
    b2 = b.reshape(c_out, 1).astype(jnp.float32)

    taps = tuple(((kh % stride) * stride + (kw % stride),
                  (kh // stride) * ws + (kw // stride))
                 for kh in range(3) for kw in range(3))

    nb = _largest_divisor_leq(n, 8)       # several images per grid step; weights stay resident
    block_bytes = (nb * stride * stride * c_in_p * l * 2
                   + c_out * 9 * c_in_p * 2 + c_out * 4
                   + nb * c_out * t_pad * 4)

    out = pl.pallas_call(
        functools.partial(_conv3x3_relu_kernel, taps=taps),
        out_shape=jax.ShapeDtypeStruct((n, c_out, t_pad), jnp.float32),
        grid_spec=pltpu.PrefetchScalarGridSpec(
            num_scalar_prefetch=0,
            grid=(n // nb,),
            in_specs=[
                pl.BlockSpec((nb, stride * stride, c_in_p, l), lambda i: (i, 0, 0, 0)),
                pl.BlockSpec((c_out, 9 * c_in_p), lambda i: (0, 0)),
                pl.BlockSpec((c_out, 1), lambda i: (0, 0)),
            ],
            out_specs=pl.BlockSpec((nb, c_out, t_pad), lambda i: (i, 0, 0)),
        ),
        compiler_params=_compiler_params(block_bytes, ("parallel",)),
    )(xflat, w_flat, b2)

    # Drop the padded tail + garbage columns; output stays NCHW (no transpose).
    # TODO(synk): keep the phase-split flat layout between conv layers to skip this
    # reshape/slice round trip when the next consumer is another conv.
    out = out[:, :, :t_valid].reshape(n, c_out, h_out, ws)[..., :w_out]
    return out


# ---------------- batched bilinear upsample ----------------

def _bilinear_kernel(x_ref, wwt_ref, wh_ref, o_ref, *, flat_first):
    """Resize P planes: out[p] = Wh @ x[p] @ Ww^T."""
    x = x_ref[...]                               # (P, H, W) f32
    p, h, w = x.shape
    ho, wo = o_ref.shape[1], o_ref.shape[2]
    if flat_first:
        # Single (P*H, W) @ (W, Wo) matmul: no broadcast of the width interp matrix and
        # M = P*H for good MXU fill (leading-dim merge is layout-free since H % 8 == 0).
        tmp = jnp.dot(x.reshape(p * h, w), wwt_ref[...],
                      preferred_element_type=jnp.float32).reshape(p, h, wo)
    else:
        wwt_b = jnp.broadcast_to(wwt_ref[...][None], (p, w, wo))
        tmp = jnp.einsum('phw,pwq->phq', x, wwt_b, preferred_element_type=jnp.float32)
    # Height contraction kept batched (per review "or keep it batched"); Ho rows per plane
    # already give reasonable MXU fill at real sizes.
    wh_b = jnp.broadcast_to(wh_ref[...][None], (p, ho, h))
    out = jnp.einsum('poh,phq->poq', wh_b, tmp, preferred_element_type=jnp.float32)
    o_ref[...] = out.astype(o_ref.dtype)


def _bilinear_matrix(in_size, out_size):
    """(out_size, in_size) interp matrix matching PyTorch align_corners=False."""
    scale = in_size / out_size
    dst = jnp.arange(out_size, dtype=jnp.float32)
    src = jnp.maximum((dst + 0.5) * scale - 0.5, 0.0)      # PyTorch clamps the low end
    i0 = jnp.clip(jnp.floor(src).astype(jnp.int32), 0, in_size - 1)
    i1 = jnp.minimum(i0 + 1, in_size - 1)
    w1 = src - i0.astype(jnp.float32)
    w0 = 1.0 - w1
    m = jnp.zeros((out_size, in_size), jnp.float32)
    m = m.at[jnp.arange(out_size), i0].add(w0)
    m = m.at[jnp.arange(out_size), i1].add(w1)
    return m


def bilinear_upsample_nchw(x, scale_factor):
    """nn.Upsample(scale_factor, mode='bilinear') semantics on NCHW input."""
    n, c, h, w = x.shape
    h_out, w_out = int(h * scale_factor), int(w * scale_factor)
    if (h_out, w_out) == (h, w):
        return x                                  # scale 1.0: identity, skip the kernel
    wh = _bilinear_matrix(h, h_out)               # (Ho, H)
    wwt = _bilinear_matrix(w, w_out).T            # (W, Wo)
    nc = n * c
    planes = x.reshape(nc, h, w)
    # P*H ~ 256 fills the v6e/v7x MXU rows (harmless over-fill on v5e's 128); largest-divisor
    # choice avoids collapsing to one giant step for awkward nc.
    p = _largest_divisor_leq(nc, max(1, 256 // h))
    flat_first = (h % 8) == 0
    block_bytes = (p * h * w + h_out * h + w * w_out + p * h_out * w_out) * 4
    # NOTE: w_out is left lane-unpadded here: at these small w_out padding to 128 would store
    # ~8x the bytes (worse than the masked-vst penalty); production w_out is 128-aligned anyway.
    out = pl.pallas_call(
        functools.partial(_bilinear_kernel, flat_first=flat_first),
        out_shape=jax.ShapeDtypeStruct((nc, h_out, w_out), jnp.float32),
        grid_spec=pltpu.PrefetchScalarGridSpec(
            num_scalar_prefetch=0,
            grid=(nc // p,),
            in_specs=[
                pl.BlockSpec((p, h, w), lambda i: (i, 0, 0)),
                pl.BlockSpec((w, w_out), lambda i: (0, 0)),
                pl.BlockSpec((h_out, h), lambda i: (0, 0)),
            ],
            out_specs=pl.BlockSpec((p, h_out, w_out), lambda i: (i, 0, 0)),
        ),
        compiler_params=_compiler_params(block_bytes, ("parallel",)),
    )(planes, wwt, wh)
    return out.reshape(n, c, h_out, w_out)


# ---------------- backbone + wrapper ----------------

class SimpleBackbone:
    """Deterministic 2-stage conv backbone producing a 2-level NCHW feature pyramid."""

    def __init__(self, key, c_in=3, c1=8, c2=16):
        k1, k2, k3, k4 = jax.random.split(key, 4)
        self.w1 = jax.random.normal(k1, (c1, c_in, 3, 3), jnp.float32) * 0.1
        self.b1 = jax.random.normal(k2, (c1,), jnp.float32) * 0.1
        self.w2 = jax.random.normal(k3, (c2, c1, 3, 3), jnp.float32) * 0.1
        self.b2 = jax.random.normal(k4, (c2,), jnp.float32) * 0.1

    def __call__(self, x):
        f0 = conv3x3_relu(x, self.w1, self.b1, stride=1)     # (N, c1, H, W)
        f1 = conv3x3_relu(f0, self.w2, self.b2, stride=2)    # (N, c2, H/2, W/2)
        return {'features': [f0, f1]}


class BackboneWrapper:
    """Mirror of the PyTorch BackboneWrapper forward pass (NCHW in / NCHW out)."""

    def __init__(self, backbone, scale_factors):
        self.backbone = backbone
        self.scale_factors = scale_factors

    def __call__(self, x):
        y = self.backbone(x)['features']
        resized = [bilinear_upsample_nchw(y[i], s)
                   for i, s in enumerate(self.scale_factors)]
        # TODO(synk): fuse this concat into the resize out_specs (channel-offset index_map
        # + input_output_aliases) to save one feature-map round trip at production sizes.
        return jnp.concatenate(resized, axis=1)               # NCHW, no final transpose


if __name__ == "__main__":
    key = jax.random.PRNGKey(0)
    x = jax.random.normal(key, (2, 3, 16, 16), jnp.float32)   # NCHW

    backbone = SimpleBackbone(jax.random.PRNGKey(1))
    model = BackboneWrapper(backbone, scale_factors=(1.0, 2.0))

    out = jax.jit(lambda inp: model(inp))(x)
    out = jax.block_until_ready(out)
    assert out.shape == (2, 8 + 16, 16, 16), out.shape
    assert out.dtype == jnp.float32
    print("KERNEL_OK")
</pallas_src>

<mosaic_0001>
module attributes {stable_mosaic.version = 11 : i64} {
  func.func private @main(%arg0: i32) attributes {dimension_semantics = [#tpu.dimension_semantics<core_parallel>], iteration_bounds = array<i64: 2>, tpu.core_type = #tpu.core_type<sc_scalar_subcore>, window_params = []} {
    return
  }
}

module attributes {stable_mosaic.version = 11 : i64} {
  func.func private @main(%arg0: i32) attributes {dimension_semantics = [#tpu.dimension_semantics<core_parallel>], iteration_bounds = array<i64: 2>, tpu.core_type = #tpu.core_type<sc_scalar_subcore>, window_params = []} {
    return
  }
}

module attributes {stable_mosaic.version = 11 : i64} {
  func.func @_conv3x3_relu_kernel(%arg0: i32, %arg1: memref<2x1x8x432xbf16, #tpu.memory_space<vmem>>, %arg2: memref<8x72xbf16, #tpu.memory_space<vmem>>, %arg3: memref<8x1xf32, #tpu.memory_space<vmem>>, %arg4: memref<2x8x384xf32, #tpu.memory_space<vmem>>) attributes {dimension_semantics = [#tpu.dimension_semantics<parallel>], iteration_bounds = array<i64: 1>, scalar_prefetch = 0 : i64, scratch_operands = 0 : i64, tpu.core_type = #tpu.core_type<tc>, window_params = [{transform_indices = @transform_0, window_bounds = array<i64: 2, 1, 8, 432>}, {pipeline_mode = #tpu.pipeline_mode<synchronous>, transform_indices = @transform_1, window_bounds = array<i64: 8, 72>}, {pipeline_mode = #tpu.pipeline_mode<synchronous>, transform_indices = @transform_2, window_bounds = array<i64: 8, 1>}, {transform_indices = @transform_3, window_bounds = array<i64: 2, 8, 384>}]} {
    %c0 = arith.constant 0 : index
    %c0_0 = arith.constant 0 : index
    %0 = vector.load %arg2[%c0, %c0_0] : memref<8x72xbf16, #tpu.memory_space<vmem>>, vector<8x72xbf16>
    %c0_1 = arith.constant 0 : index
    %c0_2 = arith.constant 0 : index
    %1 = vector.load %arg3[%c0_1, %c0_2] : memref<8x1xf32, #tpu.memory_space<vmem>>, vector<8x1xf32>
    %c0_3 = arith.constant 0 : index
    %c0_4 = arith.constant 0 : index
    %c0_5 = arith.constant 0 : index
    %c0_6 = arith.constant 0 : index
    %2 = vector.load %arg1[%c0_3, %c0_4, %c0_5, %c0_6] : memref<2x1x8x432xbf16, #tpu.memory_space<vmem>>, vector<1x1x8x432xbf16>
    %3 = vector.shape_cast %2 : vector<1x1x8x432xbf16> to vector<1x8x432xbf16>
    %4 = vector.extract_strided_slice %3 {offsets = [0, 0, 0], sizes = [1, 8, 384], strides = [1, 1, 1]} : vector<1x8x432xbf16> to vector<1x8x384xbf16>
    %5 = vector.shape_cast %4 : vector<1x8x384xbf16> to vector<8x384xbf16>
    %6 = vector.extract_strided_slice %3 {offsets = [0, 0, 1], sizes = [1, 8, 384], strides = [1, 1, 1]} : vector<1x8x432xbf16> to vector<1x8x384xbf16>
    %7 = vector.shape_cast %6 : vector<1x8x384xbf16> to vector<8x384xbf16>
    %8 = vector.extract_strided_slice %3 {offsets = [0, 0, 2], sizes = [1, 8, 384], strides = [1, 1, 1]} : vector<1x8x432xbf16> to vector<1x8x384xbf16>
    %9 = vector.shape_cast %8 : vector<1x8x384xbf16> to vector<8x384xbf16>
    %10 = vector.extract_strided_slice %3 {offsets = [0, 0, 18], sizes = [1, 8, 384], strides = [1, 1, 1]} : vector<1x8x432xbf16> to vector<1x8x384xbf16>
    %11 = vector.shape_cast %10 : vector<1x8x384xbf16> to vector<8x384xbf16>
    %12 = vector.extract_strided_slice %3 {offsets = [0, 0, 19], sizes = [1, 8, 384], strides = [1, 1, 1]} : vector<1x8x432xbf16> to vector<1x8x384xbf16>
    %13 = vector.shape_cast %12 : vector<1x8x384xbf16> to vector<8x384xbf16>
    %14 = vector.extract_strided_slice %3 {offsets = [0, 0, 20], sizes = [1, 8, 384], strides = [1, 1, 1]} : vector<1x8x432xbf16> to vector<1x8x384xbf16>
    %15 = vector.shape_cast %14 : vector<1x8x384xbf16> to vector<8x384xbf16>
    %16 = vector.extract_strided_slice %3 {offsets = [0, 0, 36], sizes = [1, 8, 384], strides = [1, 1, 1]} : vector<1x8x432xbf16> to vector<1x8x384xbf16>
    %17 = vector.shape_cast %16 : vector<1x8x384xbf16> to vector<8x384xbf16>
    %18 = vector.extract_strided_slice %3 {offsets = [0, 0, 37], sizes = [1, 8, 384], strides = [1, 1, 1]} : vector<1x8x432xbf16> to vector<1x8x384xbf16>
    %19 = vector.shape_cast %18 : vector<1x8x384xbf16> to vector<8x384xbf16>
    %20 = vector.extract_strided_slice %3 {offsets = [0, 0, 38], sizes = [1, 8, 384], strides = [1, 1, 1]} : vector<1x8x432xbf16> to vector<1x8x384xbf16>
    %21 = vector.shape_cast %20 : vector<1x8x384xbf16> to vector<8x384xbf16>
    %22 = tpu.concatenate %5, %7, %9, %11, %13, %15, %17, %19, %21 in 0 : vector<8x384xbf16>, vector<8x384xbf16>, vector<8x384xbf16>, vector<8x384xbf16>, vector<8x384xbf16>, vector<8x384xbf16>, vector<8x384xbf16>, vector<8x384xbf16>, vector<8x384xbf16> -> vector<72x384xbf16>
    %cst = arith.constant dense<0.000000e+00> : vector<8x384xf32>
    %23 = tpu.matmul %0, %22, %cst {dimension_numbers = #tpu.dot_dimension_numbers<[1], [0], [0], [1], [0, 0, 1, 1], [], []>} : vector<8x72xbf16>, vector<72x384xbf16>, vector<8x384xf32> -> vector<8x384xf32>
    %24 = vector.broadcast %1 : vector<8x1xf32> to vector<8x384xf32>
    %25 = arith.addf %23, %24 : vector<8x384xf32>
    %cst_7 = arith.constant 0.000000e+00 : f32
    %26 = vector.broadcast %cst_7 : f32 to vector<8x384xf32>
    %27 = arith.maximumf %25, %26 : vector<8x384xf32>
    %c0_8 = arith.constant 0 : index
    %c0_9 = arith.constant 0 : index
    %c0_10 = arith.constant 0 : index
    %28 = vector.load %arg4[%c0_8, %c0_9, %c0_10] : memref<2x8x384xf32, #tpu.memory_space<vmem>>, vector<1x8x384xf32>
    %29 = vector.shape_cast %28 : vector<1x8x384xf32> to vector<8x384xf32>
    %30 = vector.shape_cast %27 : vector<8x384xf32> to vector<1x8x384xf32>
    tpu.vector_store %arg4[%c0_8, %c0_9, %c0_10], %30 {strides = array<i32>} : memref<2x8x384xf32, #tpu.memory_space<vmem>>, vector<1x8x384xf32>,
    %c1 = arith.constant 1 : index
    %c0_11 = arith.constant 0 : index
    %c0_12 = arith.constant 0 : index
    %c0_13 = arith.constant 0 : index
    %31 = vector.load %arg1[%c1, %c0_11, %c0_12, %c0_13] : memref<2x1x8x432xbf16, #tpu.memory_space<vmem>>, vector<1x1x8x432xbf16>
    %32 = vector.shape_cast %31 : vector<1x1x8x432xbf16> to vector<1x8x432xbf16>
    %33 = vector.extract_strided_slice %32 {offsets = [0, 0, 0], sizes = [1, 8, 384], strides = [1, 1, 1]} : vector<1x8x432xbf16> to vector<1x8x384xbf16>
    %34 = vector.shape_cast %33 : vector<1x8x384xbf16> to vector<8x384xbf16>
    %35 = vector.extract_strided_slice %32 {offsets = [0, 0, 1], sizes = [1, 8, 384], strides = [1, 1, 1]} : vector<1x8x432xbf16> to vector<1x8x384xbf16>
    %36 = vector.shape_cast %35 : vector<1x8x384xbf16> to vector<8x384xbf16>
    %37 = vector.extract_strided_slice %32 {offsets = [0, 0, 2], sizes = [1, 8, 384], strides = [1, 1, 1]} : vector<1x8x432xbf16> to vector<1x8x384xbf16>
    %38 = vector.shape_cast %37 : vector<1x8x384xbf16> to vector<8x384xbf16>
    %39 = vector.extract_strided_slice %32 {offsets = [0, 0, 18], sizes = [1, 8, 384], strides = [1, 1, 1]} : vector<1x8x432xbf16> to vector<1x8x384xbf16>
    %40 = vector.shape_cast %39 : vector<1x8x384xbf16> to vector<8x384xbf16>
    %41 = vector.extract_strided_slice %32 {offsets = [0, 0, 19], sizes = [1, 8, 384], strides = [1, 1, 1]} : vector<1x8x432xbf16> to vector<1x8x384xbf16>
    %42 = vector.shape_cast %41 : vector<1x8x384xbf16> to vector<8x384xbf16>
    %43 = vector.extract_strided_slice %32 {offsets = [0, 0, 20], sizes = [1, 8, 384], strides = [1, 1, 1]} : vector<1x8x432xbf16> to vector<1x8x384xbf16>
    %44 = vector.shape_cast %43 : vector<1x8x384xbf16> to vector<8x384xbf16>
    %45 = vector.extract_strided_slice %32 {offsets = [0, 0, 36], sizes = [1, 8, 384], strides = [1, 1, 1]} : vector<1x8x432xbf16> to vector<1x8x384xbf16>
    %46 = vector.shape_cast %45 : vector<1x8x384xbf16> to vector<8x384xbf16>
    %47 = vector.extract_strided_slice %32 {offsets = [0, 0, 37], sizes = [1, 8, 384], strides = [1, 1, 1]} : vector<1x8x432xbf16> to vector<1x8x384xbf16>
    %48 = vector.shape_cast %47 : vector<1x8x384xbf16> to vector<8x384xbf16>
    %49 = vector.extract_strided_slice %32 {offsets = [0, 0, 38], sizes = [1, 8, 384], strides = [1, 1, 1]} : vector<1x8x432xbf16> to vector<1x8x384xbf16>
    %50 = vector.shape_cast %49 : vector<1x8x384xbf16> to vector<8x384xbf16>
    %51 = tpu.concatenate %34, %36, %38, %40, %42, %44, %46, %48, %50 in 0 : vector<8x384xbf16>, vector<8x384xbf16>, vector<8x384xbf16>, vector<8x384xbf16>, vector<8x384xbf16>, vector<8x384xbf16>, vector<8x384xbf16>, vector<8x384xbf16>, vector<8x384xbf16> -> vector<72x384xbf16>
    %cst_14 = arith.constant dense<0.000000e+00> : vector<8x384xf32>
    %52 = tpu.matmul %0, %51, %cst_14 {dimension_numbers = #tpu.dot_dimension_numbers<[1], [0], [0], [1], [0, 0, 1, 1], [], []>} : vector<8x72xbf16>, vector<72x384xbf16>, vector<8x384xf32> -> vector<8x384xf32>
    %53 = vector.broadcast %1 : vector<8x1xf32> to vector<8x384xf32>
    %54 = arith.addf %52, %53 : vector<8x384xf32>
    %cst_15 = arith.constant 0.000000e+00 : f32
    %55 = vector.broadcast %cst_15 : f32 to vector<8x384xf32>
    %56 = arith.maximumf %54, %55 : vector<8x384xf32>
    %c1_16 = arith.constant 1 : index
    %c0_17 = arith.constant 0 : index
    %c0_18 = arith.constant 0 : index
    %57 = vector.load %arg4[%c1_16, %c0_17, %c0_18] : memref<2x8x384xf32, #tpu.memory_space<vmem>>, vector<1x8x384xf32>
    %58 = vector.shape_cast %57 : vector<1x8x384xf32> to vector<8x384xf32>
    %59 = vector.shape_cast %56 : vector<8x384xf32> to vector<1x8x384xf32>
    tpu.vector_store %arg4[%c1_16, %c0_17, %c0_18], %59 {strides = array<i32>} : memref<2x8x384xf32, #tpu.memory_space<vmem>>, vector<1x8x384xf32>,
    return
  }
  func.func @transform_0(%arg0: i32) -> (i32, i32, i32, i32) {
    %c0_i32 = arith.constant 0 : i32
    %c0_i32_0 = arith.constant 0 : i32
    %c0_i32_1 = arith.constant 0 : i32
    %c0_i32_2 = arith.constant 0 : i32
    return %arg0, %c0_i32, %c0_i32_0, %c0_i32_1 : i32, i32, i32, i32
  }
  func.func @transform_1(%arg0: i32) -> (i32, i32) {
    %c0_i32 = arith.constant 0 : i32
    %c0_i32_0 = arith.constant 0 : i32
    %c0_i32_1 = arith.constant 0 : i32
    return %c0_i32, %c0_i32_0 : i32, i32
  }
  func.func @transform_2(%arg0: i32) -> (i32, i32) {
    %c0_i32 = arith.constant 0 : i32
    %c0_i32_0 = arith.constant 0 : i32
    %c0_i32_1 = arith.constant 0 : i32
    return %c0_i32, %c0_i32_0 : i32, i32
  }
  func.func @transform_3(%arg0: i32) -> (i32, i32, i32) {
    %c0_i32 = arith.constant 0 : i32
    %c0_i32_0 = arith.constant 0 : i32
    %c0_i32_1 = arith.constant 0 : i32
    return %arg0, %c0_i32, %c0_i32_0 : i32, i32, i32
  }
}

module attributes {stable_mosaic.version = 11 : i64} {
  func.func @_conv3x3_relu_kernel(%arg0: i32, %arg1: memref<2x4x8x144xbf16, #tpu.memory_space<vmem>>, %arg2: memref<16x72xbf16, #tpu.memory_space<vmem>>, %arg3: memref<16x1xf32, #tpu.memory_space<vmem>>, %arg4: memref<2x16x128xf32, #tpu.memory_space<vmem>>) attributes {dimension_semantics = [#tpu.dimension_semantics<parallel>], iteration_bounds = array<i64: 1>, scalar_prefetch = 0 : i64, scratch_operands = 0 : i64, tpu.core_type = #tpu.core_type<tc>, window_params = [{transform_indices = @transform_0, window_bounds = array<i64: 2, 4, 8, 144>}, {pipeline_mode = #tpu.pipeline_mode<synchronous>, transform_indices = @transform_1, window_bounds = array<i64: 16, 72>}, {pipeline_mode = #tpu.pipeline_mode<synchronous>, transform_indices = @transform_2, window_bounds = array<i64: 16, 1>}, {transform_indices = @transform_3, window_bounds = array<i64: 2, 16, 128>}]} {
    %c0 = arith.constant 0 : index
    %c0_0 = arith.constant 0 : index
    %0 = vector.load %arg2[%c0, %c0_0] : memref<16x72xbf16, #tpu.memory_space<vmem>>, vector<16x72xbf16>
    %c0_1 = arith.constant 0 : index
    %c0_2 = arith.constant 0 : index
    %1 = vector.load %arg3[%c0_1, %c0_2] : memref<16x1xf32, #tpu.memory_space<vmem>>, vector<16x1xf32>
    %c0_3 = arith.constant 0 : index
    %c0_4 = arith.constant 0 : index
    %c0_5 = arith.constant 0 : index
    %c0_6 = arith.constant 0 : index
    %2 = vector.load %arg1[%c0_3, %c0_4, %c0_5, %c0_6] : memref<2x4x8x144xbf16, #tpu.memory_space<vmem>>, vector<1x4x8x144xbf16>
    %3 = vector.shape_cast %2 : vector<1x4x8x144xbf16> to vector<4x8x144xbf16>
    %4 = vector.extract_strided_slice %3 {offsets = [0, 0, 0], sizes = [1, 8, 128], strides = [1, 1, 1]} : vector<4x8x144xbf16> to vector<1x8x128xbf16>
    %5 = vector.shape_cast %4 : vector<1x8x128xbf16> to vector<8x128xbf16>
    %6 = vector.extract_strided_slice %3 {offsets = [1, 0, 0], sizes = [1, 8, 128], strides = [1, 1, 1]} : vector<4x8x144xbf16> to vector<1x8x128xbf16>
    %7 = vector.shape_cast %6 : vector<1x8x128xbf16> to vector<8x128xbf16>
    %8 = vector.extract_strided_slice %3 {offsets = [0, 0, 1], sizes = [1, 8, 128], strides = [1, 1, 1]} : vector<4x8x144xbf16> to vector<1x8x128xbf16>
    %9 = vector.shape_cast %8 : vector<1x8x128xbf16> to vector<8x128xbf16>
    %10 = vector.extract_strided_slice %3 {offsets = [2, 0, 0], sizes = [1, 8, 128], strides = [1, 1, 1]} : vector<4x8x144xbf16> to vector<1x8x128xbf16>
    %11 = vector.shape_cast %10 : vector<1x8x128xbf16> to vector<8x128xbf16>
    %12 = vector.extract_strided_slice %3 {offsets = [3, 0, 0], sizes = [1, 8, 128], strides = [1, 1, 1]} : vector<4x8x144xbf16> to vector<1x8x128xbf16>
    %13 = vector.shape_cast %12 : vector<1x8x128xbf16> to vector<8x128xbf16>
    %14 = vector.extract_strided_slice %3 {offsets = [2, 0, 1], sizes = [1, 8, 128], strides = [1, 1, 1]} : vector<4x8x144xbf16> to vector<1x8x128xbf16>
    %15 = vector.shape_cast %14 : vector<1x8x128xbf16> to vector<8x128xbf16>
    %16 = vector.extract_strided_slice %3 {offsets = [0, 0, 9], sizes = [1, 8, 128], strides = [1, 1, 1]} : vector<4x8x144xbf16> to vector<1x8x128xbf16>
    %17 = vector.shape_cast %16 : vector<1x8x128xbf16> to vector<8x128xbf16>
    %18 = vector.extract_strided_slice %3 {offsets = [1, 0, 9], sizes = [1, 8, 128], strides = [1, 1, 1]} : vector<4x8x144xbf16> to vector<1x8x128xbf16>
    %19 = vector.shape_cast %18 : vector<1x8x128xbf16> to vector<8x128xbf16>
    %20 = vector.extract_strided_slice %3 {offsets = [0, 0, 10], sizes = [1, 8, 128], strides = [1, 1, 1]} : vector<4x8x144xbf16> to vector<1x8x128xbf16>
    %21 = vector.shape_cast %20 : vector<1x8x128xbf16> to vector<8x128xbf16>
    %22 = tpu.concatenate %5, %7, %9, %11, %13, %15, %17, %19, %21 in 0 : vector<8x128xbf16>, vector<8x128xbf16>, vector<8x128xbf16>, vector<8x128xbf16>, vector<8x128xbf16>, vector<8x128xbf16>, vector<8x128xbf16>, vector<8x128xbf16>, vector<8x128xbf16> -> vector<72x128xbf16>
    %cst = arith.constant dense<0.000000e+00> : vector<16x128xf32>
    %23 = tpu.matmul %0, %22, %cst {dimension_numbers = #tpu.dot_dimension_numbers<[1], [0], [0], [1], [0, 0, 1, 1], [], []>} : vector<16x72xbf16>, vector<72x128xbf16>, vector<16x128xf32> -> vector<16x128xf32>
    %24 = vector.broadcast %1 : vector<16x1xf32> to vector<16x128xf32>
    %25 = arith.addf %23, %24 : vector<16x128xf32>
    %cst_7 = arith.constant 0.000000e+00 : f32
    %26 = vector.broadcast %cst_7 : f32 to vector<16x128xf32>
    %27 = arith.maximumf %25, %26 : vector<16x128xf32>
    %c0_8 = arith.constant 0 : index
    %c0_9 = arith.constant 0 : index
    %c0_10 = arith.constant 0 : index
    %28 = vector.load %arg4[%c0_8, %c0_9, %c0_10] : memref<2x16x128xf32, #tpu.memory_space<vmem>>, vector<1x16x128xf32>
    %29 = vector.shape_cast %28 : vector<1x16x128xf32> to vector<16x128xf32>
    %30 = vector.shape_cast %27 : vector<16x128xf32> to vector<1x16x128xf32>
    tpu.vector_store %arg4[%c0_8, %c0_9, %c0_10], %30 {strides = array<i32>} : memref<2x16x128xf32, #tpu.memory_space<vmem>>, vector<1x16x128xf32>,
    %c1 = arith.constant 1 : index
    %c0_11 = arith.constant 0 : index
    %c0_12 = arith.constant 0 : index
    %c0_13 = arith.constant 0 : index
    %31 = vector.load %arg1[%c1, %c0_11, %c0_12, %c0_13] : memref<2x4x8x144xbf16, #tpu.memory_space<vmem>>, vector<1x4x8x144xbf16>
    %32 = vector.shape_cast %31 : vector<1x4x8x144xbf16> to vector<4x8x144xbf16>
    %33 = vector.extract_strided_slice %32 {offsets = [0, 0, 0], sizes = [1, 8, 128], strides = [1, 1, 1]} : vector<4x8x144xbf16> to vector<1x8x128xbf16>
    %34 = vector.shape_cast %33 : vector<1x8x128xbf16> to vector<8x128xbf16>
    %35 = vector.extract_strided_slice %32 {offsets = [1, 0, 0], sizes = [1, 8, 128], strides = [1, 1, 1]} : vector<4x8x144xbf16> to vector<1x8x128xbf16>
    %36 = vector.shape_cast %35 : vector<1x8x128xbf16> to vector<8x128xbf16>
    %37 = vector.extract_strided_slice %32 {offsets = [0, 0, 1], sizes = [1, 8, 128], strides = [1, 1, 1]} : vector<4x8x144xbf16> to vector<1x8x128xbf16>
    %38 = vector.shape_cast %37 : vector<1x8x128xbf16> to vector<8x128xbf16>
    %39 = vector.extract_strided_slice %32 {offsets = [2, 0, 0], sizes = [1, 8, 128], strides = [1, 1, 1]} : vector<4x8x144xbf16> to vector<1x8x128xbf16>
    %40 = vector.shape_cast %39 : vector<1x8x128xbf16> to vector<8x128xbf16>
    %41 = vector.extract_strided_slice %32 {offsets = [3, 0, 0], sizes = [1, 8, 128], strides = [1, 1, 1]} : vector<4x8x144xbf16> to vector<1x8x128xbf16>
    %42 = vector.shape_cast %41 : vector<1x8x128xbf16> to vector<8x128xbf16>
    %43 = vector.extract_strided_slice %32 {offsets = [2, 0, 1], sizes = [1, 8, 128], strides = [1, 1, 1]} : vector<4x8x144xbf16> to vector<1x8x128xbf16>
    %44 = vector.shape_cast %43 : vector<1x8x128xbf16> to vector<8x128xbf16>
    %45 = vector.extract_strided_slice %32 {offsets = [0, 0, 9], sizes = [1, 8, 128], strides = [1, 1, 1]} : vector<4x8x144xbf16> to vector<1x8x128xbf16>
    %46 = vector.shape_cast %45 : vector<1x8x128xbf16> to vector<8x128xbf16>
    %47 = vector.extract_strided_slice %32 {offsets = [1, 0, 9], sizes = [1, 8, 128], strides = [1, 1, 1]} : vector<4x8x144xbf16> to vector<1x8x128xbf16>
    %48 = vector.shape_cast %47 : vector<1x8x128xbf16> to vector<8x128xbf16>
    %49 = vector.extract_strided_slice %32 {offsets = [0, 0, 10], sizes = [1, 8, 128], strides = [1, 1, 1]} : vector<4x8x144xbf16> to vector<1x8x128xbf16>
    %50 = vector.shape_cast %49 : vector<1x8x128xbf16> to vector<8x128xbf16>
    %51 = tpu.concatenate %34, %36, %38, %40, %42, %44, %46, %48, %50 in 0 : vector<8x128xbf16>, vector<8x128xbf16>, vector<8x128xbf16>, vector<8x128xbf16>, vector<8x128xbf16>, vector<8x128xbf16>, vector<8x128xbf16>, vector<8x128xbf16>, vector<8x128xbf16> -> vector<72x128xbf16>
    %cst_14 = arith.constant dense<0.000000e+00> : vector<16x128xf32>
    %52 = tpu.matmul %0, %51, %cst_14 {dimension_numbers = #tpu.dot_dimension_numbers<[1], [0], [0], [1], [0, 0, 1, 1], [], []>} : vector<16x72xbf16>, vector<72x128xbf16>, vector<16x128xf32> -> vector<16x128xf32>
    %53 = vector.broadcast %1 : vector<16x1xf32> to vector<16x128xf32>
    %54 = arith.addf %52, %53 : vector<16x128xf32>
    %cst_15 = arith.constant 0.000000e+00 : f32
    %55 = vector.broadcast %cst_15 : f32 to vector<16x128xf32>
    %56 = arith.maximumf %54, %55 : vector<16x128xf32>
    %c1_16 = arith.constant 1 : index
    %c0_17 = arith.constant 0 : index
    %c0_18 = arith.constant 0 : index
    %57 = vector.load %arg4[%c1_16, %c0_17, %c0_18] : memref<2x16x128xf32, #tpu.memory_space<vmem>>, vector<1x16x128xf32>
    %58 = vector.shape_cast %57 : vector<1x16x128xf32> to vector<16x128xf32>
    %59 = vector.shape_cast %56 : vector<16x128xf32> to vector<1x16x128xf32>
    tpu.vector_store %arg4[%c1_16, %c0_17, %c0_18], %59 {strides = array<i32>} : memref<2x16x128xf32, #tpu.memory_space<vmem>>, vector<1x16x128xf32>,
    return
  }
  func.func @transform_0(%arg0: i32) -> (i32, i32, i32, i32) {
    %c0_i32 = arith.constant 0 : i32
    %c0_i32_0 = arith.constant 0 : i32
    %c0_i32_1 = arith.constant 0 : i32
    %c0_i32_2 = arith.constant 0 : i32
    return %arg0, %c0_i32, %c0_i32_0, %c0_i32_1 : i32, i32, i32, i32
  }
  func.func @transform_1(%arg0: i32) -> (i32, i32) {
    %c0_i32 = arith.constant 0 : i32
    %c0_i32_0 = arith.constant 0 : i32
    %c0_i32_1 = arith.constant 0 : i32
    return %c0_i32, %c0_i32_0 : i32, i32
  }
  func.func @transform_2(%arg0: i32) -> (i32, i32) {
    %c0_i32 = arith.constant 0 : i32
    %c0_i32_0 = arith.constant 0 : i32
    %c0_i32_1 = arith.constant 0 : i32
    return %c0_i32, %c0_i32_0 : i32, i32
  }
  func.func @transform_3(%arg0: i32) -> (i32, i32, i32) {
    %c0_i32 = arith.constant 0 : i32
    %c0_i32_0 = arith.constant 0 : i32
    %c0_i32_1 = arith.constant 0 : i32
    return %arg0, %c0_i32, %c0_i32_0 : i32, i32, i32
  }
}

module attributes {stable_mosaic.version = 11 : i64} {
  func.func @_bilinear_kernel(%arg0: i32, %arg1: memref<32x8x8xf32, #tpu.memory_space<vmem>>, %arg2: memref<8x16xf32, #tpu.memory_space<vmem>>, %arg3: memref<16x8xf32, #tpu.memory_space<vmem>>, %arg4: memref<32x16x16xf32, #tpu.memory_space<vmem>>) attributes {dimension_semantics = [#tpu.dimension_semantics<parallel>], iteration_bounds = array<i64: 1>, scalar_prefetch = 0 : i64, scratch_operands = 0 : i64, tpu.core_type = #tpu.core_type<tc>, window_params = [{transform_indices = @transform_0, window_bounds = array<i64: 32, 8, 8>}, {pipeline_mode = #tpu.pipeline_mode<synchronous>, transform_indices = @transform_1, window_bounds = array<i64: 8, 16>}, {pipeline_mode = #tpu.pipeline_mode<synchronous>, transform_indices = @transform_2, window_bounds = array<i64: 16, 8>}, {transform_indices = @transform_3, window_bounds = array<i64: 32, 16, 16>}]} {
    %c0 = arith.constant 0 : index
    %c0_0 = arith.constant 0 : index
    %c0_1 = arith.constant 0 : index
    %0 = vector.load %arg1[%c0, %c0_0, %c0_1] : memref<32x8x8xf32, #tpu.memory_space<vmem>>, vector<32x8x8xf32>
    %1 = vector.shape_cast %0 : vector<32x8x8xf32> to vector<256x8xf32>
    %c0_2 = arith.constant 0 : index
    %c0_3 = arith.constant 0 : index
    %2 = vector.load %arg2[%c0_2, %c0_3] : memref<8x16xf32, #tpu.memory_space<vmem>>, vector<8x16xf32>
    %cst = arith.constant dense<0.000000e+00> : vector<256x16xf32>
    %3 = tpu.matmul %1, %2, %cst {dimension_numbers = #tpu.dot_dimension_numbers<[1], [0], [0], [1], [0, 0, 1, 1], [], []>} : vector<256x8xf32>, vector<8x16xf32>, vector<256x16xf32> -> vector<256x16xf32>
    %4 = vector.shape_cast %3 : vector<256x16xf32> to vector<32x8x16xf32>
    %c0_4 = arith.constant 0 : index
    %c0_5 = arith.constant 0 : index
    %5 = vector.load %arg3[%c0_4, %c0_5] : memref<16x8xf32, #tpu.memory_space<vmem>>, vector<16x8xf32>
    %6 = vector.shape_cast %5 : vector<16x8xf32> to vector<1x16x8xf32>
    %7 = vector.shape_cast %6 : vector<1x16x8xf32> to vector<1x16x8xf32>
    %8 = vector.broadcast %7 : vector<1x16x8xf32> to vector<32x16x8xf32>
    "tpu.trace_start"() <{level = 10 : i32, message = "poh,phq->poq"}> : () -> ()
    %cst_6 = arith.constant dense<0.000000e+00> : vector<32x16x16xf32>
    %9 = tpu.matmul %8, %4, %cst_6 {dimension_numbers = #tpu.dot_dimension_numbers<[2], [1], [1], [2], [0, 0, 0, 1, 1, 2], [0], [0]>} : vector<32x16x8xf32>, vector<32x8x16xf32>, vector<32x16x16xf32> -> vector<32x16x16xf32>
    "tpu.trace_stop"() : () -> ()
    %c0_7 = arith.constant 0 : index
    %c0_8 = arith.constant 0 : index
    %c0_9 = arith.constant 0 : index
    %10 = vector.load %arg4[%c0_7, %c0_8, %c0_9] : memref<32x16x16xf32, #tpu.memory_space<vmem>>, vector<32x16x16xf32>
    tpu.vector_store %arg4[%c0_7, %c0_8, %c0_9], %9 {strides = array<i32>} : memref<32x16x16xf32, #tpu.memory_space<vmem>>, vector<32x16x16xf32>,
    return
  }
  func.func @transform_0(%arg0: i32) -> (i32, i32, i32) {
    %c0_i32 = arith.constant 0 : i32
    %c0_i32_0 = arith.constant 0 : i32
    %c0_i32_1 = arith.constant 0 : i32
    return %arg0, %c0_i32, %c0_i32_0 : i32, i32, i32
  }
  func.func @transform_1(%arg0: i32) -> (i32, i32) {
    %c0_i32 = arith.constant 0 : i32
    %c0_i32_0 = arith.constant 0 : i32
    %c0_i32_1 = arith.constant 0 : i32
    return %c0_i32, %c0_i32_0 : i32, i32
  }
  func.func @transform_2(%arg0: i32) -> (i32, i32) {
    %c0_i32 = arith.constant 0 : i32
    %c0_i32_0 = arith.constant 0 : i32
    %c0_i32_1 = arith.constant 0 : i32
    return %c0_i32, %c0_i32_0 : i32, i32
  }
  func.func @transform_3(%arg0: i32) -> (i32, i32, i32) {
    %c0_i32 = arith.constant 0 : i32
    %c0_i32_0 = arith.constant 0 : i32
    %c0_i32_1 = arith.constant 0 : i32
    return %arg0, %c0_i32, %c0_i32_0 : i32, i32, i32
  }
}

</mosaic_0001>

<llo_original>
// kernel: _lambda_.3
$region0: #{_lambda_.3}
  #allocation0 [shape = 'u32[]', space=smem, size = 0x4, offset = 0x4, fixed_abs, tag = 'smem constant byte address 0x4 - core index']
  #allocation1 [shape = 'u32[144,128]{1,0:T(1,128)}', space=vmem, size = 0x12000, scoped, tag = 'internal scratch']
  %s0 = inlined_call_operand.vmem [shape: bf16[2,1,8,432], index: 0, kind: input, shape index: {}]
  %s1 = inlined_call_operand.vmem [shape: bf16[8,72], index: 1, kind: input, shape index: {}]
  %s2 = inlined_call_operand.vmem [shape: f32[8,1], index: 2, kind: input, shape index: {}]
  %s3 = inlined_call_operand.vmem [shape: f32[2,8,384], index: 3, kind: output, shape index: {}]
  %s4 = sld [smem:[#allocation0]]
  $region22: #{_lambda_.3} parent=0
    _
  %s6 = ssub.s32 1, %s4
  %s7 = scalar_select 0, %s6, %s4
  // Predicated region
  $region2: #{_lambda_.3} parent=0 // pred_check
    _
  $region3: #{_lambda_.3} parent=0 // pred_check_branch
    %9 = sbr.rel (0) target = $region5
  $region4: #{_lambda_.3} parent=0 // pred_region
    _
  $region5: #{_lambda_.3} parent=0 // pred_fallthru
    _
  // Predicated region
  $region6: #{_lambda_.3} parent=0 // pred_check
    _
  $region7: #{_lambda_.3} parent=0 // pred_check_branch
    %11 = sbr.rel (0) target = $region9
  $region8: #{_lambda_.3} parent=0 // pred_region
    _
  $region9: #{_lambda_.3} parent=0 // pred_fallthru
    _
  // Predicated region
  $region10: #{_lambda_.3} parent=0 // pred_check
    _
  $region11: #{_lambda_.3} parent=0 // pred_check_branch
    %13 = sbr.rel (0) target = $region13
  $region12: #{_lambda_.3} parent=0 // pred_region
    _
  $region13: #{_lambda_.3} parent=0 // pred_fallthru
    _
  %v15 = vld [vmem:[%s1] sm:$0xf]
  %v16 = vld [vmem:[%s2] sm:$0xff]
  %v17 = vld [vmem:[%s0] sm:$0xff]
  %v18 = vld [vmem:[%s0 + $0x8] sm:$0xff]
  %v21 = vunpack.c.l.b16 %v17
  %v22 = vunpack.c.h.b16 %v17
  %v23 = vunpack.c.l.b16 %v18
  %v24 = vpack.c.b16 %v21, %v21
  %v25 = vpack.c.b16 %v22, %v22
  %v26 = vpack.c.b16 %v23, %v23
  %v27 = vunpack.c.h.b16 %v18
  %v28 = vpack.c.b16 %v27, %v27
  %29 = vrot.lane.b32.xlu0 %v24, 127
  %v30 = vpop.permute.xlu0 %29
  %31 = vrot.lane.b32.xlu0 %v25, 127
  %v32 = vpop.permute.xlu0 %31
  %33 = vrot.lane.b32.xlu0 %v26, 127
  %v34 = vpop.permute.xlu0 %33
  %35 = vrot.lane.b32.xlu0 %v28, 127
  %v36 = vpop.permute.xlu0 %35
  %vm37 = vcmask 1039360
  %v38 = vsel %vm37, %v30, %v32
  %v39 = vsel %vm37, %v32, %v34
  %v40 = vsel %vm37, %v34, %v36
  %41 = vrot.lane.b32.xlu0 %v24, 126
  %v42 = vpop.permute.xlu0 %41
  %43 = vrot.lane.b32.xlu0 %v25, 126
  %v44 = vpop.permute.xlu0 %43
  %45 = vrot.lane.b32.xlu0 %v26, 126
  %v46 = vpop.permute.xlu0 %45
  %47 = vrot.lane.b32.xlu0 %v28, 126
  %v48 = vpop.permute.xlu0 %47
  %vm49 = vcmask 1031168
  %v50 = vsel %vm49, %v42, %v44
  %v51 = vsel %vm49, %v44, %v46
  %v52 = vsel %vm49, %v46, %v48
  %53 = vrot.lane.b32.xlu0 %v24, 110
  %v54 = vpop.permute.xlu0 %53
  %55 = vrot.lane.b32.xlu0 %v25, 110
  %v56 = vpop.permute.xlu0 %55
  %57 = vrot.lane.b32.xlu0 %v26, 110
  %v58 = vpop.permute.xlu0 %57
  %59 = vrot.lane.b32.xlu0 %v28, 110
  %v60 = vpop.permute.xlu0 %59
  %vm61 = vcmask 900096
  %v62 = vsel %vm61, %v54, %v56
  %v63 = vsel %vm61, %v56, %v58
  %v64 = vsel %vm61, %v58, %v60
  %65 = vrot.lane.b32.xlu0 %v24, 109
  %v66 = vpop.permute.xlu0 %65
  %67 = vrot.lane.b32.xlu0 %v25, 109
  %v68 = vpop.permute.xlu0 %67
  %69 = vrot.lane.b32.xlu0 %v26, 109
  %v70 = vpop.permute.xlu0 %69
  %71 = vrot.lane.b32.xlu0 %v28, 109
  %v72 = vpop.permute.xlu0 %71
  %vm73 = vcmask 891904
  %v74 = vsel %vm73, %v66, %v68
  %v75 = vsel %vm73, %v68, %v70
  %v76 = vsel %vm73, %v70, %v72
  %77 = vrot.lane.b32.xlu0 %v24, 108
  %v78 = vpop.permute.xlu0 %77
  %79 = vrot.lane.b32.xlu0 %v25, 108
  %v80 = vpop.permute.xlu0 %79
  %81 = vrot.lane.b32.xlu0 %v26, 108
  %v82 = vpop.permute.xlu0 %81
  %83 = vrot.lane.b32.xlu0 %v28, 108
  %v84 = vpop.permute.xlu0 %83
  %vm85 = vcmask 883712
  %v86 = vsel %vm85, %v78, %v80
  %v87 = vsel %vm85, %v80, %v82
  %v88 = vsel %vm85, %v82, %v84
  %89 = vrot.lane.b32.xlu0 %v24, 92
  %v90 = vpop.permute.xlu0 %89
  %91 = vrot.lane.b32.xlu0 %v25, 92
  %v92 = vpop.permute.xlu0 %91
  %93 = vrot.lane.b32.xlu0 %v26, 92
  %v94 = vpop.permute.xlu0 %93
  %95 = vrot.lane.b32.xlu0 %v28, 92
  %v96 = vpop.permute.xlu0 %95
  %vm97 = vcmask 752640
  %v98 = vsel %vm97, %v90, %v92
  %v99 = vsel %vm97, %v92, %v94
  %v100 = vsel %vm97, %v94, %v96
  %101 = vrot.lane.b32.xlu0 %v24, 91
  %v102 = vpop.permute.xlu0 %101
  %103 = vrot.lane.b32.xlu0 %v25, 91
  %v104 = vpop.permute.xlu0 %103
  %105 = vrot.lane.b32.xlu0 %v26, 91
  %v106 = vpop.permute.xlu0 %105
  %107 = vrot.lane.b32.xlu0 %v28, 91
  %v108 = vpop.permute.xlu0 %107
  %vm109 = vcmask 744448
  %v110 = vsel %vm109, %v102, %v104
  %v111 = vsel %vm109, %v104, %v106
  %v112 = vsel %vm109, %v106, %v108
  %113 = vrot.lane.b32.xlu0 %v24, 90
  %v114 = vpop.permute.xlu0 %113
  %115 = vrot.lane.b32.xlu0 %v25, 90
  %v116 = vpop.permute.xlu0 %115
  %117 = vrot.lane.b32.xlu0 %v26, 90
  %v118 = vpop.permute.xlu0 %117
  %119 = vrot.lane.b32.xlu0 %v28, 90
  %v120 = vpop.permute.xlu0 %119
  %vm121 = vcmask 736256
  %v122 = vsel %vm121, %v114, %v116
  %v123 = vsel %vm121, %v116, %v118
  %v124 = vsel %vm121, %v118, %v120
  %vm125 = vcmask 1043456
  %v128 = vsel %vm125, %v24, %v38
  %v132 = vsel %vm125, %v25, %v39
  %v136 = vsel %vm125, %v26, %v40
  %v140 = vsel %vm125, %v50, %v62
  %v144 = vsel %vm125, %v51, %v63
  %v148 = vsel %vm125, %v52, %v64
  %v152 = vsel %vm125, %v74, %v86
  %v156 = vsel %vm125, %v75, %v87
  %v160 = vsel %vm125, %v76, %v88
  %v164 = vsel %vm125, %v98, %v110
  %v168 = vsel %vm125, %v99, %v111
  %v172 = vsel %vm125, %v100, %v112
  %175 = vset.pattern.permute.xlu0 0
  %176 = vperm.xlu0 %175, %v16
  %v177 = vpop.permute.xlu0 %176
  %vm179 = vcmask 588800
  %v181 = vsel %vm179, %v15, 0
  %v184 = vsel %vm125, %v122, 0
  %v187 = vsel %vm125, %v123, 0
  %v190 = vsel %vm125, %v124, 0
  %192 = vmatprep.subr.bf16.mxu0 %v132
  %193 = vmatpush1.bf16.msra.mxu0 %v128
  %194 = vmatprep.subr.bf16.mxu0 %v144
  %195 = vmatpush1.bf16.msra.mxu0 %v140
  %196 = vmatprep.subr.bf16.mxu0 %v156
  %197 = vmatpush1.bf16.msra.mxu0 %v152
  %198 = vmatprep.subr.bf16.mxu0 %v168
  %199 = vmatpush1.bf16.msra.mxu0 %v164
  %200 = vmatprep.subr.bf16.mxu0 %v187
  %201 = vmatpush1.bf16.msra.mxu0 %v184
  %202 = vmatprep.subr.bf16.mxu0 0
  %203 = vmatpush1.bf16.msra.mxu0 0
  %204 = vmatprep.subr.bf16.mxu0 0
  %205 = vmatpush1.bf16.msra.mxu0 0
  %206 = vmatprep.subr.bf16.mxu0 0
  %207 = vmatpush1.bf16.msra.mxu0 0
  %208 = vmatprep.subr.bf16.mxu0 0
  %209 = vmatpush1.bf16.msra.mxu0 0
  %210 = vmatprep.subr.bf16.mxu0 0
  %211 = vmatpush1.bf16.msra.mxu0 0
  %212 = vmatprep.subr.bf16.mxu0 0
  %213 = vmatpush1.bf16.msra.mxu0 0
  %214 = vmatprep.subr.bf16.mxu0 0
  %215 = vmatpush1.bf16.msra.mxu0 0
  %216 = vmatprep.subr.bf16.mxu0 0
  %217 = vmatpush1.bf16.msra.mxu0 0
  %218 = vmatprep.subr.bf16.mxu0 0
  %219 = vmatpush1.bf16.msra.mxu0 0
  %220 = vmatprep.subr.bf16.mxu0 0
  %221 = vmatpush1.bf16.msra.mxu0 0
  %222 = vmatprep.subr.bf16.mxu0 0
  %223 = vmatpush1.bf16.msra.mxu0 0
  %224 = vmatprep.mubr.bf16.mxu0 0
  %225 = vmatmul.mubr.bf16.gmra.mrb[0].mxu0 %v181
  %v226 = vpop.f32.mrb[0].mxu0
  %v227 = vadd.f32 %v177, %v226
  %v228 = vpop.f32.mrb[0].mxu0
  %v229 = vadd.f32 %v177, %v228
  %v230 = vpop.f32.mrb[0].mxu0
  %v231 = vpop.f32.mrb[0].mxu0
  %232 = vdwg.mxu0
  %233 = vmatprep.subr.bf16.mxu0 0
  %234 = vmatpush1.bf16.msra.mxu0 %v136
  %235 = vmatprep.subr.bf16.mxu0 0
  %236 = vmatpush1.bf16.msra.mxu0 %v148
  %237 = vmatprep.subr.bf16.mxu0 0
  %238 = vmatpush1.bf16.msra.mxu0 %v160
  %239 = vmatprep.subr.bf16.mxu0 0
  %240 = vmatpush1.bf16.msra.mxu0 %v172
  %241 = vmatprep.subr.bf16.mxu0 0
  %242 = vmatpush1.bf16.msra.mxu0 %v190
  %243 = vmatprep.subr.bf16.mxu0 0
  %244 = vmatpush1.bf16.msra.mxu0 0
  %245 = vmatprep.subr.bf16.mxu0 0
  %246 = vmatpush1.bf16.msra.mxu0 0
  %247 = vmatprep.subr.bf16.mxu0 0
  %248 = vmatpush1.bf16.msra.mxu0 0
  %249 = vmatprep.subr.bf16.mxu0 0
  %250 = vmatpush1.bf16.msra.mxu0 0
  %251 = vmatprep.subr.bf16.mxu0 0
  %252 = vmatpush1.bf16.msra.mxu0 0
  %253 = vmatprep.subr.bf16.mxu0 0
  %254 = vmatpush1.bf16.msra.mxu0 0
  %255 = vmatprep.subr.bf16.mxu0 0
  %256 = vmatpush1.bf16.msra.mxu0 0
  %257 = vmatprep.subr.bf16.mxu0 0
  %258 = vmatpush1.bf16.msra.mxu0 0
  %259 = vmatprep.subr.bf16.mxu0 0
  %260 = vmatpush1.bf16.msra.mxu0 0
  %261 = vmatprep.subr.bf16.mxu0 0
  %262 = vmatpush1.bf16.msra.mxu0 0
  %263 = vmatprep.subr.bf16.mxu0 0
  %264 = vmatpush1.bf16.msra.mxu0 0
  %265 = vmatprep.mubr.bf16.mxu0 0
  %266 = vmatmul.mubr.bf16.gmra.mrb[0].mxu0 %v181
  %v267 = vpop.f32.mrb[0].mxu0
  %v268 = vadd.f32 %v177, %v267
  %v269 = vpop.f32.mrb[0].mxu0
  %v270 = vpop.f32.mrb[0].mxu0
  %v271 = vpop.f32.mrb[0].mxu0
  %272 = vdwg.mxu0
  %v273 = vmax.f32 %v227, 0.0
  %v274 = vmax.f32 %v229, 0.0
  %v275 = vmax.f32 %v268, 0.0
  %276 = vst [vmem:[%s3] sm:$0xff] %v273
  %277 = vst [vmem:[%s3 + $0x8] sm:$0xff] %v274
  %278 = vst [vmem:[%s3 + $0x10] sm:$0xff] %v275
  %s279 = scalar_lea.vmem %s0, 16
  %v280 = vld [vmem:[%s279] sm:$0xff]
  %v281 = vld [vmem:[%s279 + $0x8] sm:$0xff]
  %v284 = vunpack.c.l.b16 %v280
  %v285 = vunpack.c.h.b16 %v280
  %v286 = vunpack.c.l.b16 %v281
  %v287 = vpack.c.b16 %v284, %v284
  %v288 = vpack.c.b16 %v285, %v285
  %v289 = vpack.c.b16 %v286, %v286
  %v290 = vunpack.c.h.b16 %v281
  %v291 = vpack.c.b16 %v290, %v290
  %292 = vrot.lane.b32.xlu0 %v287, 127
  %v293 = vpop.permute.xlu0 %292
  %294 = vrot.lane.b32.xlu0 %v288, 127
  %v295 = vpop.permute.xlu0 %294
  %296 = vrot.lane.b32.xlu0 %v289, 127
  %v297 = vpop.permute.xlu0 %296
  %298 = vrot.lane.b32.xlu0 %v291, 127
  %v299 = vpop.permute.xlu0 %298
  %v300 = vsel %vm37, %v293, %v295
  %v301 = vsel %vm37, %v295, %v297
  %v302 = vsel %vm37, %v297, %v299
  %303 = vrot.lane.b32.xlu0 %v287, 126
  %v304 = vpop.permute.xlu0 %303
  %305 = vrot.lane.b32.xlu0 %v288, 126
  %v306 = vpop.permute.xlu0 %305
  %307 = vrot.lane.b32.xlu0 %v289, 126
  %v308 = vpop.permute.xlu0 %307
  %309 = vrot.lane.b32.xlu0 %v291, 126
  %v310 = vpop.permute.xlu0 %309
  %v311 = vsel %vm49, %v304, %v306
  %v312 = vsel %vm49, %v306, %v308
  %v313 = vsel %vm49, %v308, %v310
  %314 = vrot.lane.b32.xlu0 %v287, 110
  %v315 = vpop.permute.xlu0 %314
  %316 = vrot.lane.b32.xlu0 %v288, 110
  %v317 = vpop.permute.xlu0 %316
  %318 = vrot.lane.b32.xlu0 %v289, 110
  %v319 = vpop.permute.xlu0 %318
  %320 = vrot.lane.b32.xlu0 %v291, 110
  %v321 = vpop.permute.xlu0 %320
  %v322 = vsel %vm61, %v315, %v317
  %v323 = vsel %vm61, %v317, %v319
  %v324 = vsel %vm61, %v319, %v321
  %325 = vrot.lane.b32.xlu0 %v287, 109
  %v326 = vpop.permute.xlu0 %325
  %327 = vrot.lane.b32.xlu0 %v288, 109
  %v328 = vpop.permute.xlu0 %327
  %329 = vrot.lane.b32.xlu0 %v289, 109
  %v330 = vpop.permute.xlu0 %329
  %331 = vrot.lane.b32.xlu0 %v291, 109
  %v332 = vpop.permute.xlu0 %331
  %v333 = vsel %vm73, %v326, %v328
  %v334 = vsel %vm73, %v328, %v330
  %v335 = vsel %vm73, %v330, %v332
  %336 = vrot.lane.b32.xlu0 %v287, 108
  %v337 = vpop.permute.xlu0 %336
  %338 = vrot.lane.b32.xlu0 %v288, 108
  %v339 = vpop.permute.xlu0 %338
  %340 = vrot.lane.b32.xlu0 %v289, 108
  %v341 = vpop.permute.xlu0 %340
  %342 = vrot.lane.b32.xlu0 %v291, 108
  %v343 = vpop.permute.xlu0 %342
  %v344 = vsel %vm85, %v337, %v339
  %v345 = vsel %vm85, %v339, %v341
  %v346 = vsel %vm85, %v341, %v343
  %347 = vrot.lane.b32.xlu0 %v287, 92
  %v348 = vpop.permute.xlu0 %347
  %349 = vrot.lane.b32.xlu0 %v288, 92
  %v350 = vpop.permute.xlu0 %349
  %351 = vrot.lane.b32.xlu0 %v289, 92
  %v352 = vpop.permute.xlu0 %351
  %353 = vrot.lane.b32.xlu0 %v291, 92
  %v354 = vpop.permute.xlu0 %353
  %v355 = vsel %vm97, %v348, %v350
  %v356 = vsel %vm97, %v350, %v352
  %v357 = vsel %vm97, %v352, %v354
  %358 = vrot.lane.b32.xlu0 %v287, 91
  %v359 = vpop.permute.xlu0 %358
  %360 = vrot.lane.b32.xlu0 %v288, 91
  %v361 = vpop.permute.xlu0 %360
  %362 = vrot.lane.b32.xlu0 %v289, 91
  %v363 = vpop.permute.xlu0 %362
  %364 = vrot.lane.b32.xlu0 %v291, 91
  %v365 = vpop.permute.xlu0 %364
  %v366 = vsel %vm109, %v359, %v361
  %v367 = vsel %vm109, %v361, %v363
  %v368 = vsel %vm109, %v363, %v365
  %369 = vrot.lane.b32.xlu0 %v287, 90
  %v370 = vpop.permute.xlu0 %369
  %371 = vrot.lane.b32.xlu0 %v288, 90
  %v372 = vpop.permute.xlu0 %371
  %373 = vrot.lane.b32.xlu0 %v289, 90
  %v374 = vpop.permute.xlu0 %373
  %375 = vrot.lane.b32.xlu0 %v291, 90
  %v376 = vpop.permute.xlu0 %375
  %v377 = vsel %vm121, %v370, %v372
  %v378 = vsel %vm121, %v372, %v374
  %v379 = vsel %vm121, %v374, %v376
  %v382 = vsel %vm125, %v287, %v300
  %v386 = vsel %vm125, %v288, %v301
  %v390 = vsel %vm125, %v289, %v302
  %v394 = vsel %vm125, %v311, %v322
  %v398 = vsel %vm125, %v312, %v323
  %v402 = vsel %vm125, %v313, %v324
  %v406 = vsel %vm125, %v333, %v344
  %v410 = vsel %vm125, %v334, %v345
  %v414 = vsel %vm125, %v335, %v346
  %v418 = vsel %vm125, %v355, %v366
  %v422 = vsel %vm125, %v356, %v367
  %v426 = vsel %vm125, %v357, %v368
  %v429 = vsel %vm125, %v377, 0
  %v432 = vsel %vm125, %v378, 0
  %v435 = vsel %vm125, %v379, 0
  %437 = vmatprep.subr.bf16.mxu0 %v386
  %438 = vmatpush1.bf16.msra.mxu0 %v382
  %439 = vmatprep.subr.bf16.mxu0 %v398
  %440 = vmatpush1.bf16.msra.mxu0 %v394
  %441 = vmatprep.subr.bf16.mxu0 %v410
  %442 = vmatpush1.bf16.msra.mxu0 %v406
  %443 = vmatprep.subr.bf16.mxu0 %v422
  %444 = vmatpush1.bf16.msra.mxu0 %v418
  %445 = vmatprep.subr.bf16.mxu0 %v432
  %446 = vmatpush1.bf16.msra.mxu0 %v429
  %447 = vmatprep.subr.bf16.mxu0 0
  %448 = vmatpush1.bf16.msra.mxu0 0
  %449 = vmatprep.subr.bf16.mxu0 0
  %450 = vmatpush1.bf16.msra.mxu0 0
  %451 = vmatprep.subr.bf16.mxu0 0
  %452 = vmatpush1.bf16.msra.mxu0 0
  %453 = vmatprep.subr.bf16.mxu0 0
  %454 = vmatpush1.bf16.msra.mxu0 0
  %455 = vmatprep.subr.bf16.mxu0 0
  %456 = vmatpush1.bf16.msra.mxu0 0
  %457 = vmatprep.subr.bf16.mxu0 0
  %458 = vmatpush1.bf16.msra.mxu0 0
  %459 = vmatprep.subr.bf16.mxu0 0
  %460 = vmatpush1.bf16.msra.mxu0 0
  %461 = vmatprep.subr.bf16.mxu0 0
  %462 = vmatpush1.bf16.msra.mxu0 0
  %463 = vmatprep.subr.bf16.mxu0 0
  %464 = vmatpush1.bf16.msra.mxu0 0
  %465 = vmatprep.subr.bf16.mxu0 0
  %466 = vmatpush1.bf16.msra.mxu0 0
  %467 = vmatprep.subr.bf16.mxu0 0
  %468 = vmatpush1.bf16.msra.mxu0 0
  %469 = vmatprep.mubr.bf16.mxu0 0
  %470 = vmatmul.mubr.bf16.gmra.mrb[0].mxu0 %v181
  %v471 = vpop.f32.mrb[0].mxu0
  %v472 = vadd.f32 %v177, %v471
  %v473 = vpop.f32.mrb[0].mxu0
  %v474 = vadd.f32 %v177, %v473
  %v475 = vpop.f32.mrb[0].mxu0
  %v476 = vpop.f32.mrb[0].mxu0
  %477 = vdwg.mxu0
  %478 = vmatprep.subr.bf16.mxu0 0
  %479 = vmatpush1.bf16.msra.mxu0 %v390
  %480 = vmatprep.subr.bf16.mxu0 0
  %481 = vmatpush1.bf16.msra.mxu0 %v402
  %482 = vmatprep.subr.bf16.mxu0 0
  %483 = vmatpush1.bf16.msra.mxu0 %v414
  %484 = vmatprep.subr.bf16.mxu0 0
  %485 = vmatpush1.bf16.msra.mxu0 %v426
  %486 = vmatprep.subr.bf16.mxu0 0
  %487 = vmatpush1.bf16.msra.mxu0 %v435
  %488 = vmatprep.subr.bf16.mxu0 0
  %489 = vmatpush1.bf16.msra.mxu0 0
  %490 = vmatprep.subr.bf16.mxu0 0
  %491 = vmatpush1.bf16.msra.mxu0 0
  %492 = vmatprep.subr.bf16.mxu0 0
  %493 = vmatpush1.bf16.msra.mxu0 0
  %494 = vmatprep.subr.bf16.mxu0 0
  %495 = vmatpush1.bf16.msra.mxu0 0
  %496 = vmatprep.subr.bf16.mxu0 0
  %497 = vmatpush1.bf16.msra.mxu0 0
  %498 = vmatprep.subr.bf16.mxu0 0
  %499 = vmatpush1.bf16.msra.mxu0 0
  %500 = vmatprep.subr.bf16.mxu0 0
  %501 = vmatpush1.bf16.msra.mxu0 0
  %502 = vmatprep.subr.bf16.mxu0 0
  %503 = vmatpush1.bf16.msra.mxu0 0
  %504 = vmatprep.subr.bf16.mxu0 0
  %505 = vmatpush1.bf16.msra.mxu0 0
  %506 = vmatprep.subr.bf16.mxu0 0
  %507 = vmatpush1.bf16.msra.mxu0 0
  %508 = vmatprep.subr.bf16.mxu0 0
  %509 = vmatpush1.bf16.msra.mxu0 0
  %510 = vmatprep.mubr.bf16.mxu0 0
  %511 = vmatmul.mubr.bf16.gmra.mrb[0].mxu0 %v181
  %v512 = vpop.f32.mrb[0].mxu0
  %v513 = vadd.f32 %v177, %v512
  %v514 = vpop.f32.mrb[0].mxu0
  %v515 = vpop.f32.mrb[0].mxu0
  %v516 = vpop.f32.mrb[0].mxu0
  %517 = vdwg.mxu0
  %v518 = vmax.f32 %v472, 0.0
  %v519 = vmax.f32 %v474, 0.0
  %v520 = vmax.f32 %v513, 0.0
  %s521 = scalar_lea.vmem %s3, 24
  %522 = vst [vmem:[%s521] sm:$0xff] %v518
  %523 = vst [vmem:[%s521 + $0x8] sm:$0xff] %v519
  %524 = vst [vmem:[%s521 + $0x10] sm:$0xff] %v520
  // Predicated region
  $region14: #{_lambda_.3} parent=0 // pred_check
    _
  $region15: #{_lambda_.3} parent=0 // pred_check_branch
    %526 = sbr.rel (0) target = $region17
  $region16: #{_lambda_.3} parent=0 // pred_region
    _
  $region17: #{_lambda_.3} parent=0 // pred_fallthru
    _
  // Predicated region
  $region18: #{_lambda_.3} parent=0 // pred_check
    _
  $region19: #{_lambda_.3} parent=0 // pred_check_branch
    %528 = sbr.rel (0) target = $region21
  $region20: #{_lambda_.3} parent=0 // pred_region
    _
  $region21: #{_lambda_.3} parent=0 // pred_fallthru
    _

// kernel: _lambda_.4
$region0: #{_lambda_.4}
  #allocation0 [shape = 'u32[]', space=smem, size = 0x4, offset = 0x4, fixed_abs, tag = 'smem constant byte address 0x4 - core index']
  #allocation1 [shape = 'u32[144,128]{1,0:T(1,128)}', space=vmem, size = 0x12000, scoped, tag = 'internal scratch']
  %s0 = inlined_call_operand.vmem [shape: bf16[2,4,8,144], index: 0, kind: input, shape index: {}]
  %s1 = inlined_call_operand.vmem [shape: bf16[16,72], index: 1, kind: input, shape index: {}]
  %s2 = inlined_call_operand.vmem [shape: f32[16,1], index: 2, kind: input, shape index: {}]
  %s3 = inlined_call_operand.vmem [shape: f32[2,16,128], index: 3, kind: output, shape index: {}]
  %s4 = sld [smem:[#allocation0]]
  $region22: #{_lambda_.4} parent=0
    _
  %s6 = ssub.s32 1, %s4
  %s7 = scalar_select 0, %s6, %s4
  // Predicated region
  $region2: #{_lambda_.4} parent=0 // pred_check
    _
  $region3: #{_lambda_.4} parent=0 // pred_check_branch
    %9 = sbr.rel (0) target = $region5
  $region4: #{_lambda_.4} parent=0 // pred_region
    _
  $region5: #{_lambda_.4} parent=0 // pred_fallthru
    _
  // Predicated region
  $region6: #{_lambda_.4} parent=0 // pred_check
    _
  $region7: #{_lambda_.4} parent=0 // pred_check_branch
    %11 = sbr.rel (0) target = $region9
  $region8: #{_lambda_.4} parent=0 // pred_region
    _
  $region9: #{_lambda_.4} parent=0 // pred_fallthru
    _
  // Predicated region
  $region10: #{_lambda_.4} parent=0 // pred_check
    _
  $region11: #{_lambda_.4} parent=0 // pred_check_branch
    %13 = sbr.rel (0) target = $region13
  $region12: #{_lambda_.4} parent=0 // pred_region
    _
  $region13: #{_lambda_.4} parent=0 // pred_fallthru
    _
  %v15 = vld [vmem:[%s1] sm:$0xf]
  %v16 = vld [vmem:[%s1 + $0x4] sm:$0xf]
  %v17 = vld [vmem:[%s2] sm:$0xff]
  %v18 = vld [vmem:[%s2 + $0x8] sm:$0xff]
  %v19 = vld [vmem:[%s0] sm:$0xff]
  %v20 = vld [vmem:[%s0 + $0x8] sm:$0xff]
  %v21 = vld [vmem:[%s0 + $0x10] sm:$0xff]
  %v22 = vld [vmem:[%s0 + $0x18] sm:$0xff]
  %v24 = vunpack.c.l.b16 %v20
  %v25 = vpack.c.b16 %v24, %v24
  %v27 = vunpack.c.l.b16 %v19
  %v28 = vunpack.c.h.b16 %v19
  %v29 = vpack.c.b16 %v27, %v27
  %v30 = vpack.c.b16 %v28, %v28
  %31 = vrot.lane.b32.xlu0 %v29, 127
  %v32 = vpop.permute.xlu0 %31
  %33 = vrot.lane.b32.xlu0 %v30, 127
  %v34 = vpop.permute.xlu0 %33
  %vm35 = vcmask 1039360
  %v36 = vsel %vm35, %v32, %v34
  %v38 = vunpack.c.l.b16 %v21
  %v39 = vpack.c.b16 %v38, %v38
  %v40 = vunpack.c.h.b16 %v21
  %v41 = vpack.c.b16 %v40, %v40
  %42 = vrot.lane.b32.xlu0 %v39, 127
  %v43 = vpop.permute.xlu0 %42
  %44 = vrot.lane.b32.xlu0 %v41, 127
  %v45 = vpop.permute.xlu0 %44
  %v46 = vsel %vm35, %v43, %v45
  %47 = vrot.lane.b32.xlu0 %v29, 119
  %v48 = vpop.permute.xlu0 %47
  %49 = vrot.lane.b32.xlu0 %v30, 119
  %v50 = vpop.permute.xlu0 %49
  %vm51 = vcmask 973824
  %v52 = vsel %vm51, %v48, %v50
  %v53 = vunpack.c.h.b16 %v20
  %v54 = vpack.c.b16 %v53, %v53
  %55 = vrot.lane.b32.xlu0 %v25, 119
  %v56 = vpop.permute.xlu0 %55
  %57 = vrot.lane.b32.xlu0 %v54, 119
  %v58 = vpop.permute.xlu0 %57
  %v59 = vsel %vm51, %v56, %v58
  %60 = vrot.lane.b32.xlu0 %v29, 118
  %v61 = vpop.permute.xlu0 %60
  %62 = vrot.lane.b32.xlu0 %v30, 118
  %v63 = vpop.permute.xlu0 %62
  %vm64 = vcmask 965632
  %v65 = vsel %vm64, %v61, %v63
  %vm66 = vcmask 1043456
  %v69 = vsel %vm66, %v19, %v25
  %v73 = vsel %vm66, %v36, %v39
  %v77 = vsel %vm66, %v22, %v46
  %v81 = vsel %vm66, %v52, %v59
  %84 = vset.pattern.permute.xlu0 0
  %85 = vperm.xlu0 %84, %v17
  %v86 = vpop.permute.xlu0 %85
  %89 = vset.pattern.permute.xlu0 0
  %90 = vperm.xlu0 %89, %v18
  %v91 = vpop.permute.xlu0 %90
  %v95 = vunpack.c.l.b16 %v15
  %v96 = vunpack.c.l.b16 %v16
  %v97 = vpack.c.b16 %v96, %v95
  %vm98 = vcmask 588800
  %v100 = vsel %vm98, %v97, 0
  %v103 = vsel %vm66, %v65, 0
  %105 = vmatprep.subr.bf16.mxu0 0
  %106 = vmatpush1.bf16.msra.mxu0 %v69
  %107 = vmatprep.subr.bf16.mxu0 0
  %108 = vmatpush1.bf16.msra.mxu0 %v73
  %109 = vmatprep.subr.bf16.mxu0 0
  %110 = vmatpush1.bf16.msra.mxu0 %v77
  %111 = vmatprep.subr.bf16.mxu0 0
  %112 = vmatpush1.bf16.msra.mxu0 %v81
  %113 = vmatprep.subr.bf16.mxu0 0
  %114 = vmatpush1.bf16.msra.mxu0 %v103
  %115 = vmatprep.subr.bf16.mxu0 0
  %116 = vmatpush1.bf16.msra.mxu0 0
  %117 = vmatprep.subr.bf16.mxu0 0
  %118 = vmatpush1.bf16.msra.mxu0 0
  %119 = vmatprep.subr.bf16.mxu0 0
  %120 = vmatpush1.bf16.msra.mxu0 0
  %121 = vmatprep.subr.bf16.mxu0 0
  %122 = vmatpush1.bf16.msra.mxu0 0
  %123 = vmatprep.subr.bf16.mxu0 0
  %124 = vmatpush1.bf16.msra.mxu0 0
  %125 = vmatprep.subr.bf16.mxu0 0
  %126 = vmatpush1.bf16.msra.mxu0 0
  %127 = vmatprep.subr.bf16.mxu0 0
  %128 = vmatpush1.bf16.msra.mxu0 0
  %129 = vmatprep.subr.bf16.mxu0 0
  %130 = vmatpush1.bf16.msra.mxu0 0
  %131 = vmatprep.subr.bf16.mxu0 0
  %132 = vmatpush1.bf16.msra.mxu0 0
  %133 = vmatprep.subr.bf16.mxu0 0
  %134 = vmatpush1.bf16.msra.mxu0 0
  %135 = vmatprep.subr.bf16.mxu0 0
  %136 = vmatpush1.bf16.msra.mxu0 0
  %137 = vmatprep.mubr.bf16.mxu0 0
  %138 = vmatmul.mubr.bf16.gmra.mrb[0].mxu0 %v100
  %v139 = vpop.f32.mrb[0].mxu0
  %v140 = vadd.f32 %v86, %v139
  %v141 = vpop.f32.mrb[0].mxu0
  %v142 = vpop.f32.mrb[0].mxu0
  %v143 = vadd.f32 %v91, %v142
  %v144 = vpop.f32.mrb[0].mxu0
  %145 = vdwg.mxu0
  %v146 = vmax.f32 %v140, 0.0
  %v147 = vmax.f32 %v143, 0.0
  %148 = vst [vmem:[%s3] sm:$0xff] %v146
  %149 = vst [vmem:[%s3 + $0x8] sm:$0xff] %v147
  %s150 = scalar_lea.vmem %s0, 32
  %v151 = vld [vmem:[%s150] sm:$0xff]
  %v152 = vld [vmem:[%s150 + $0x8] sm:$0xff]
  %v153 = vld [vmem:[%s150 + $0x10] sm:$0xff]
  %v154 = vld [vmem:[%s150 + $0x18] sm:$0xff]
  %v156 = vunpack.c.l.b16 %v152
  %v157 = vpack.c.b16 %v156, %v156
  %v159 = vunpack.c.l.b16 %v151
  %v160 = vunpack.c.h.b16 %v151
  %v161 = vpack.c.b16 %v159, %v159
  %v162 = vpack.c.b16 %v160, %v160
  %163 = vrot.lane.b32.xlu0 %v161, 127
  %v164 = vpop.permute.xlu0 %163
  %165 = vrot.lane.b32.xlu0 %v162, 127
  %v166 = vpop.permute.xlu0 %165
  %v167 = vsel %vm35, %v164, %v166
  %v169 = vunpack.c.l.b16 %v153
  %v170 = vpack.c.b16 %v169, %v169
  %v171 = vunpack.c.h.b16 %v153
  %v172 = vpack.c.b16 %v171, %v171
  %173 = vrot.lane.b32.xlu0 %v170, 127
  %v174 = vpop.permute.xlu0 %173
  %175 = vrot.lane.b32.xlu0 %v172, 127
  %v176 = vpop.permute.xlu0 %175
  %v177 = vsel %vm35, %v174, %v176
  %178 = vrot.lane.b32.xlu0 %v161, 119
  %v179 = vpop.permute.xlu0 %178
  %180 = vrot.lane.b32.xlu0 %v162, 119
  %v181 = vpop.permute.xlu0 %180
  %v182 = vsel %vm51, %v179, %v181
  %v183 = vunpack.c.h.b16 %v152
  %v184 = vpack.c.b16 %v183, %v183
  %185 = vrot.lane.b32.xlu0 %v157, 119
  %v186 = vpop.permute.xlu0 %185
  %187 = vrot.lane.b32.xlu0 %v184, 119
  %v188 = vpop.permute.xlu0 %187
  %v189 = vsel %vm51, %v186, %v188
  %190 = vrot.lane.b32.xlu0 %v161, 118
  %v191 = vpop.permute.xlu0 %190
  %192 = vrot.lane.b32.xlu0 %v162, 118
  %v193 = vpop.permute.xlu0 %192
  %v194 = vsel %vm64, %v191, %v193
  %v197 = vsel %vm66, %v151, %v157
  %v201 = vsel %vm66, %v167, %v170
  %v205 = vsel %vm66, %v154, %v177
  %v209 = vsel %vm66, %v182, %v189
  %v212 = vsel %vm66, %v194, 0
  %214 = vmatprep.subr.bf16.mxu0 0
  %215 = vmatpush1.bf16.msra.mxu0 %v197
  %216 = vmatprep.subr.bf16.mxu0 0
  %217 = vmatpush1.bf16.msra.mxu0 %v201
  %218 = vmatprep.subr.bf16.mxu0 0
  %219 = vmatpush1.bf16.msra.mxu0 %v205
  %220 = vmatprep.subr.bf16.mxu0 0
  %221 = vmatpush1.bf16.msra.mxu0 %v209
  %222 = vmatprep.subr.bf16.mxu0 0
  %223 = vmatpush1.bf16.msra.mxu0 %v212
  %224 = vmatprep.subr.bf16.mxu0 0
  %225 = vmatpush1.bf16.msra.mxu0 0
  %226 = vmatprep.subr.bf16.mxu0 0
  %227 = vmatpush1.bf16.msra.mxu0 0
  %228 = vmatprep.subr.bf16.mxu0 0
  %229 = vmatpush1.bf16.msra.mxu0 0
  %230 = vmatprep.subr.bf16.mxu0 0
  %231 = vmatpush1.bf16.msra.mxu0 0
  %232 = vmatprep.subr.bf16.mxu0 0
  %233 = vmatpush1.bf16.msra.mxu0 0
  %234 = vmatprep.subr.bf16.mxu0 0
  %235 = vmatpush1.bf16.msra.mxu0 0
  %236 = vmatprep.subr.bf16.mxu0 0
  %237 = vmatpush1.bf16.msra.mxu0 0
  %238 = vmatprep.subr.bf16.mxu0 0
  %239 = vmatpush1.bf16.msra.mxu0 0
  %240 = vmatprep.subr.bf16.mxu0 0
  %241 = vmatpush1.bf16.msra.mxu0 0
  %242 = vmatprep.subr.bf16.mxu0 0
  %243 = vmatpush1.bf16.msra.mxu0 0
  %244 = vmatprep.subr.bf16.mxu0 0
  %245 = vmatpush1.bf16.msra.mxu0 0
  %246 = vmatprep.mubr.bf16.mxu0 0
  %247 = vmatmul.mubr.bf16.gmra.mrb[0].mxu0 %v100
  %v248 = vpop.f32.mrb[0].mxu0
  %v249 = vadd.f32 %v86, %v248
  %v250 = vpop.f32.mrb[0].mxu0
  %v251 = vpop.f32.mrb[0].mxu0
  %v252 = vadd.f32 %v91, %v251
  %v253 = vpop.f32.mrb[0].mxu0
  %254 = vdwg.mxu0
  %v255 = vmax.f32 %v249, 0.0
  %v256 = vmax.f32 %v252, 0.0
  %s257 = scalar_lea.vmem %s3, 16
  %258 = vst [vmem:[%s257] sm:$0xff] %v255
  %259 = vst [vmem:[%s257 + $0x8] sm:$0xff] %v256
  // Predicated region
  $region14: #{_lambda_.4} parent=0 // pred_check
    _
  $region15: #{_lambda_.4} parent=0 // pred_check_branch
    %261 = sbr.rel (0) target = $region17
  $region16: #{_lambda_.4} parent=0 // pred_region
    _
  $region17: #{_lambda_.4} parent=0 // pred_fallthru
    _
  // Predicated region
  $region18: #{_lambda_.4} parent=0 // pred_check
    _
  $region19: #{_lambda_.4} parent=0 // pred_check_branch
    %263 = sbr.rel (0) target = $region21
  $region20: #{_lambda_.4} parent=0 // pred_region
    _
  $region21: #{_lambda_.4} parent=0 // pred_fallthru
    _

// kernel: _lambda_.5
$region0: #{_lambda_.5}
  #allocation0 [shape = 'u32[]', space=smem, size = 0x4, offset = 0x4, fixed_abs, tag = 'smem constant byte address 0x4 - core index']
  #allocation1 [shape = 'u32[144,128]{1,0:T(1,128)}', space=vmem, size = 0x12000, scoped, tag = 'internal scratch']
  %s0 = inlined_call_operand.vmem [shape: f32[32,8,8], index: 0, kind: input, shape index: {}]
  %s1 = inlined_call_operand.vmem [shape: f32[8,16], index: 1, kind: input, shape index: {}]
  %s2 = inlined_call_operand.vmem [shape: f32[16,8], index: 2, kind: input, shape index: {}]
  %s3 = inlined_call_operand.vmem [shape: f32[32,16,16], index: 3, kind: output, shape index: {}]
  %s4 = sld [smem:[#allocation0]]
  $region22: #{_lambda_.5} parent=0
    _
  %s6 = ssub.s32 1, %s4
  %s7 = scalar_select 0, %s6, %s4
  // Predicated region
  $region2: #{_lambda_.5} parent=0 // pred_check
    _
  $region3: #{_lambda_.5} parent=0 // pred_check_branch
    %9 = sbr.rel (0) target = $region5
  $region4: #{_lambda_.5} parent=0 // pred_region
    _
  $region5: #{_lambda_.5} parent=0 // pred_fallthru
    _
  // Predicated region
  $region6: #{_lambda_.5} parent=0 // pred_check
    _
  $region7: #{_lambda_.5} parent=0 // pred_check_branch
    %11 = sbr.rel (0) target = $region9
  $region8: #{_lambda_.5} parent=0 // pred_region
    _
  $region9: #{_lambda_.5} parent=0 // pred_fallthru
    _
  // Predicated region
  $region10: #{_lambda_.5} parent=0 // pred_check
    _
  $region11: #{_lambda_.5} parent=0 // pred_check_branch
    %13 = sbr.rel (0) target = $region13
  $region12: #{_lambda_.5} parent=0 // pred_region
    _
  $region13: #{_lambda_.5} parent=0 // pred_fallthru
    _
  %v14 = vld [vmem:[%s0] sm:$0xff]
  %v15 = vld [vmem:[%s0 + $0x8] sm:$0xff]
  %v16 = vld [vmem:[%s0 + $0x10] sm:$0xff]
  %v17 = vld [vmem:[%s0 + $0x18] sm:$0xff]
  %v18 = vld [vmem:[%s0 + $0x20] sm:$0xff]
  %v19 = vld [vmem:[%s0 + $0x28] sm:$0xff]
  %v20 = vld [vmem:[%s0 + $0x30] sm:$0xff]
  %v21 = vld [vmem:[%s0 + $0x38] sm:$0xff]
  %v22 = vld [vmem:[%s0 + $0x40] sm:$0xff]
  %v23 = vld [vmem:[%s0 + $0x48] sm:$0xff]
  %v24 = vld [vmem:[%s0 + $0x50] sm:$0xff]
  %v25 = vld [vmem:[%s0 + $0x58] sm:$0xff]
  %v26 = vld [vmem:[%s0 + $0x60] sm:$0xff]
  %v27 = vld [vmem:[%s0 + $0x68] sm:$0xff]
  %v28 = vld [vmem:[%s0 + $0x70] sm:$0xff]
  %v29 = vld [vmem:[%s0 + $0x78] sm:$0xff]
  %v30 = vld [vmem:[%s0 + $0x80] sm:$0xff]
  %v31 = vld [vmem:[%s0 + $0x88] sm:$0xff]
  %v32 = vld [vmem:[%s0 + $0x90] sm:$0xff]
  %v33 = vld [vmem:[%s0 + $0x98] sm:$0xff]
  %v34 = vld [vmem:[%s0 + $0xa0] sm:$0xff]
  %v35 = vld [vmem:[%s0 + $0xa8] sm:$0xff]
  %v36 = vld [vmem:[%s0 + $0xb0] sm:$0xff]
  %v37 = vld [vmem:[%s0 + $0xb8] sm:$0xff]
  %v38 = vld [vmem:[%s0 + $0xc0] sm:$0xff]
  %v39 = vld [vmem:[%s0 + $0xc8] sm:$0xff]
  %v40 = vld [vmem:[%s0 + $0xd0] sm:$0xff]
  %v41 = vld [vmem:[%s0 + $0xd8] sm:$0xff]
  %v42 = vld [vmem:[%s0 + $0xe0] sm:$0xff]
  %v43 = vld [vmem:[%s0 + $0xe8] sm:$0xff]
  %v44 = vld [vmem:[%s0 + $0xf0] sm:$0xff]
  %v45 = vld [vmem:[%s0 + $0xf8] sm:$0xff]
  %v46 = vld [vmem:[%s1] sm:$0xff]
  %vm47 = vcmask 64512
  %v49 = vsel %vm47, %v14, 0
  %v52 = vsel %vm47, %v15, 0
  %v55 = vsel %vm47, %v16, 0
  %v58 = vsel %vm47, %v17, 0
  %v61 = vsel %vm47, %v18, 0
  %v64 = vsel %vm47, %v19, 0
  %v67 = vsel %vm47, %v20, 0
  %v70 = vsel %vm47, %v21, 0
  %v73 = vsel %vm47, %v22, 0
  %v76 = vsel %vm47, %v23, 0
  %v79 = vsel %vm47, %v24, 0
  %v82 = vsel %vm47, %v25, 0
  %v85 = vsel %vm47, %v26, 0
  %v88 = vsel %vm47, %v27, 0
  %v91 = vsel %vm47, %v28, 0
  %v94 = vsel %vm47, %v29, 0
  %v97 = vsel %vm47, %v30, 0
  %v100 = vsel %vm47, %v31, 0
  %v103 = vsel %vm47, %v32, 0
  %v106 = vsel %vm47, %v33, 0
  %v109 = vsel %vm47, %v34, 0
  %v112 = vsel %vm47, %v35, 0
  %v115 = vsel %vm47, %v36, 0
  %v118 = vsel %vm47, %v37, 0
  %v121 = vsel %vm47, %v38, 0
  %v124 = vsel %vm47, %v39, 0
  %v127 = vsel %vm47, %v40, 0
  %v130 = vsel %vm47, %v41, 0
  %v133 = vsel %vm47, %v42, 0
  %v136 = vsel %vm47, %v43, 0
  %v139 = vsel %vm47, %v44, 0
  %v142 = vsel %vm47, %v45, 0
  %144 = vmatprep.subr.mxu0 0.0
  %145 = vmatpush1.msra.mxu0 %v46
  %146 = vmatprep.subr.mxu0 0.0
  %147 = vmatpush1.msra.mxu0 0.0
  %148 = vmatprep.subr.mxu0 0.0
  %149 = vmatpush1.msra.mxu0 0.0
  %150 = vmatprep.subr.mxu0 0.0
  %151 = vmatpush1.msra.mxu0 0.0
  %152 = vmatprep.subr.mxu0 0.0
  %153 = vmatpush1.msra.mxu0 0.0
  %154 = vmatprep.subr.mxu0 0.0
  %155 = vmatpush1.msra.mxu0 0.0
  %156 = vmatprep.subr.mxu0 0.0
  %157 = vmatpush1.msra.mxu0 0.0
  %158 = vmatprep.subr.mxu0 0.0
  %159 = vmatpush1.msra.mxu0 0.0
  %160 = vmatprep.subr.mxu0 0.0
  %161 = vmatpush1.msra.mxu0 0.0
  %162 = vmatprep.subr.mxu0 0.0
  %163 = vmatpush1.msra.mxu0 0.0
  %164 = vmatprep.subr.mxu0 0.0
  %165 = vmatpush1.msra.mxu0 0.0
  %166 = vmatprep.subr.mxu0 0.0
  %167 = vmatpush1.msra.mxu0 0.0
  %168 = vmatprep.subr.mxu0 0.0
  %169 = vmatpush1.msra.mxu0 0.0
  %170 = vmatprep.subr.mxu0 0.0
  %171 = vmatpush1.msra.mxu0 0.0
  %172 = vmatprep.subr.mxu0 0.0
  %173 = vmatpush1.msra.mxu0 0.0
  %174 = vmatprep.subr.mxu0 0.0
  %175 = vmatpush1.msra.mxu0 0.0
  %176 = vmatprep.subr.mxu0 0.0
  %177 = vmatpush1.msra.mxu0 0.0
  %178 = vmatprep.subr.mxu0 0.0
  %179 = vmatpush1.msra.mxu0 0.0
  %180 = vmatprep.subr.mxu0 0.0
  %181 = vmatpush1.msra.mxu0 0.0
  %182 = vmatprep.subr.mxu0 0.0
  %183 = vmatpush1.msra.mxu0 0.0
  %184 = vmatprep.subr.mxu0 0.0
  %185 = vmatpush1.msra.mxu0 0.0
  %186 = vmatprep.subr.mxu0 0.0
  %187 = vmatpush1.msra.mxu0 0.0
  %188 = vmatprep.subr.mxu0 0.0
  %189 = vmatpush1.msra.mxu0 0.0
  %190 = vmatprep.subr.mxu0 0.0
  %191 = vmatpush1.msra.mxu0 0.0
  %192 = vmatprep.subr.mxu0 0.0
  %193 = vmatpush1.msra.mxu0 0.0
  %194 = vmatprep.subr.mxu0 0.0
  %195 = vmatpush1.msra.mxu0 0.0
  %196 = vmatprep.subr.mxu0 0.0
  %197 = vmatpush1.msra.mxu0 0.0
  %198 = vmatprep.subr.mxu0 0.0
  %199 = vmatpush1.msra.mxu0 0.0
  %200 = vmatprep.subr.mxu0 0.0
  %201 = vmatpush1.msra.mxu0 0.0
  %202 = vmatprep.subr.mxu0 0.0
  %203 = vmatpush1.msra.mxu0 0.0
  %204 = vmatprep.subr.mxu0 0.0
  %205 = vmatpush1.msra.mxu0 0.0
  %206 = vmatprep.subr.mxu0 0.0
  %207 = vmatpush1.msra.mxu0 0.0
  %208 = vmatprep.mubr.f32.mxu0 0.0
  %209 = vmatmul.mubr.f32.gmra.mrb[0].mxu0 %v49
  %v210 = vpop.f32.mrb[0].mxu0
  %v211 = vadd.f32 0.0, %v210
  %v212 = vpop.f32.mrb[0].mxu0
  %213 = vmatprep.mubr.f32.mxu0 0.0
  %214 = vmatmul.mubr.f32.gmra.mrb[0].mxu0 %v52
  %v215 = vpop.f32.mrb[0].mxu0
  %v216 = vadd.f32 0.0, %v215
  %v217 = vpop.f32.mrb[0].mxu0
  %218 = vmatprep.mubr.f32.mxu0 0.0
  %219 = vmatmul.mubr.f32.gmra.mrb[0].mxu0 %v55
  %v220 = vpop.f32.mrb[0].mxu0
  %v221 = vadd.f32 0.0, %v220
  %v222 = vpop.f32.mrb[0].mxu0
  %223 = vmatprep.mubr.f32.mxu0 0.0
  %224 = vmatmul.mubr.f32.gmra.mrb[0].mxu0 %v58
  %v225 = vpop.f32.mrb[0].mxu0
  %v226 = vadd.f32 0.0, %v225
  %v227 = vpop.f32.mrb[0].mxu0
  %228 = vmatprep.mubr.f32.mxu0 0.0
  %229 = vmatmul.mubr.f32.gmra.mrb[0].mxu0 %v61
  %v230 = vpop.f32.mrb[0].mxu0
  %v231 = vadd.f32 0.0, %v230
  %v232 = vpop.f32.mrb[0].mxu0
  %233 = vmatprep.mubr.f32.mxu0 0.0
  %234 = vmatmul.mubr.f32.gmra.mrb[0].mxu0 %v64
  %v235 = vpop.f32.mrb[0].mxu0
  %v236 = vadd.f32 0.0, %v235
  %v237 = vpop.f32.mrb[0].mxu0
  %238 = vmatprep.mubr.f32.mxu0 0.0
  %239 = vmatmul.mubr.f32.gmra.mrb[0].mxu0 %v67
  %v240 = vpop.f32.mrb[0].mxu0
  %v241 = vadd.f32 0.0, %v240
  %v242 = vpop.f32.mrb[0].mxu0
  %243 = vmatprep.mubr.f32.mxu0 0.0
  %244 = vmatmul.mubr.f32.gmra.mrb[0].mxu0 %v70
  %v245 = vpop.f32.mrb[0].mxu0
  %v246 = vadd.f32 0.0, %v245
  %v247 = vpop.f32.mrb[0].mxu0
  %248 = vmatprep.mubr.f32.mxu0 0.0
  %249 = vmatmul.mubr.f32.gmra.mrb[0].mxu0 %v73
  %v250 = vpop.f32.mrb[0].mxu0
  %v251 = vadd.f32 0.0, %v250
  %v252 = vpop.f32.mrb[0].mxu0
  %253 = vmatprep.mubr.f32.mxu0 0.0
  %254 = vmatmul.mubr.f32.gmra.mrb[0].mxu0 %v76
  %v255 = vpop.f32.mrb[0].mxu0
  %v256 = vadd.f32 0.0, %v255
  %v257 = vpop.f32.mrb[0].mxu0
  %258 = vmatprep.mubr.f32.mxu0 0.0
  %259 = vmatmul.mubr.f32.gmra.mrb[0].mxu0 %v79
  %v260 = vpop.f32.mrb[0].mxu0
  %v261 = vadd.f32 0.0, %v260
  %v262 = vpop.f32.mrb[0].mxu0
  %263 = vmatprep.mubr.f32.mxu0 0.0
  %264 = vmatmul.mubr.f32.gmra.mrb[0].mxu0 %v82
  %v265 = vpop.f32.mrb[0].mxu0
  %v266 = vadd.f32 0.0, %v265
  %v267 = vpop.f32.mrb[0].mxu0
  %268 = vmatprep.mubr.f32.mxu0 0.0
  %269 = vmatmul.mubr.f32.gmra.mrb[0].mxu0 %v85
  %v270 = vpop.f32.mrb[0].mxu0
  %v271 = vadd.f32 0.0, %v270
  %v272 = vpop.f32.mrb[0].mxu0
  %273 = vmatprep.mubr.f32.mxu0 0.0
  %274 = vmatmul.mubr.f32.gmra.mrb[0].mxu0 %v88
  %v275 = vpop.f32.mrb[0].mxu0
  %v276 = vadd.f32 0.0, %v275
  %v277 = vpop.f32.mrb[0].mxu0
  %278 = vmatprep.mubr.f32.mxu0 0.0
  %279 = vmatmul.mubr.f32.gmra.mrb[0].mxu0 %v91
  %v280 = vpop.f32.mrb[0].mxu0
  %v281 = vadd.f32 0.0, %v280
  %v282 = vpop.f32.mrb[0].mxu0
  %283 = vmatprep.mubr.f32.mxu0 0.0
  %284 = vmatmul.mubr.f32.gmra.mrb[0].mxu0 %v94
  %v285 = vpop.f32.mrb[0].mxu0
  %v286 = vadd.f32 0.0, %v285
  %v287 = vpop.f32.mrb[0].mxu0
  %288 = vmatprep.mubr.f32.mxu0 0.0
  %289 = vmatmul.mubr.f32.gmra.mrb[0].mxu0 %v97
  %v290 = vpop.f32.mrb[0].mxu0
  %v291 = vadd.f32 0.0, %v290
  %v292 = vpop.f32.mrb[0].mxu0
  %293 = vmatprep.mubr.f32.mxu0 0.0
  %294 = vmatmul.mubr.f32.gmra.mrb[0].mxu0 %v100
  %v295 = vpop.f32.mrb[0].mxu0
  %v296 = vadd.f32 0.0, %v295
  %v297 = vpop.f32.mrb[0].mxu0
  %298 = vmatprep.mubr.f32.mxu0 0.0
  %299 = vmatmul.mubr.f32.gmra.mrb[0].mxu0 %v103
  %v300 = vpop.f32.mrb[0].mxu0
  %v301 = vadd.f32 0.0, %v300
  %v302 = vpop.f32.mrb[0].mxu0
  %303 = vmatprep.mubr.f32.mxu0 0.0
  %304 = vmatmul.mubr.f32.gmra.mrb[0].mxu0 %v106
  %v305 = vpop.f32.mrb[0].mxu0
  %v306 = vadd.f32 0.0, %v305
  %v307 = vpop.f32.mrb[0].mxu0
  %308 = vmatprep.mubr.f32.mxu0 0.0
  %309 = vmatmul.mubr.f32.gmra.mrb[0].mxu0 %v109
  %v310 = vpop.f32.mrb[0].mxu0
  %v311 = vadd.f32 0.0, %v310
  %v312 = vpop.f32.mrb[0].mxu0
  %313 = vmatprep.mubr.f32.mxu0 0.0
  %314 = vmatmul.mubr.f32.gmra.mrb[0].mxu0 %v112
  %v315 = vpop.f32.mrb[0].mxu0
  %v316 = vadd.f32 0.0, %v315
  %v317 = vpop.f32.mrb[0].mxu0
  %318 = vmatprep.mubr.f32.mxu0 0.0
  %319 = vmatmul.mubr.f32.gmra.mrb[0].mxu0 %v115
  %v320 = vpop.f32.mrb[0].mxu0
  %v321 = vadd.f32 0.0, %v320
  %v322 = vpop.f32.mrb[0].mxu0
  %323 = vmatprep.mubr.f32.mxu0 0.0
  %324 = vmatmul.mubr.f32.gmra.mrb[0].mxu0 %v118
  %v325 = vpop.f32.mrb[0].mxu0
  %v326 = vadd.f32 0.0, %v325
  %v327 = vpop.f32.mrb[0].mxu0
  %328 = vmatprep.mubr.f32.mxu0 0.0
  %329 = vmatmul.mubr.f32.gmra.mrb[0].mxu0 %v121
  %v330 = vpop.f32.mrb[0].mxu0
  %v331 = vadd.f32 0.0, %v330
  %v332 = vpop.f32.mrb[0].mxu0
  %333 = vmatprep.mubr.f32.mxu0 0.0
  %334 = vmatmul.mubr.f32.gmra.mrb[0].mxu0 %v124
  %v335 = vpop.f32.mrb[0].mxu0
  %v336 = vadd.f32 0.0, %v335
  %v337 = vpop.f32.mrb[0].mxu0
  %338 = vmatprep.mubr.f32.mxu0 0.0
  %339 = vmatmul.mubr.f32.gmra.mrb[0].mxu0 %v127
  %v340 = vpop.f32.mrb[0].mxu0
  %v341 = vadd.f32 0.0, %v340
  %v342 = vpop.f32.mrb[0].mxu0
  %343 = vmatprep.mubr.f32.mxu0 0.0
  %344 = vmatmul.mubr.f32.gmra.mrb[0].mxu0 %v130
  %v345 = vpop.f32.mrb[0].mxu0
  %v346 = vadd.f32 0.0, %v345
  %v347 = vpop.f32.mrb[0].mxu0
  %348 = vmatprep.mubr.f32.mxu0 0.0
  %349 = vmatmul.mubr.f32.gmra.mrb[0].mxu0 %v133
  %v350 = vpop.f32.mrb[0].mxu0
  %v351 = vadd.f32 0.0, %v350
  %v352 = vpop.f32.mrb[0].mxu0
  %353 = vmatprep.mubr.f32.mxu0 0.0
  %354 = vmatmul.mubr.f32.gmra.mrb[0].mxu0 %v136
  %v355 = vpop.f32.mrb[0].mxu0
  %v356 = vadd.f32 0.0, %v355
  %v357 = vpop.f32.mrb[0].mxu0
  %358 = vmatprep.mubr.f32.mxu0 0.0
  %359 = vmatmul.mubr.f32.gmra.mrb[0].mxu0 %v139
  %v360 = vpop.f32.mrb[0].mxu0
  %v361 = vadd.f32 0.0, %v360
  %v362 = vpop.f32.mrb[0].mxu0
  %363 = vmatprep.mubr.f32.mxu0 0.0
  %364 = vmatmul.mubr.f32.gmra.mrb[0].mxu0 %v142
  %v365 = vpop.f32.mrb[0].mxu0
  %v366 = vadd.f32 0.0, %v365
  %v367 = vpop.f32.mrb[0].mxu0
  %368 = vdwg.mxu0
  %v369 = vld [vmem:[%s2] sm:$0xff]
  %v370 = vld [vmem:[%s2 + $0x8] sm:$0xff]
  %v372 = vsel %vm47, %v369, 0
  %v375 = vsel %vm47, %v370, 0
  %377 = vmatprep.subr.mxu0 0.0
  %378 = vmatpush1.msra.mxu0 %v211
  %379 = vmatprep.subr.mxu0 0.0
  %380 = vmatpush1.msra.mxu0 0.0
  %381 = vmatprep.subr.mxu0 0.0
  %382 = vmatpush1.msra.mxu0 0.0
  %383 = vmatprep.subr.mxu0 0.0
  %384 = vmatpush1.msra.mxu0 0.0
  %385 = vmatprep.subr.mxu0 0.0
  %386 = vmatpush1.msra.mxu0 0.0
  %387 = vmatprep.subr.mxu0 0.0
  %388 = vmatpush1.msra.mxu0 0.0
  %389 = vmatprep.subr.mxu0 0.0
  %390 = vmatpush1.msra.mxu0 0.0
  %391 = vmatprep.subr.mxu0 0.0
  %392 = vmatpush1.msra.mxu0 0.0
  %393 = vmatprep.subr.mxu0 0.0
  %394 = vmatpush1.msra.mxu0 0.0
  %395 = vmatprep.subr.mxu0 0.0
  %396 = vmatpush1.msra.mxu0 0.0
  %397 = vmatprep.subr.mxu0 0.0
  %398 = vmatpush1.msra.mxu0 0.0
  %399 = vmatprep.subr.mxu0 0.0
  %400 = vmatpush1.msra.mxu0 0.0
  %401 = vmatprep.subr.mxu0 0.0
  %402 = vmatpush1.msra.mxu0 0.0
  %403 = vmatprep.subr.mxu0 0.0
  %404 = vmatpush1.msra.mxu0 0.0
  %405 = vmatprep.subr.mxu0 0.0
  %406 = vmatpush1.msra.mxu0 0.0
  %407 = vmatprep.subr.mxu0 0.0
  %408 = vmatpush1.msra.mxu0 0.0
  %409 = vmatprep.subr.mxu0 0.0
  %410 = vmatpush1.msra.mxu0 0.0
  %411 = vmatprep.subr.mxu0 0.0
  %412 = vmatpush1.msra.mxu0 0.0
  %413 = vmatprep.subr.mxu0 0.0
  %414 = vmatpush1.msra.mxu0 0.0
  %415 = vmatprep.subr.mxu0 0.0
  %416 = vmatpush1.msra.mxu0 0.0
  %417 = vmatprep.subr.mxu0 0.0
  %418 = vmatpush1.msra.mxu0 0.0
  %419 = vmatprep.subr.mxu0 0.0
  %420 = vmatpush1.msra.mxu0 0.0
  %421 = vmatprep.subr.mxu0 0.0
  %422 = vmatpush1.msra.mxu0 0.0
  %423 = vmatprep.subr.mxu0 0.0
  %424 = vmatpush1.msra.mxu0 0.0
  %425 = vmatprep.subr.mxu0 0.0
  %426 = vmatpush1.msra.mxu0 0.0
  %427 = vmatprep.subr.mxu0 0.0
  %428 = vmatpush1.msra.mxu0 0.0
  %429 = vmatprep.subr.mxu0 0.0
  %430 = vmatpush1.msra.mxu0 0.0
  %431 = vmatprep.subr.mxu0 0.0
  %432 = vmatpush1.msra.mxu0 0.0
  %433 = vmatprep.subr.mxu0 0.0
  %434 = vmatpush1.msra.mxu0 0.0
  %435 = vmatprep.subr.mxu0 0.0
  %436 = vmatpush1.msra.mxu0 0.0
  %437 = vmatprep.subr.mxu0 0.0
  %438 = vmatpush1.msra.mxu0 0.0
  %439 = vmatprep.subr.mxu0 0.0
  %440 = vmatpush1.msra.mxu0 0.0
  %441 = vmatprep.mubr.f32.mxu0 0.0
  %442 = vmatmul.mubr.f32.gmra.mrb[0].mxu0 %v372
  %v443 = vpop.f32.mrb[0].mxu0
  %v444 = vadd.f32 0.0, %v443
  %v445 = vpop.f32.mrb[0].mxu0
  %446 = vmatprep.mubr.f32.mxu0 0.0
  %447 = vmatmul.mubr.f32.gmra.mrb[0].mxu0 %v375
  %v448 = vpop.f32.mrb[0].mxu0
  %v449 = vadd.f32 0.0, %v448
  %v450 = vpop.f32.mrb[0].mxu0
  %451 = vdwg.mxu0
  %452 = vmatprep.subr.mxu0 0.0
  %453 = vmatpush1.msra.mxu0 %v216
  %454 = vmatprep.subr.mxu0 0.0
  %455 = vmatpush1.msra.mxu0 0.0
  %456 = vmatprep.subr.mxu0 0.0
  %457 = vmatpush1.msra.mxu0 0.0
  %458 = vmatprep.subr.mxu0 0.0
  %459 = vmatpush1.msra.mxu0 0.0
  %460 = vmatprep.subr.mxu0 0.0
  %461 = vmatpush1.msra.mxu0 0.0
  %462 = vmatprep.subr.mxu0 0.0
  %463 = vmatpush1.msra.mxu0 0.0
  %464 = vmatprep.subr.mxu0 0.0
  %465 = vmatpush1.msra.mxu0 0.0
  %466 = vmatprep.subr.mxu0 0.0
  %467 = vmatpush1.msra.mxu0 0.0
  %468 = vmatprep.subr.mxu0 0.0
  %469 = vmatpush1.msra.mxu0 0.0
  %470 = vmatprep.subr.mxu0 0.0
  %471 = vmatpush1.msra.mxu0 0.0
  %472 = vmatprep.subr.mxu0 0.0
  %473 = vmatpush1.msra.mxu0 0.0
  %474 = vmatprep.subr.mxu0 0.0
  %475 = vmatpush1.msra.mxu0 0.0
  %476 = vmatprep.subr.mxu0 0.0
  %477 = vmatpush1.msra.mxu0 0.0
  %478 = vmatprep.subr.mxu0 0.0
  %479 = vmatpush1.msra.mxu0 0.0
  %480 = vmatprep.subr.mxu0 0.0
  %481 = vmatpush1.msra.mxu0 0.0
  %482 = vmatprep.subr.mxu0 0.0
  %483 = vmatpush1.msra.mxu0 0.0
  %484 = vmatprep.subr.mxu0 0.0
  %485 = vmatpush1.msra.mxu0 0.0
  %486 = vmatprep.subr.mxu0 0.0
  %487 = vmatpush1.msra.mxu0 0.0
  %488 = vmatprep.subr.mxu0 0.0
  %489 = vmatpush1.msra.mxu0 0.0
  %490 = vmatprep.subr.mxu0 0.0
  %491 = vmatpush1.msra.mxu0 0.0
  %492 = vmatprep.subr.mxu0 0.0
  %493 = vmatpush1.msra.mxu0 0.0
  %494 = vmatprep.subr.mxu0 0.0
  %495 = vmatpush1.msra.mxu0 0.0
  %496 = vmatprep.subr.mxu0 0.0
  %497 = vmatpush1.msra.mxu0 0.0
  %498 = vmatprep.subr.mxu0 0.0
  %499 = vmatpush1.msra.mxu0 0.0
  %500 = vmatprep.subr.mxu0 0.0
  %501 = vmatpush1.msra.mxu0 0.0
  %502 = vmatprep.subr.mxu0 0.0
  %503 = vmatpush1.msra.mxu0 0.0
  %504 = vmatprep.subr.mxu0 0.0
  %505 = vmatpush1.msra.mxu0 0.0
  %506 = vmatprep.subr.mxu0 0.0
  %507 = vmatpush1.msra.mxu0 0.0
  %508 = vmatprep.subr.mxu0 0.0
  %509 = vmatpush1.msra.mxu0 0.0
  %510 = vmatprep.subr.mxu0 0.0
  %511 = vmatpush1.msra.mxu0 0.0
  %512 = vmatprep.subr.mxu0 0.0
  %513 = vmatpush1.msra.mxu0 0.0
  %514 = vmatprep.subr.mxu0 0.0
  %515 = vmatpush1.msra.mxu0 0.0
  %516 = vmatprep.mubr.f32.mxu0 0.0
  %517 = vmatmul.mubr.f32.gmra.mrb[0].mxu0 %v372
  %v518 = vpop.f32.mrb[0].mxu0
  %v519 = vadd.f32 0.0, %v518
  %v520 = vpop.f32.mrb[0].mxu0
  %521 = vmatprep.mubr.f32.mxu0 0.0
  %522 = vmatmul.mubr.f32.gmra.mrb[0].mxu0 %v375
  %v523 = vpop.f32.mrb[0].mxu0
  %v524 = vadd.f32 0.0, %v523
  %v525 = vpop.f32.mrb[0].mxu0
  %526 = vdwg.mxu0
  %527 = vmatprep.subr.mxu0 0.0
  %528 = vmatpush1.msra.mxu0 %v221
  %529 = vmatprep.subr.mxu0 0.0
  %530 = vmatpush1.msra.mxu0 0.0
  %531 = vmatprep.subr.mxu0 0.0
  %532 = vmatpush1.msra.mxu0 0.0
  %533 = vmatprep.subr.mxu0 0.0
  %534 = vmatpush1.msra.mxu0 0.0
  %535 = vmatprep.subr.mxu0 0.0
  %536 = vmatpush1.msra.mxu0 0.0
  %537 = vmatprep.subr.mxu0 0.0
  %538 = vmatpush1.msra.mxu0 0.0
  %539 = vmatprep.subr.mxu0 0.0
  %540 = vmatpush1.msra.mxu0 0.0
  %541 = vmatprep.subr.mxu0 0.0
  %542 = vmatpush1.msra.mxu0 0.0
  %543 = vmatprep.subr.mxu0 0.0
  %544 = vmatpush1.msra.mxu0 0.0
  %545 = vmatprep.subr.mxu0 0.0
  %546 = vmatpush1.msra.mxu0 0.0
  %547 = vmatprep.subr.mxu0 0.0
  %548 = vmatpush1.msra.mxu0 0.0
  %549 = vmatprep.subr.mxu0 0.0
  %550 = vmatpush1.msra.mxu0 0.0
  %551 = vmatprep.subr.mxu0 0.0
  %552 = vmatpush1.msra.mxu0 0.0
  %553 = vmatprep.subr.mxu0 0.0
  %554 = vmatpush1.msra.mxu0 0.0
  %555 = vmatprep.subr.mxu0 0.0
  %556 = vmatpush1.msra.mxu0 0.0
  %557 = vmatprep.subr.mxu0 0.0
  %558 = vmatpush1.msra.mxu0 0.0
  %559 = vmatprep.subr.mxu0 0.0
  %560 = vmatpush1.msra.mxu0 0.0
  %561 = vmatprep.subr.mxu0 0.0
  %562 = vmatpush1.msra.mxu0 0.0
  %563 = vmatprep.subr.mxu0 0.0
  %564 = vmatpush1.msra.mxu0 0.0
  %565 = vmatprep.subr.mxu0 0.0
  %566 = vmatpush1.msra.mxu0 0.0
  %567 = vmatprep.subr.mxu0 0.0
  %568 = vmatpush1.msra.mxu0 0.0
  %569 = vmatprep.subr.mxu0 0.0
  %570 = vmatpush1.msra.mxu0 0.0
  %571 = vmatprep.subr.mxu0 0.0
  %572 = vmatpush1.msra.mxu0 0.0
  %573 = vmatprep.subr.mxu0 0.0
  %574 = vmatpush1.msra.mxu0 0.0
  %575 = vmatprep.subr.mxu0 0.0
  %576 = vmatpush1.msra.mxu0 0.0
  %577 = vmatprep.subr.mxu0 0.0
  %578 = vmatpush1.msra.mxu0 0.0
  %579 = vmatprep.subr.mxu0 0.0
  %580 = vmatpush1.msra.mxu0 0.0
  %581 = vmatprep.subr.mxu0 0.0
  %582 = vmatpush1.msra.mxu0 0.0
  %583 = vmatprep.subr.mxu0 0.0
  %584 = vmatpush1.msra.mxu0 0.0
  %585 = vmatprep.subr.mxu0 0.0
  %586 = vmatpush1.msra.mxu0 0.0
  %587 = vmatprep.subr.mxu0 0.0
  %588 = vmatpush1.msra.mxu0 0.0
  %589 = vmatprep.subr.mxu0 0.0
  %590 = vmatpush1.msra.mxu0 0.0
  %591 = vmatprep.mubr.f32.mxu0 0.0
  %592 = vmatmul.mubr.f32.gmra.mrb[0].mxu0 %v372
  %v593 = vpop.f32.mrb[0].mxu0
  %v594 = vadd.f32 0.0, %v593
  %v595 = vpop.f32.mrb[0].mxu0
  %596 = vmatprep.mubr.f32.mxu0 0.0
  %597 = vmatmul.mubr.f32.gmra.mrb[0].mxu0 %v375
  %v598 = vpop.f32.mrb[0].mxu0
  %v599 = vadd.f32 0.0, %v598
  %v600 = vpop.f32.mrb[0].mxu0
  %601 = vdwg.mxu0
  %602 = vmatprep.subr.mxu0 0.0
  %603 = vmatpush1.msra.mxu0 %v226
  %604 = vmatprep.subr.mxu0 0.0
  %605 = vmatpush1.msra.mxu0 0.0
  %606 = vmatprep.subr.mxu0 0.0
  %607 = vmatpush1.msra.mxu0 0.0
  %608 = vmatprep.subr.mxu0 0.0
  %609 = vmatpush1.msra.mxu0 0.0
  %610 = vmatprep.subr.mxu0 0.0
  %611 = vmatpush1.msra.mxu0 0.0
  %612 = vmatprep.subr.mxu0 0.0
  %613 = vmatpush1.msra.mxu0 0.0
  %614 = vmatprep.subr.mxu0 0.0
  %615 = vmatpush1.msra.mxu0 0.0
  %616 = vmatprep.subr.mxu0 0.0
  %617 = vmatpush1.msra.mxu0 0.0
  %618 = vmatprep.subr.mxu0 0.0
  %619 = vmatpush1.msra.mxu0 0.0
  %620 = vmatprep.subr.mxu0 0.0
  %621 = vmatpush1.msra.mxu0 0.0
  %622 = vmatprep.subr.mxu0 0.0
  %623 = vmatpush1.msra.mxu0 0.0
  %624 = vmatprep.subr.mxu0 0.0
  %625 = vmatpush1.msra.mxu0 0.0
  %626 = vmatprep.subr.mxu0 0.0
  %627 = vmatpush1.msra.mxu0 0.0
  %628 = vmatprep.subr.mxu0 0.0
  %629 = vmatpush1.msra.mxu0 0.0
  %630 = vmatprep.subr.mxu0 0.0
  %631 = vmatpush1.msra.mxu0 0.0
  %632 = vmatprep.subr.mxu0 0.0
  %633 = vmatpush1.msra.mxu0 0.0
  %634 = vmatprep.subr.mxu0 0.0
  %635 = vmatpush1.msra.mxu0 0.0
  %636 = vmatprep.subr.mxu0 0.0
  %637 = vmatpush1.msra.mxu0 0.0
  %638 = vmatprep.subr.mxu0 0.0
  %639 = vmatpush1.msra.mxu0 0.0
  %640 = vmatprep.subr.mxu0 0.0
  %641 = vmatpush1.msra.mxu0 0.0
  %642 = vmatprep.subr.mxu0 0.0
  %643 = vmatpush1.msra.mxu0 0.0
  %644 = vmatprep.subr.mxu0 0.0
  %645 = vmatpush1.msra.mxu0 0.0
  %646 = vmatprep.subr.mxu0 0.0
  %647 = vmatpush1.msra.mxu0 0.0
  %648 = vmatprep.subr.mxu0 0.0
  %649 = vmatpush1.msra.mxu0 0.0
  %650 = vmatprep.subr.mxu0 0.0
  %651 = vmatpush1.msra.mxu0 0.0
  %652 = vmatprep.subr.mxu0 0.0
  %653 = vmatpush1.msra.mxu0 0.0
  %654 = vmatprep.subr.mxu0 0.0
  %655 = vmatpush1.msra.mxu0 0.0
  %656 = vmatprep.subr.mxu0 0.0
  %657 = vmatpush1.msra.mxu0 0.0
  %658 = vmatprep.subr.mxu0 0.0
  %659 = vmatpush1.msra.mxu0 0.0
  %660 = vmatprep.subr.mxu0 0.0
  %661 = vmatpush1.msra.mxu0 0.0
  %662 = vmatprep.subr.mxu0 0.0
  %663 = vmatpush1.msra.mxu0 0.0
  %664 = vmatprep.subr.mxu0 0.0
  %665 = vmatpush1.msra.mxu0 0.0
  %666 = vmatprep.mubr.f32.mxu0 0.0
  %667 = vmatmul.mubr.f32.gmra.mrb[0].mxu0 %v372
  %v668 = vpop.f32.mrb[0].mxu0
  %v669 = vadd.f32 0.0, %v668
  %v670 = vpop.f32.mrb[0].mxu0
  %671 = vmatprep.mubr.f32.mxu0 0.0
  %672 = vmatmul.mubr.f32.gmra.mrb[0].mxu0 %v375
  %v673 = vpop.f32.mrb[0].mxu0
  %v674 = vadd.f32 0.0, %v673
  %v675 = vpop.f32.mrb[0].mxu0
  %676 = vdwg.mxu0
  %677 = vmatprep.subr.mxu0 0.0
  %678 = vmatpush1.msra.mxu0 %v231
  %679 = vmatprep.subr.mxu0 0.0
  %680 = vmatpush1.msra.mxu0 0.0
  %681 = vmatprep.subr.mxu0 0.0
  %682 = vmatpush1.msra.mxu0 0.0
  %683 = vmatprep.subr.mxu0 0.0
  %684 = vmatpush1.msra.mxu0 0.0
  %685 = vmatprep.subr.mxu0 0.0
  %686 = vmatpush1.msra.mxu0 0.0
  %687 = vmatprep.subr.mxu0 0.0
  %688 = vmatpush1.msra.mxu0 0.0
  %689 = vmatprep.subr.mxu0 0.0
  %690 = vmatpush1.msra.mxu0 0.0
  %691 = vmatprep.subr.mxu0 0.0
  %692 = vmatpush1.msra.mxu0 0.0
  %693 = vmatprep.subr.mxu0 0.0
  %694 = vmatpush1.msra.mxu0 0.0
  %695 = vmatprep.subr.mxu0 0.0
  %696 = vmatpush1.msra.mxu0 0.0
  %697 = vmatprep.subr.mxu0 0.0
  %698 = vmatpush1.msra.mxu0 0.0
  %699 = vmatprep.subr.mxu0 0.0
  %700 = vmatpush1.msra.mxu0 0.0
  %701 = vmatprep.subr.mxu0 0.0
  %702 = vmatpush1.msra.mxu0 0.0
  %703 = vmatprep.subr.mxu0 0.0
  %704 = vmatpush1.msra.mxu0 0.0
  %705 = vmatprep.subr.mxu0 0.0
  %706 = vmatpush1.msra.mxu0 0.0
  %707 = vmatprep.subr.mxu0 0.0
  %708 = vmatpush1.msra.mxu0 0.0
  %709 = vmatprep.subr.mxu0 0.0
  %710 = vmatpush1.msra.mxu0 0.0
  %711 = vmatprep.subr.mxu0 0.0
  %712 = vmatpush1.msra.mxu0 0.0
  %713 = vmatprep.subr.mxu0 0.0
  %714 = vmatpush1.msra.mxu0 0.0
  %715 = vmatprep.subr.mxu0 0.0
  %716 = vmatpush1.msra.mxu0 0.0
  %717 = vmatprep.subr.mxu0 0.0
  %718 = vmatpush1.msra.mxu0 0.0
  %719 = vmatprep.subr.mxu0 0.0
  %720 = vmatpush1.msra.mxu0 0.0
  %721 = vmatprep.subr.mxu0 0.0
  %722 = vmatpush1.msra.mxu0 0.0
  %723 = vmatprep.subr.mxu0 0.0
  %724 = vmatpush1.msra.mxu0 0.0
  %725 = vmatprep.subr.mxu0 0.0
  %726 = vmatpush1.msra.mxu0 0.0
  %727 = vmatprep.subr.mxu0 0.0
  %728 = vmatpush1.msra.mxu0 0.0
  %729 = vmatprep.subr.mxu0 0.0
  %730 = vmatpush1.msra.mxu0 0.0
  %731 = vmatprep.subr.mxu0 0.0
  %732 = vmatpush1.msra.mxu0 0.0
  %733 = vmatprep.subr.mxu0 0.0
  %734 = vmatpush1.msra.mxu0 0.0
  %735 = vmatprep.subr.mxu0 0.0
  %736 = vmatpush1.msra.mxu0 0.0
  %737 = vmatprep.subr.mxu0 0.0
  %738 = vmatpush1.msra.mxu0 0.0
  %739 = vmatprep.subr.mxu0 0.0
  %740 = vmatpush1.msra.mxu0 0.0
  %741 = vmatprep.mubr.f32.mxu0 0.0
  %742 = vmatmul.mubr.f32.gmra.mrb[0].mxu0 %v372
  %v743 = vpop.f32.mrb[0].mxu0
  %v744 = vadd.f32 0.0, %v743
  %v745 = vpop.f32.mrb[0].mxu0
  %746 = vmatprep.mubr.f32.mxu0 0.0
  %747 = vmatmul.mubr.f32.gmra.mrb[0].mxu0 %v375
  %v748 = vpop.f32.mrb[0].mxu0
  %v749 = vadd.f32 0.0, %v748
  %v750 = vpop.f32.mrb[0].mxu0
  %751 = vdwg.mxu0
  %752 = vmatprep.subr.mxu0 0.0
  %753 = vmatpush1.msra.mxu0 %v236
  %754 = vmatprep.subr.mxu0 0.0
  %755 = vmatpush1.msra.mxu0 0.0
  %756 = vmatprep.subr.mxu0 0.0
  %757 = vmatpush1.msra.mxu0 0.0
  %758 = vmatprep.subr.mxu0 0.0
  %759 = vmatpush1.msra.mxu0 0.0
  %760 = vmatprep.subr.mxu0 0.0
  %761 = vmatpush1.msra.mxu0 0.0
  %762 = vmatprep.subr.mxu0 0.0
  %763 = vmatpush1.msra.mxu0 0.0
  %764 = vmatprep.subr.mxu0 0.0
  %765 = vmatpush1.msra.mxu0 0.0
  %766 = vmatprep.subr.mxu0 0.0
  %767 = vmatpush1.msra.mxu0 0.0
  %768 = vmatprep.subr.mxu0 0.0
  %769 = vmatpush1.msra.mxu0 0.0
  %770 = vmatprep.subr.mxu0 0.0
  %771 = vmatpush1.msra.mxu0 0.0
  %772 = vmatprep.subr.mxu0 0.0
  %773 = vmatpush1.msra.mxu0 0.0
  %774 = vmatprep.subr.mxu0 0.0
  %775 = vmatpush1.msra.mxu0 0.0
  %776 = vmatprep.subr.mxu0 0.0
  %777 = vmatpush1.msra.mxu0 0.0
  %778 = vmatprep.subr.mxu0 0.0
  %779 = vmatpush1.msra.mxu0 0.0
  %780 = vmatprep.subr.mxu0 0.0
  %781 = vmatpush1.msra.mxu0 0.0
  %782 = vmatprep.subr.mxu0 0.0
  %783 = vmatpush1.msra.mxu0 0.0
  %784 = vmatprep.subr.mxu0 0.0
  %785 = vmatpush1.msra.mxu0 0.0
  %786 = vmatprep.subr.mxu0 0.0
  %787 = vmatpush1.msra.mxu0 0.0
  %788 = vmatprep.subr.mxu0 0.0
  %789 = vmatpush1.msra.mxu0 0.0
  %790 = vmatprep.subr.mxu0 0.0
  %791 = vmatpush1.msra.mxu0 0.0
  %792 = vmatprep.subr.mxu0 0.0
  %793 = vmatpush1.msra.mxu0 0.0
  %794 = vmatprep.subr.mxu0 0.0
  %795 = vmatpush1.msra.mxu0 0.0
  %796 = vmatprep.subr.mxu0 0.0
  %797 = vmatpush1.msra.mxu0 0.0
  %798 = vmatprep.subr.mxu0 0.0
  %799 = vmatpush1.msra.mxu0 0.0
  %800 = vmatprep.subr.mxu0 0.0
  %801 = vmatpush1.msra.mxu0 0.0
  %802 = vmatprep.subr.mxu0 0.0
  %803 = vmatpush1.msra.mxu0 0.0
  %804 = vmatprep.subr.mxu0 0.0
  %805 = vmatpush1.msra.mxu0 0.0
  %806 = vmatprep.subr.mxu0 0.0
  %807 = vmatpush1.msra.mxu0 0.0
  %808 = vmatprep.subr.mxu0 0.0
  %809 = vmatpush1.msra.mxu0 0.0
  %810 = vmatprep.subr.mxu0 0.0
  %811 = vmatpush1.msra.mxu0 0.0
  %812 = vmatprep.subr.mxu0 0.0
  %813 = vmatpush1.msra.mxu0 0.0
  %814 = vmatprep.subr.mxu0 0.0
  %815 = vmatpush1.msra.mxu0 0.0
  %816 = vmatprep.mubr.f32.mxu0 0.0
  %817 = vmatmul.mubr.f32.gmra.mrb[0].mxu0 %v372
  %v818 = vpop.f32.mrb[0].mxu0
  %v819 = vadd.f32 0.0, %v818
  %v820 = vpop.f32.mrb[0].mxu0
  %821 = vmatprep.mubr.f32.mxu0 0.0
  %822 = vmatmul.mubr.f32.gmra.mrb[0].mxu0 %v375
  %v823 = vpop.f32.mrb[0].mxu0
  %v824 = vadd.f32 0.0, %v823
  %v825 = vpop.f32.mrb[0].mxu0
  %826 = vdwg.mxu0
  %827 = vmatprep.subr.mxu0 0.0
  %828 = vmatpush1.msra.mxu0 %v241
  %829 = vmatprep.subr.mxu0 0.0
  %830 = vmatpush1.msra.mxu0 0.0
  %831 = vmatprep.subr.mxu0 0.0
  %832 = vmatpush1.msra.mxu0 0.0
  %833 = vmatprep.subr.mxu0 0.0
  %834 = vmatpush1.msra.mxu0 0.0
  %835 = vmatprep.subr.mxu0 0.0
  %836 = vmatpush1.msra.mxu0 0.0
  %837 = vmatprep.subr.mxu0 0.0
  %838 = vmatpush1.msra.mxu0 0.0
  %839 = vmatprep.subr.mxu0 0.0
  %840 = vmatpush1.msra.mxu0 0.0
  %841 = vmatprep.subr.mxu0 0.0
  %842 = vmatpush1.msra.mxu0 0.0
  %843 = vmatprep.subr.mxu0 0.0
  %844 = vmatpush1.msra.mxu0 0.0
  %845 = vmatprep.subr.mxu0 0.0
  %846 = vmatpush1.msra.mxu0 0.0
  %847 = vmatprep.subr.mxu0 0.0
  %848 = vmatpush1.msra.mxu0 0.0
  %849 = vmatprep.subr.mxu0 0.0
  %850 = vmatpush1.msra.mxu0 0.0
  %851 = vmatprep.subr.mxu0 0.0
  %852 = vmatpush1.msra.mxu0 0.0
  %853 = vmatprep.subr.mxu0 0.0
  %854 = vmatpush1.msra.mxu0 0.0
  %855 = vmatprep.subr.mxu0 0.0
  %856 = vmatpush1.msra.mxu0 0.0
  %857 = vmatprep.subr.mxu0 0.0
  %858 = vmatpush1.msra.mxu0 0.0
  %859 = vmatprep.subr.mxu0 0.0
  %860 = vmatpush1.msra.mxu0 0.0
  %861 = vmatprep.subr.mxu0 0.0
  %862 = vmatpush1.msra.mxu0 0.0
  %863 = vmatprep.subr.mxu0 0.0
  %864 = vmatpush1.msra.mxu0 0.0
  %865 = vmatprep.subr.mxu0 0.0
  %866 = vmatpush1.msra.mxu0 0.0
  %867 = vmatprep.subr.mxu0 0.0
  %868 = vmatpush1.msra.mxu0 0.0
  %869 = vmatprep.subr.mxu0 0.0
  %870 = vmatpush1.msra.mxu0 0.0
  %871 = vmatprep.subr.mxu0 0.0
  %872 = vmatpush1.msra.mxu0 0.0
  %873 = vmatprep.subr.mxu0 0.0
  %874 = vmatpush1.msra.mxu0 0.0
  %875 = vmatprep.subr.mxu0 0.0
  %876 = vmatpush1.msra.mxu0 0.0
  %877 = vmatprep.subr.mxu0 0.0
  %878 = vmatpush1.msra.mxu0 0.0
  %879 = vmatprep.subr.mxu0 0.0
  %880 = vmatpush1.msra.mxu0 0.0
  %881 = vmatprep.subr.mxu0 0.0
  %882 = vmatpush1.msra.mxu0 0.0
  %883 = vmatprep.subr.mxu0 0.0
  %884 = vmatpush1.msra.mxu0 0.0
  %885 = vmatprep.subr.mxu0 0.0
  %886 = vmatpush1.msra.mxu0 0.0
  %887 = vmatprep.subr.mxu0 0.0
  %888 = vmatpush1.msra.mxu0 0.0
  %889 = vmatprep.subr.mxu0 0.0
  %890 = vmatpush1.msra.mxu0 0.0
  %891 = vmatprep.mubr.f32.mxu0 0.0
  %892 = vmatmul.mubr.f32.gmra.mrb[0].mxu0 %v372
  %v893 = vpop.f32.mrb[0].mxu0
  %v894 = vadd.f32 0.0, %v893
  %v895 = vpop.f32.mrb[0].mxu0
  %896 = vmatprep.mubr.f32.mxu0 0.0
  %897 = vmatmul.mubr.f32.gmra.mrb[0].mxu0 %v375
  %v898 = vpop.f32.mrb[0].mxu0
  %v899 = vadd.f32 0.0, %v898
  %v900 = vpop.f32.mrb[0].mxu0
  %901 = vdwg.mxu0
  %902 = vmatprep.subr.mxu0 0.0
  %903 = vmatpush1.msra.mxu0 %v246
  %904 = vmatprep.subr.mxu0 0.0
  %905 = vmatpush1.msra.mxu0 0.0
  %906 = vmatprep.subr.mxu0 0.0
  %907 = vmatpush1.msra.mxu0 0.0
  %908 = vmatprep.subr.mxu0 0.0
  %909 = vmatpush1.msra.mxu0 0.0
  %910 = vmatprep.subr.mxu0 0.0
  %911 = vmatpush1.msra.mxu0 0.0
  %912 = vmatprep.subr.mxu0 0.0
  %913 = vmatpush1.msra.mxu0 0.0
  %914 = vmatprep.subr.mxu0 0.0
  %915 = vmatpush1.msra.mxu0 0.0
  %916 = vmatprep.subr.mxu0 0.0
  %917 = vmatpush1.msra.mxu0 0.0
  %918 = vmatprep.subr.mxu0 0.0
  %919 = vmatpush1.msra.mxu0 0.0
  %920 = vmatprep.subr.mxu0 0.0
  %921 = vmatpush1.msra.mxu0 0.0
  %922 = vmatprep.subr.mxu0 0.0
  %923 = vmatpush1.msra.mxu0 0.0
  %924 = vmatprep.subr.mxu0 0.0
  %925 = vmatpush1.msra.mxu0 0.0
  %926 = vmatprep.subr.mxu0 0.0
  %927 = vmatpush1.msra.mxu0 0.0
  %928 = vmatprep.subr.mxu0 0.0
  %929 = vmatpush1.msra.mxu0 0.0
  %930 = vmatprep.subr.mxu0 0.0
  %931 = vmatpush1.msra.mxu0 0.0
  %932 = vmatprep.subr.mxu0 0.0
  %933 = vmatpush1.msra.mxu0 0.0
  %934 = vmatprep.subr.mxu0 0.0
  %935 = vmatpush1.msra.mxu0 0.0
  %936 = vmatprep.subr.mxu0 0.0
  %937 = vmatpush1.msra.mxu0 0.0
  %938 = vmatprep.subr.mxu0 0.0
  %939 = vmatpush1.msra.mxu0 0.0
  %940 = vmatprep.subr.mxu0 0.0
  %941 = vmatpush1.msra.mxu0 0.0
  %942 = vmatprep.subr.mxu0 0.0
  %943 = vmatpush1.msra.mxu0 0.0
  %944 = vmatprep.subr.mxu0 0.0
  %945 = vmatpush1.msra.mxu0 0.0
  %946 = vmatprep.subr.mxu0 0.0
  %947 = vmatpush1.msra.mxu0 0.0
  %948 = vmatprep.subr.mxu0 0.0
  %949 = vmatpush1.msra.mxu0 0.0
  %950 = vmatprep.subr.mxu0 0.0
  %951 = vmatpush1.msra.mxu0 0.0
  %952 = vmatprep.subr.mxu0 0.0
  %953 = vmatpush1.msra.mxu0 0.0
  %954 = vmatprep.subr.mxu0 0.0
  %955 = vmatpush1.msra.mxu0 0.0
  %956 = vmatprep.subr.mxu0 0.0
  %957 = vmatpush1.msra.mxu0 0.0
  %958 = vmatprep.subr.mxu0 0.0
  %959 = vmatpush1.msra.mxu0 0.0
  %960 = vmatprep.subr.mxu0 0.0
  %961 = vmatpush1.msra.mxu0 0.0
  %962 = vmatprep.subr.mxu0 0.0
  %963 = vmatpush1.msra.mxu0 0.0
  %964 = vmatprep.subr.mxu0 0.0
  %965 = vmatpush1.msra.mxu0 0.0
  %966 = vmatprep.mubr.f32.mxu0 0.0
  %967 = vmatmul.mubr.f32.gmra.mrb[0].mxu0 %v372
  %v968 = vpop.f32.mrb[0].mxu0
  %v969 = vadd.f32 0.0, %v968
  %v970 = vpop.f32.mrb[0].mxu0
  %971 = vmatprep.mubr.f32.mxu0 0.0
  %972 = vmatmul.mubr.f32.gmra.mrb[0].mxu0 %v375
  %v973 = vpop.f32.mrb[0].mxu0
  %v974 = vadd.f32 0.0, %v973
  %v975 = vpop.f32.mrb[0].mxu0
  %976 = vdwg.mxu0
  %977 = vmatprep.subr.mxu0 0.0
  %978 = vmatpush1.msra.mxu0 %v251
  %979 = vmatprep.subr.mxu0 0.0
  %980 = vmatpush1.msra.mxu0 0.0
  %981 = vmatprep.subr.mxu0 0.0
  %982 = vmatpush1.msra.mxu0 0.0
  %983 = vmatprep.subr.mxu0 0.0
  %984 = vmatpush1.msra.mxu0 0.0
  %985 = vmatprep.subr.mxu0 0.0
  %986 = vmatpush1.msra.mxu0 0.0
  %987 = vmatprep.subr.mxu0 0.0
  %988 = vmatpush1.msra.mxu0 0.0
  %989 = vmatprep.subr.mxu0 0.0
  %990 = vmatpush1.msra.mxu0 0.0
  %991 = vmatprep.subr.mxu0 0.0
  %992 = vmatpush1.msra.mxu0 0.0
  %993 = vmatprep.subr.mxu0 0.0
  %994 = vmatpush1.msra.mxu0 0.0
  %995 = vmatprep.subr.mxu0 0.0
  %996 = vmatpush1.msra.mxu0 0.0
  %997 = vmatprep.subr.mxu0 0.0
  %998 = vmatpush1.msra.mxu0 0.0
  %999 = vmatprep.subr.mxu0 0.0
  %1000 = vmatpush1.msra.mxu0 0.0
  %1001 = vmatprep.subr.mxu0 0.0
  %1002 = vmatpush1.msra.mxu0 0.0
  %1003 = vmatprep.subr.mxu0 0.0
  %1004 = vmatpush1.msra.mxu0 0.0
  %1005 = vmatprep.subr.mxu0 0.0
  %1006 = vmatpush1.msra.mxu0 0.0
  %1007 = vmatprep.subr.mxu0 0.0
  %1008 = vmatpush1.msra.mxu0 0.0
  %1009 = vmatprep.subr.mxu0 0.0
  %1010 = vmatpush1.msra.mxu0 0.0
  %1011 = vmatprep.subr.mxu0 0.0
  %1012 = vmatpush1.msra.mxu0 0.0
  %1013 = vmatprep.subr.mxu0 0.0
  %1014 = vmatpush1.msra.mxu0 0.0
  %1015 = vmatprep.subr.mxu0 0.0
  %1016 = vmatpush1.msra.mxu0 0.0
  %1017 = vmatprep.subr.mxu0 0.0
  %1018 = vmatpush1.msra.mxu0 0.0
  %1019 = vmatprep.subr.mxu0 0.0
  %1020 = vmatpush1.msra.mxu0 0.0
  %1021 = vmatprep.subr.mxu0 0.0
  %1022 = vmatpush1.msra.mxu0 0.0
  %1023 = vmatprep.subr.mxu0 0.0
  %1024 = vmatpush1.msra.mxu0 0.0
  %1025 = vmatprep.subr.mxu0 0.0
  %1026 = vmatpush1.msra.mxu0 0.0
  %1027 = vmatprep.subr.mxu0 0.0
  %1028 = vmatpush1.msra.mxu0 0.0
  %1029 = vmatprep.subr.mxu0 0.0
  %1030 = vmatpush1.msra.mxu0 0.0
  %1031 = vmatprep.subr.mxu0 0.0
  %1032 = vmatpush1.msra.mxu0 0.0
  %1033 = vmatprep.subr.mxu0 0.0
  %1034 = vmatpush1.msra.mxu0 0.0
  %1035 = vmatprep.subr.mxu0 0.0
  %1036 = vmatpush1.msra.mxu0 0.0
  %1037 = vmatprep.subr.mxu0 0.0
  %1038 = vmatpush1.msra.mxu0 0.0
  %1039 = vmatprep.subr.mxu0 0.0
  %1040 = vmatpush1.msra.mxu0 0.0
  %1041 = vmatprep.mubr.f32.mxu0 0.0
  %1042 = vmatmul.mubr.f32.gmra.mrb[0].mxu0 %v372
  %v1043 = vpop.f32.mrb[0].mxu0
  %v1044 = vadd.f32 0.0, %v1043
  %v1045 = vpop.f32.mrb[0].mxu0
  %1046 = vmatprep.mubr.f32.mxu0 0.0
  %1047 = vmatmul.mubr.f32.gmra.mrb[0].mxu0 %v375
  %v1048 = vpop.f32.mrb[0].mxu0
  %v1049 = vadd.f32 0.0, %v1048
  %v1050 = vpop.f32.mrb[0].mxu0
  %1051 = vdwg.mxu0
  %1052 = vmatprep.subr.mxu0 0.0
  %1053 = vmatpush1.msra.mxu0 %v256
  %1054 = vmatprep.subr.mxu0 0.0
  %1055 = vmatpush1.msra.mxu0 0.0
  %1056 = vmatprep.subr.mxu0 0.0
  %1057 = vmatpush1.msra.mxu0 0.0
  %1058 = vmatprep.subr.mxu0 0.0
  %1059 = vmatpush1.msra.mxu0 0.0
  %1060 = vmatprep.subr.mxu0 0.0
  %1061 = vmatpush1.msra.mxu0 0.0
  %1062 = vmatprep.subr.mxu0 0.0
  %1063 = vmatpush1.msra.mxu0 0.0
  %1064 = vmatprep.subr.mxu0 0.0
  %1065 = vmatpush1.msra.mxu0 0.0
  %1066 = vmatprep.subr.mxu0 0.0
  %1067 = vmatpush1.msra.mxu0 0.0
  %1068 = vmatprep.subr.mxu0 0.0
  %1069 = vmatpush1.msra.mxu0 0.0
  %1070 = vmatprep.subr.mxu0 0.0
  %1071 = vmatpush1.msra.mxu0 0.0
  %1072 = vmatprep.subr.mxu0 0.0
  %1073 = vmatpush1.msra.mxu0 0.0
  %1074 = vmatprep.subr.mxu0 0.0
  %1075 = vmatpush1.msra.mxu0 0.0
  %1076 = vmatprep.subr.mxu0 0.0
  %1077 = vmatpush1.msra.mxu0 0.0
  %1078 = vmatprep.subr.mxu0 0.0
  %1079 = vmatpush1.msra.mxu0 0.0
  %1080 = vmatprep.subr.mxu0 0.0
  %1081 = vmatpush1.msra.mxu0 0.0
  %1082 = vmatprep.subr.mxu0 0.0
  %1083 = vmatpush1.msra.mxu0 0.0
  %1084 = vmatprep.subr.mxu0 0.0
  %1085 = vmatpush1.msra.mxu0 0.0
  %1086 = vmatprep.subr.mxu0 0.0
  %1087 = vmatpush1.msra.mxu0 0.0
  %1088 = vmatprep.subr.mxu0 0.0
  %1089 = vmatpush1.msra.mxu0 0.0
  %1090 = vmatprep.subr.mxu0 0.0
  %1091 = vmatpush1.msra.mxu0 0.0
  %1092 = vmatprep.subr.mxu0 0.0
  %1093 = vmatpush1.msra.mxu0 0.0
  %1094 = vmatprep.subr.mxu0 0.0
  %1095 = vmatpush1.msra.mxu0 0.0
  %1096 = vmatprep.subr.mxu0 0.0
  %1097 = vmatpush1.msra.mxu0 0.0
  %1098 = vmatprep.subr.mxu0 0.0
  %1099 = vmatpush1.msra.mxu0 0.0
  %1100 = vmatprep.subr.mxu0 0.0
  %1101 = vmatpush1.msra.mxu0 0.0
  %1102 = vmatprep.subr.mxu0 0.0
  %1103 = vmatpush1.msra.mxu0 0.0
  %1104 = vmatprep.subr.mxu0 0.0
  %1105 = vmatpush1.msra.mxu0 0.0
  %1106 = vmatprep.subr.mxu0 0.0
  %1107 = vmatpush1.msra.mxu0 0.0
  %1108 = vmatprep.subr.mxu0 0.0
  %1109 = vmatpush1.msra.mxu0 0.0
  %1110 = vmatprep.subr.mxu0 0.0
  %1111 = vmatpush1.msra.mxu0 0.0
  %1112 = vmatprep.subr.mxu0 0.0
  %1113 = vmatpush1.msra.mxu0 0.0
  %1114 = vmatprep.subr.mxu0 0.0
  %1115 = vmatpush1.msra.mxu0 0.0
  %1116 = vmatprep.mubr.f32.mxu0 0.0
  %1117 = vmatmul.mubr.f32.gmra.mrb[0].mxu0 %v372
  %v1118 = vpop.f32.mrb[0].mxu0
  %v1119 = vadd.f32 0.0, %v1118
  %v1120 = vpop.f32.mrb[0].mxu0
  %1121 = vmatprep.mubr.f32.mxu0 0.0
  %1122 = vmatmul.mubr.f32.gmra.mrb[0].mxu0 %v375
  %v1123 = vpop.f32.mrb[0].mxu0
  %v1124 = vadd.f32 0.0, %v1123
  %v1125 = vpop.f32.mrb[0].mxu0
  %1126 = vdwg.mxu0
  %1127 = vmatprep.subr.mxu0 0.0
  %1128 = vmatpush1.msra.mxu0 %v261
  %1129 = vmatprep.subr.mxu0 0.0
  %1130 = vmatpush1.msra.mxu0 0.0
  %1131 = vmatprep.subr.mxu0 0.0
  %1132 = vmatpush1.msra.mxu0 0.0
  %1133 = vmatprep.subr.mxu0 0.0
  %1134 = vmatpush1.msra.mxu0 0.0
  %1135 = vmatprep.subr.mxu0 0.0
  %1136 = vmatpush1.msra.mxu0 0.0
  %1137 = vmatprep.subr.mxu0 0.0
  %1138 = vmatpush1.msra.mxu0 0.0
  %1139 = vmatprep.subr.mxu0 0.0
  %1140 = vmatpush1.msra.mxu0 0.0
  %1141 = vmatprep.subr.mxu0 0.0
  %1142 = vmatpush1.msra.mxu0 0.0
  %1143 = vmatprep.subr.mxu0 0.0
  %1144 = vmatpush1.msra.mxu0 0.0
  %1145 = vmatprep.subr.mxu0 0.0
  %1146 = vmatpush1.msra.mxu0 0.0
  %1147 = vmatprep.subr.mxu0 0.0
  %1148 = vmatpush1.msra.mxu0 0.0
  %1149 = vmatprep.subr.mxu0 0.0
  %1150 = vmatpush1.msra.mxu0 0.0
  %1151 = vmatprep.subr.mxu0 0.0
  %1152 = vmatpush1.msra.mxu0 0.0
  %1153 = vmatprep.subr.mxu0 0.0
  %1154 = vmatpush1.msra.mxu0 0.0
  %1155 = vmatprep.subr.mxu0 0.0
  %1156 = vmatpush1.msra.mxu0 0.0
  %1157 = vmatprep.subr.mxu0 0.0
  %1158 = vmatpush1.msra.mxu0 0.0
  %1159 = vmatprep.subr.mxu0 0.0
  %1160 = vmatpush1.msra.mxu0 0.0
  %1161 = vmatprep.subr.mxu0 0.0
  %1162 = vmatpush1.msra.mxu0 0.0
  %1163 = vmatprep.subr.mxu0 0.0
  %1164 = vmatpush1.msra.mxu0 0.0
  %1165 = vmatprep.subr.mxu0 0.0
  %1166 = vmatpush1.msra.mxu0 0.0
  %1167 = vmatprep.subr.mxu0 0.0
  %1168 = vmatpush1.msra.mxu0 0.0
  %1169 = vmatprep.subr.mxu0 0.0
  %1170 = vmatpush1.msra.mxu0 0.0
  %1171 = vmatprep.subr.mxu0 0.0
  %1172 = vmatpush1.msra.mxu0 0.0
  %1173 = vmatprep.subr.mxu0 0.0
  %1174 = vmatpush1.msra.mxu0 0.0
  %1175 = vmatprep.subr.mxu0 0.0
  %1176 = vmatpush1.msra.mxu0 0.0
  %1177 = vmatprep.subr.mxu0 0.0
  %1178 = vmatpush1.msra.mxu0 0.0
  %1179 = vmatprep.subr.mxu0 0.0
  %1180 = vmatpush1.msra.mxu0 0.0
  %1181 = vmatprep.subr.mxu0 0.0
  %1182 = vmatpush1.msra.mxu0 0.0
  %1183 = vmatprep.subr.mxu0 0.0
  %1184 = vmatpush1.msra.mxu0 0.0
  %1185 = vmatprep.subr.mxu0 0.0
  %1186 = vmatpush1.msra.mxu0 0.0
  %1187 = vmatprep.subr.mxu0 0.0
  %1188 = vmatpush1.msra.mxu0 0.0
  %1189 = vmatprep.subr.mxu0 0.0
  %1190 = vmatpush1.msra.mxu0 0.0
  %1191 = vmatprep.mubr.f32.mxu0 0.0
  %1192 = vmatmul.mubr.f32.gmra.mrb[0].mxu0 %v372
  %v1193 = vpop.f32.mrb[0].mxu0
  %v1194 = vadd.f32 0.0, %v1193
  %v1195 = vpop.f32.mrb[0].mxu0
  %1196 = vmatprep.mubr.f32.mxu0 0.0
  %1197 = vmatmul.mubr.f32.gmra.mrb[0].mxu0 %v375
  %v1198 = vpop.f32.mrb[0].mxu0
  %v1199 = vadd.f32 0.0, %v1198
  %v1200 = vpop.f32.mrb[0].mxu0
  %1201 = vdwg.mxu0
  %1202 = vmatprep.subr.mxu0 0.0
  %1203 = vmatpush1.msra.mxu0 %v266
  %1204 = vmatprep.subr.mxu0 0.0
  %1205 = vmatpush1.msra.mxu0 0.0
  %1206 = vmatprep.subr.mxu0 0.0
  %1207 = vmatpush1.msra.mxu0 0.0
  %1208 = vmatprep.subr.mxu0 0.0
  %1209 = vmatpush1.msra.mxu0 0.0
  %1210 = vmatprep.subr.mxu0 0.0
  %1211 = vmatpush1.msra.mxu0 0.0
  %1212 = vmatprep.subr.mxu0 0.0
  %1213 = vmatpush1.msra.mxu0 0.0
  %1214 = vmatprep.subr.mxu0 0.0
  %1215 = vmatpush1.msra.mxu0 0.0
  %1216 = vmatprep.subr.mxu0 0.0
  %1217 = vmatpush1.msra.mxu0 0.0
  %1218 = vmatprep.subr.mxu0 0.0
  %1219 = vmatpush1.msra.mxu0 0.0
  %1220 = vmatprep.subr.mxu0 0.0
  %1221 = vmatpush1.msra.mxu0 0.0
  %1222 = vmatprep.subr.mxu0 0.0
  %1223 = vmatpush1.msra.mxu0 0.0
  %1224 = vmatprep.subr.mxu0 0.0
  %1225 = vmatpush1.msra.mxu0 0.0
  %1226 = vmatprep.subr.mxu0 0.0
  %1227 = vmatpush1.msra.mxu0 0.0
  %1228 = vmatprep.subr.mxu0 0.0
  %1229 = vmatpush1.msra.mxu0 0.0
  %1230 = vmatprep.subr.mxu0 0.0
  %1231 = vmatpush1.msra.mxu0 0.0
  %1232 = vmatprep.subr.mxu0 0.0
  %1233 = vmatpush1.msra.mxu0 0.0
  %1234 = vmatprep.subr.mxu0 0.0
  %1235 = vmatpush1.msra.mxu0 0.0
  %1236 = vmatprep.subr.mxu0 0.0
  %1237 = vmatpush1.msra.mxu0 0.0
  %1238 = vmatprep.subr.mxu0 0.0
  %1239 = vmatpush1.msra.mxu0 0.0
  %1240 = vmatprep.subr.mxu0 0.0
  %1241 = vmatpush1.msra.mxu0 0.0
  %1242 = vmatprep.subr.mxu0 0.0
  %1243 = vmatpush1.msra.mxu0 0.0
  %1244 = vmatprep.subr.mxu0 0.0
  %1245 = vmatpush1.msra.mxu0 0.0
  %1246 = vmatprep.subr.mxu0 0.0
  %1247 = vmatpush1.msra.mxu0 0.0
  %1248 = vmatprep.subr.mxu0 0.0
  %1249 = vmatpush1.msra.mxu0 0.0
  %1250 = vmatprep.subr.mxu0 0.0
  %1251 = vmatpush1.msra.mxu0 0.0
  %1252 = vmatprep.subr.mxu0 0.0
  %1253 = vmatpush1.msra.mxu0 0.0
  %1254 = vmatprep.subr.mxu0 0.0
  %1255 = vmatpush1.msra.mxu0 0.0
  %1256 = vmatprep.subr.mxu0 0.0
  %1257 = vmatpush1.msra.mxu0 0.0
  %1258 = vmatprep.subr.mxu0 0.0
  %1259 = vmatpush1.msra.mxu0 0.0
  %1260 = vmatprep.subr.mxu0 0.0
  %1261 = vmatpush1.msra.mxu0 0.0
  %1262 = vmatprep.subr.mxu0 0.0
  %1263 = vmatpush1.msra.mxu0 0.0
  %1264 = vmatprep.subr.mxu0 0.0
  %1265 = vmatpush1.msra.mxu0 0.0
  %1266 = vmatprep.mubr.f32.mxu0 0.0
  %1267 = vmatmul.mubr.f32.gmra.mrb[0].mxu0 %v372
  %v1268 = vpop.f32.mrb[0].mxu0
  %v1269 = vadd.f32 0.0, %v1268
  %v1270 = vpop.f32.mrb[0].mxu0
  %1271 = vmatprep.mubr.f32.mxu0 0.0
  %1272 = vmatmul.mubr.f32.gmra.mrb[0].mxu0 %v375
  %v1273 = vpop.f32.mrb[0].mxu0
  %v1274 = vadd.f32 0.0, %v1273
  %v1275 = vpop.f32.mrb[0].mxu0
  %1276 = vdwg.mxu0
  %1277 = vmatprep.subr.mxu0 0.0
  %1278 = vmatpush1.msra.mxu0 %v271
  %1279 = vmatprep.subr.mxu0 0.0
  %1280 = vmatpush1.msra.mxu0 0.0
  %1281 = vmatprep.subr.mxu0 0.0
  %1282 = vmatpush1.msra.mxu0 0.0
  %1283 = vmatprep.subr.mxu0 0.0
  %1284 = vmatpush1.msra.mxu0 0.0
  %1285 = vmatprep.subr.mxu0 0.0
  %1286 = vmatpush1.msra.mxu0 0.0
  %1287 = vmatprep.subr.mxu0 0.0
  %1288 = vmatpush1.msra.mxu0 0.0
  %1289 = vmatprep.subr.mxu0 0.0
  %1290 = vmatpush1.msra.mxu0 0.0
  %1291 = vmatprep.subr.mxu0 0.0
  %1292 = vmatpush1.msra.mxu0 0.0
  %1293 = vmatprep.subr.mxu0 0.0
  %1294 = vmatpush1.msra.mxu0 0.0
  %1295 = vmatprep.subr.mxu0 0.0
  %1296 = vmatpush1.msra.mxu0 0.0
  %1297 = vmatprep.subr.mxu0 0.0
  %1298 = vmatpush1.msra.mxu0 0.0
  %1299 = vmatprep.subr.mxu0 0.0
  %1300 = vmatpush1.msra.mxu0 0.0
  %1301 = vmatprep.subr.mxu0 0.0
  %1302 = vmatpush1.msra.mxu0 0.0
  %1303 = vmatprep.subr.mxu0 0.0
  %1304 = vmatpush1.msra.mxu0 0.0
  %1305 = vmatprep.subr.mxu0 0.0
  %1306 = vmatpush1.msra.mxu0 0.0
  %1307 = vmatprep.subr.mxu0 0.0
  %1308 = vmatpush1.msra.mxu0 0.0
  %1309 = vmatprep.subr.mxu0 0.0
  %1310 = vmatpush1.msra.mxu0 0.0
  %1311 = vmatprep.subr.mxu0 0.0
  %1312 = vmatpush1.msra.mxu0 0.0
  %1313 = vmatprep.subr.mxu0 0.0
  %1314 = vmatpush1.msra.mxu0 0.0
  %1315 = vmatprep.subr.mxu0 0.0
  %1316 = vmatpush1.msra.mxu0 0.0
  %1317 = vmatprep.subr.mxu0 0.0
  %1318 = vmatpush1.msra.mxu0 0.0
  %1319 = vmatprep.subr.mxu0 0.0
  %1320 = vmatpush1.msra.mxu0 0.0
  %1321 = vmatprep.subr.mxu0 0.0
  %1322 = vmatpush1.msra.mxu0 0.0
  %1323 = vmatprep.subr.mxu0 0.0
  %1324 = vmatpush1.msra.mxu0 0.0
  %1325 = vmatprep.subr.mxu0 0.0
  %1326 = vmatpush1.msra.mxu0 0.0
  %1327 = vmatprep.subr.mxu0 0.0
  %1328 = vmatpush1.msra.mxu0 0.0
  %1329 = vmatprep.subr.mxu0 0.0
  %1330 = vmatpush1.msra.mxu0 0.0
  %1331 = vmatprep.subr.mxu0 0.0
  %1332 = vmatpush1.msra.mxu0 0.0
  %1333 = vmatprep.subr.mxu0 0.0
  %1334 = vmatpush1.msra.mxu0 0.0
  %1335 = vmatprep.subr.mxu0 0.0
  %1336 = vmatpush1.msra.mxu0 0.0
  %1337 = vmatprep.subr.mxu0 0.0
  %1338 = vmatpush1.msra.mxu0 0.0
  %1339 = vmatprep.subr.mxu0 0.0
  %1340 = vmatpush1.msra.mxu0 0.0
  %1341 = vmatprep.mubr.f32.mxu0 0.0
  %1342 = vmatmul.mubr.f32.gmra.mrb[0].mxu0 %v372
  %v1343 = vpop.f32.mrb[0].mxu0
  %v1344 = vadd.f32 0.0, %v1343
  %v1345 = vpop.f32.mrb[0].mxu0
  %1346 = vmatprep.mubr.f32.mxu0 0.0
  %1347 = vmatmul.mubr.f32.gmra.mrb[0].mxu0 %v375
  %v1348 = vpop.f32.mrb[0].mxu0
  %v1349 = vadd.f32 0.0, %v1348
  %v1350 = vpop.f32.mrb[0].mxu0
  %1351 = vdwg.mxu0
  %1352 = vmatprep.subr.mxu0 0.0
  %1353 = vmatpush1.msra.mxu0 %v276
  %1354 = vmatprep.subr.mxu0 0.0
  %1355 = vmatpush1.msra.mxu0 0.0
  %1356 = vmatprep.subr.mxu0 0.0
  %1357 = vmatpush1.msra.mxu0 0.0
  %1358 = vmatprep.subr.mxu0 0.0
  %1359 = vmatpush1.msra.mxu0 0.0
  %1360 = vmatprep.subr.mxu0 0.0
  %1361 = vmatpush1.msra.mxu0 0.0
  %1362 = vmatprep.subr.mxu0 0.0
  %1363 = vmatpush1.msra.mxu0 0.0
  %1364 = vmatprep.subr.mxu0 0.0
  %1365 = vmatpush1.msra.mxu0 0.0
  %1366 = vmatprep.subr.mxu0 0.0
  %1367 = vmatpush1.msra.mxu0 0.0
  %1368 = vmatprep.subr.mxu0 0.0
  %1369 = vmatpush1.msra.mxu0 0.0
  %1370 = vmatprep.subr.mxu0 0.0
  %1371 = vmatpush1.msra.mxu0 0.0
  %1372 = vmatprep.subr.mxu0 0.0
  %1373 = vmatpush1.msra.mxu0 0.0
  %1374 = vmatprep.subr.mxu0 0.0
  %1375 = vmatpush1.msra.mxu0 0.0
  %1376 = vmatprep.subr.mxu0 0.0
  %1377 = vmatpush1.msra.mxu0 0.0
  %1378 = vmatprep.subr.mxu0 0.0
  %1379 = vmatpush1.msra.mxu0 0.0
  %1380 = vmatprep.subr.mxu0 0.0
  %1381 = vmatpush1.msra.mxu0 0.0
  %1382 = vmatprep.subr.mxu0 0.0
  %1383 = vmatpush1.msra.mxu0 0.0
  %1384 = vmatprep.subr.mxu0 0.0
  %1385 = vmatpush1.msra.mxu0 0.0
  %1386 = vmatprep.subr.mxu0 0.0
  %1387 = vmatpush1.msra.mxu0 0.0
  %1388 = vmatprep.subr.mxu0 0.0
  %1389 = vmatpush1.msra.mxu0 0.0
  %1390 = vmatprep.subr.mxu0 0.0
  %1391 = vmatpush1.msra.mxu0 0.0
  %1392 = vmatprep.subr.mxu0 0.0
  %1393 = vmatpush1.msra.mxu0 0.0
  %1394 = vmatprep.subr.mxu0 0.0
  %1395 = vmatpush1.msra.mxu0 0.0
  %1396 = vmatprep.subr.mxu0 0.0
  %1397 = vmatpush1.msra.mxu0 0.0
  %1398 = vmatprep.subr.mxu0 0.0
  %1399 = vmatpush1.msra.mxu0 0.0
  %1400 = vmatprep.subr.mxu0 0.0
  %1401 = vmatpush1.msra.mxu0 0.0
  %1402 = vmatprep.subr.mxu0 0.0
  %1403 = vmatpush1.msra.mxu0 0.0
  %1404 = vmatprep.subr.mxu0 0.0
  %1405 = vmatpush1.msra.mxu0 0.0
  %1406 = vmatprep.subr.mxu0 0.0
  %1407 = vmatpush1.msra.mxu0 0.0
  %1408 = vmatprep.subr.mxu0 0.0
  %1409 = vmatpush1.msra.mxu0 0.0
  %1410 = vmatprep.subr.mxu0 0.0
  %1411 = vmatpush1.msra.mxu0 0.0
  %1412 = vmatprep.subr.mxu0 0.0
  %1413 = vmatpush1.msra.mxu0 0.0
  %1414 = vmatprep.subr.mxu0 0.0
  %1415 = vmatpush1.msra.mxu0 0.0
  %1416 = vmatprep.mubr.f32.mxu0 0.0
  %1417 = vmatmul.mubr.f32.gmra.mrb[0].mxu0 %v372
  %v1418 = vpop.f32.mrb[0].mxu0
  %v1419 = vadd.f32 0.0, %v1418
  %v1420 = vpop.f32.mrb[0].mxu0
  %1421 = vmatprep.mubr.f32.mxu0 0.0
  %1422 = vmatmul.mubr.f32.gmra.mrb[0].mxu0 %v375
  %v1423 = vpop.f32.mrb[0].mxu0
  %v1424 = vadd.f32 0.0, %v1423
  %v1425 = vpop.f32.mrb[0].mxu0
  %1426 = vdwg.mxu0
  %1427 = vmatprep.subr.mxu0 0.0
  %1428 = vmatpush1.msra.mxu0 %v281
  %1429 = vmatprep.subr.mxu0 0.0
  %1430 = vmatpush1.msra.mxu0 0.0
  %1431 = vmatprep.subr.mxu0 0.0
  %1432 = vmatpush1.msra.mxu0 0.0
  %1433 = vmatprep.subr.mxu0 0.0
  %1434 = vmatpush1.msra.mxu0 0.0
  %1435 = vmatprep.subr.mxu0 0.0
  %1436 = vmatpush1.msra.mxu0 0.0
  %1437 = vmatprep.subr.mxu0 0.0
  %1438 = vmatpush1.msra.mxu0 0.0
  %1439 = vmatprep.subr.mxu0 0.0
  %1440 = vmatpush1.msra.mxu0 0.0
  %1441 = vmatprep.subr.mxu0 0.0
  %1442 = vmatpush1.msra.mxu0 0.0
  %1443 = vmatprep.subr.mxu0 0.0
  %1444 = vmatpush1.msra.mxu0 0.0
  %1445 = vmatprep.subr.mxu0 0.0
  %1446 = vmatpush1.msra.mxu0 0.0
  %1447 = vmatprep.subr.mxu0 0.0
  %1448 = vmatpush1.msra.mxu0 0.0
  %1449 = vmatprep.subr.mxu0 0.0
  %1450 = vmatpush1.msra.mxu0 0.0
  %1451 = vmatprep.subr.mxu0 0.0
  %1452 = vmatpush1.msra.mxu0 0.0
  %1453 = vmatprep.subr.mxu0 0.0
  %1454 = vmatpush1.msra.mxu0 0.0
  %1455 = vmatprep.subr.mxu0 0.0
  %1456 = vmatpush1.msra.mxu0 0.0
  %1457 = vmatprep.subr.mxu0 0.0
  %1458 = vmatpush1.msra.mxu0 0.0
  %1459 = vmatprep.subr.mxu0 0.0
  %1460 = vmatpush1.msra.mxu0 0.0
  %1461 = vmatprep.subr.mxu0 0.0
  %1462 = vmatpush1.msra.mxu0 0.0
  %1463 = vmatprep.subr.mxu0 0.0
  %1464 = vmatpush1.msra.mxu0 0.0
  %1465 = vmatprep.subr.mxu0 0.0
  %1466 = vmatpush1.msra.mxu0 0.0
  %1467 = vmatprep.subr.mxu0 0.0
  %1468 = vmatpush1.msra.mxu0 0.0
  %1469 = vmatprep.subr.mxu0 0.0
  %1470 = vmatpush1.msra.mxu0 0.0
  %1471 = vmatprep.subr.mxu0 0.0
  %1472 = vmatpush1.msra.mxu0 0.0
  %1473 = vmatprep.subr.mxu0 0.0
  %1474 = vmatpush1.msra.mxu0 0.0
  %1475 = vmatprep.subr.mxu0 0.0
  %1476 = vmatpush1.msra.mxu0 0.0
  %1477 = vmatprep.subr.mxu0 0.0
  %1478 = vmatpush1.msra.mxu0 0.0
  %1479 = vmatprep.subr.mxu0 0.0
  %1480 = vmatpush1.msra.mxu0 0.0
  %1481 = vmatprep.subr.mxu0 0.0
  %1482 = vmatpush1.msra.mxu0 0.0
  %1483 = vmatprep.subr.mxu0 0.0
  %1484 = vmatpush1.msra.mxu0 0.0
  %1485 = vmatprep.subr.mxu0 0.0
  %1486 = vmatpush1.msra.mxu0 0.0
  %1487 = vmatprep.subr.mxu0 0.0
  %1488 = vmatpush1.msra.mxu0 0.0
  %1489 = vmatprep.subr.mxu0 0.0
  %1490 = vmatpush1.msra.mxu0 0.0
  %1491 = vmatprep.mubr.f32.mxu0 0.0
  %1492 = vmatmul.mubr.f32.gmra.mrb[0].mxu0 %v372
  %v1493 = vpop.f32.mrb[0].mxu0
  %v1494 = vadd.f32 0.0, %v1493
  %v1495 = vpop.f32.mrb[0].mxu0
  %1496 = vmatprep.mubr.f32.mxu0 0.0
  %1497 = vmatmul.mubr.f32.gmra.mrb[0].mxu0 %v375
  %v1498 = vpop.f32.mrb[0].mxu0
  %v1499 = vadd.f32 0.0, %v1498
  %v1500 = vpop.f32.mrb[0].mxu0
  %1501 = vdwg.mxu0
  %1502 = vmatprep.subr.mxu0 0.0
  %1503 = vmatpush1.msra.mxu0 %v286
  %1504 = vmatprep.subr.mxu0 0.0
  %1505 = vmatpush1.msra.mxu0 0.0
  %1506 = vmatprep.subr.mxu0 0.0
  %1507 = vmatpush1.msra.mxu0 0.0
  %1508 = vmatprep.subr.mxu0 0.0
  %1509 = vmatpush1.msra.mxu0 0.0
  %1510 = vmatprep.subr.mxu0 0.0
  %1511 = vmatpush1.msra.mxu0 0.0
  %1512 = vmatprep.subr.mxu0 0.0
  %1513 = vmatpush1.msra.mxu0 0.0
  %1514 = vmatprep.subr.mxu0 0.0
  %1515 = vmatpush1.msra.mxu0 0.0
  %1516 = vmatprep.subr.mxu0 0.0
  %1517 = vmatpush1.msra.mxu0 0.0
  %1518 = vmatprep.subr.mxu0 0.0
  %1519 = vmatpush1.msra.mxu0 0.0
  %1520 = vmatprep.subr.mxu0 0.0
  %1521 = vmatpush1.msra.mxu0 0.0
  %1522 = vmatprep.subr.mxu0 0.0
  %1523 = vmatpush1.msra.mxu0 0.0
  %1524 = vmatprep.subr.mxu0 0.0
  %1525 = vmatpush1.msra.mxu0 0.0
  %1526 = vmatprep.subr.mxu0 0.0
  %1527 = vmatpush1.msra.mxu0 0.0
  %1528 = vmatprep.subr.mxu0 0.0
  %1529 = vmatpush1.msra.mxu0 0.0
  %1530 = vmatprep.subr.mxu0 0.0
  %1531 = vmatpush1.msra.mxu0 0.0
  %1532 = vmatprep.subr.mxu0 0.0
  %1533 = vmatpush1.msra.mxu0 0.0
  %1534 = vmatprep.subr.mxu0 0.0
  %1535 = vmatpush1.msra.mxu0 0.0
  %1536 = vmatprep.subr.mxu0 0.0
  %1537 = vmatpush1.msra.mxu0 0.0
  %1538 = vmatprep.subr.mxu0 0.0
  %1539 = vmatpush1.msra.mxu0 0.0
  %1540 = vmatprep.subr.mxu0 0.0
  %1541 = vmatpush1.msra.mxu0 0.0
  %1542 = vmatprep.subr.mxu0 0.0
  %1543 = vmatpush1.msra.mxu0 0.0
  %1544 = vmatprep.subr.mxu0 0.0
  %1545 = vmatpush1.msra.mxu0 0.0
  %1546 = vmatprep.subr.mxu0 0.0
  %1547 = vmatpush1.msra.mxu0 0.0
  %1548 = vmatprep.subr.mxu0 0.0
  %1549 = vmatpush1.msra.mxu0 0.0
  %1550 = vmatprep.subr.mxu0 0.0
  %1551 = vmatpush1.msra.mxu0 0.0
  %1552 = vmatprep.subr.mxu0 0.0
  %1553 = vmatpush1.msra.mxu0 0.0
  %1554 = vmatprep.subr.mxu0 0.0
  %1555 = vmatpush1.msra.mxu0 0.0
  %1556 = vmatprep.subr.mxu0 0.0
  %1557 = vmatpush1.msra.mxu0 0.0
  %1558 = vmatprep.subr.mxu0 0.0
  %1559 = vmatpush1.msra.mxu0 0.0
  %1560 = vmatprep.subr.mxu0 0.0
  %1561 = vmatpush1.msra.mxu0 0.0
  %1562 = vmatprep.subr.mxu0 0.0
  %1563 = vmatpush1.msra.mxu0 0.0
  %1564 = vmatprep.subr.mxu0 0.0
  %1565 = vmatpush1.msra.mxu0 0.0
  %1566 = vmatprep.mubr.f32.mxu0 0.0
  %1567 = vmatmul.mubr.f32.gmra.mrb[0].mxu0 %v372
  %v1568 = vpop.f32.mrb[0].mxu0
  %v1569 = vadd.f32 0.0, %v1568
  %v1570 = vpop.f32.mrb[0].mxu0
  %1571 = vmatprep.mubr.f32.mxu0 0.0
  %1572 = vmatmul.mubr.f32.gmra.mrb[0].mxu0 %v375
  %v1573 = vpop.f32.mrb[0].mxu0
  %v1574 = vadd.f32 0.0, %v1573
  %v1575 = vpop.f32.mrb[0].mxu0
  %1576 = vdwg.mxu0
  %1577 = vmatprep.subr.mxu0 0.0
  %1578 = vmatpush1.msra.mxu0 %v291
  %1579 = vmatprep.subr.mxu0 0.0
  %1580 = vmatpush1.msra.mxu0 0.0
  %1581 = vmatprep.subr.mxu0 0.0
  %1582 = vmatpush1.msra.mxu0 0.0
  %1583 = vmatprep.subr.mxu0 0.0
  %1584 = vmatpush1.msra.mxu0 0.0
  %1585 = vmatprep.subr.mxu0 0.0
  %1586 = vmatpush1.msra.mxu0 0.0
  %1587 = vmatprep.subr.mxu0 0.0
  %1588 = vmatpush1.msra.mxu0 0.0
  %1589 = vmatprep.subr.mxu0 0.0
  %1590 = vmatpush1.msra.mxu0 0.0
  %1591 = vmatprep.subr.mxu0 0.0
  %1592 = vmatpush1.msra.mxu0 0.0
  %1593 = vmatprep.subr.mxu0 0.0
  %1594 = vmatpush1.msra.mxu0 0.0
  %1595 = vmatprep.subr.mxu0 0.0
  %1596 = vmatpush1.msra.mxu0 0.0
  %1597 = vmatprep.subr.mxu0 0.0
  %1598 = vmatpush1.msra.mxu0 0.0
  %1599 = vmatprep.subr.mxu0 0.0
  %1600 = vmatpush1.msra.mxu0 0.0
  %1601 = vmatprep.subr.mxu0 0.0
  %1602 = vmatpush1.msra.mxu0 0.0
  %1603 = vmatprep.subr.mxu0 0.0
  %1604 = vmatpush1.msra.mxu0 0.0
  %1605 = vmatprep.subr.mxu0 0.0
  %1606 = vmatpush1.msra.mxu0 0.0
  %1607 = vmatprep.subr.mxu0 0.0
  %1608 = vmatpush1.msra.mxu0 0.0
  %1609 = vmatprep.subr.mxu0 0.0
  %1610 = vmatpush1.msra.mxu0 0.0
  %1611 = vmatprep.subr.mxu0 0.0
  %1612 = vmatpush1.msra.mxu0 0.0
  %1613 = vmatprep.subr.mxu0 0.0
  %1614 = vmatpush1.msra.mxu0 0.0
  %1615 = vmatprep.subr.mxu0 0.0
  %1616 = vmatpush1.msra.mxu0 0.0
  %1617 = vmatprep.subr.mxu0 0.0
  %1618 = vmatpush1.msra.mxu0 0.0
  %1619 = vmatprep.subr.mxu0 0.0
  %1620 = vmatpush1.msra.mxu0 0.0
  %1621 = vmatprep.subr.mxu0 0.0
  %1622 = vmatpush1.msra.mxu0 0.0
  %1623 = vmatprep.subr.mxu0 0.0
  %1624 = vmatpush1.msra.mxu0 0.0
  %1625 = vmatprep.subr.mxu0 0.0
  %1626 = vmatpush1.msra.mxu0 0.0
  %1627 = vmatprep.subr.mxu0 0.0
  %1628 = vmatpush1.msra.mxu0 0.0
  %1629 = vmatprep.subr.mxu0 0.0
  %1630 = vmatpush1.msra.mxu0 0.0
  %1631 = vmatprep.subr.mxu0 0.0
  %1632 = vmatpush1.msra.mxu0 0.0
  %1633 = vmatprep.subr.mxu0 0.0
  %1634 = vmatpush1.msra.mxu0 0.0
  %1635 = vmatprep.subr.mxu0 0.0
  %1636 = vmatpush1.msra.mxu0 0.0
  %1637 = vmatprep.subr.mxu0 0.0
  %1638 = vmatpush1.msra.mxu0 0.0
  %1639 = vmatprep.subr.mxu0 0.0
  %1640 = vmatpush1.msra.mxu0 0.0
  %1641 = vmatprep.mubr.f32.mxu0 0.0
  %1642 = vmatmul.mubr.f32.gmra.mrb[0].mxu0 %v372
  %v1643 = vpop.f32.mrb[0].mxu0
  %v1644 = vadd.f32 0.0, %v1643
  %v1645 = vpop.f32.mrb[0].mxu0
  %1646 = vmatprep.mubr.f32.mxu0 0.0
  %1647 = vmatmul.mubr.f32.gmra.mrb[0].mxu0 %v375
  %v1648 = vpop.f32.mrb[0].mxu0
  %v1649 = vadd.f32 0.0, %v1648
  %v1650 = vpop.f32.mrb[0].mxu0
  %1651 = vdwg.mxu0
  %1652 = vmatprep.subr.mxu0 0.0
  %1653 = vmatpush1.msra.mxu0 %v296
  %1654 = vmatprep.subr.mxu0 0.0
  %1655 = vmatpush1.msra.mxu0 0.0
  %1656 = vmatprep.subr.mxu0 0.0
  %1657 = vmatpush1.msra.mxu0 0.0
  %1658 = vmatprep.subr.mxu0 0.0
  %1659 = vmatpush1.msra.mxu0 0.0
  %1660 = vmatprep.subr.mxu0 0.0
  %1661 = vmatpush1.msra.mxu0 0.0
  %1662 = vmatprep.subr.mxu0 0.0
  %1663 = vmatpush1.msra.mxu0 0.0
  %1664 = vmatprep.subr.mxu0 0.0
  %1665 = vmatpush1.msra.mxu0 0.0
  %1666 = vmatprep.subr.mxu0 0.0
  %1667 = vmatpush1.msra.mxu0 0.0
  %1668 = vmatprep.subr.mxu0 0.0
  %1669 = vmatpush1.msra.mxu0 0.0
  %1670 = vmatprep.subr.mxu0 0.0
  %1671 = vmatpush1.msra.mxu0 0.0
  %1672 = vmatprep.subr.mxu0 0.0
  %1673 = vmatpush1.msra.mxu0 0.0
  %1674 = vmatprep.subr.mxu0 0.0
  %1675 = vmatpush1.msra.mxu0 0.0
  %1676 = vmatprep.subr.mxu0 0.0
  %1677 = vmatpush1.msra.mxu0 0.0
  %1678 = vmatprep.subr.mxu0 0.0
  %1679 = vmatpush1.msra.mxu0 0.0
  %1680 = vmatprep.subr.mxu0 0.0
  %1681 = vmatpush1.msra.mxu0 0.0
  %1682 = vmatprep.subr.mxu0 0.0
  %1683 = vmatpush1.msra.mxu0 0.0
  %1684 = vmatprep.subr.mxu0 0.0
  %1685 = vmatpush1.msra.mxu0 0.0
  %1686 = vmatprep.subr.mxu0 0.0
  %1687 = vmatpush1.msra.mxu0 0.0
  %1688 = vmatprep.subr.mxu0 0.0
  %1689 = vmatpush1.msra.mxu0 0.0
  %1690 = vmatprep.subr.mxu0 0.0
  %1691 = vmatpush1.msra.mxu0 0.0
  %1692 = vmatprep.subr.mxu0 0.0
  %1693 = vmatpush1.msra.mxu0 0.0
  %1694 = vmatprep.subr.mxu0 0.0
  %1695 = vmatpush1.msra.mxu0 0.0
  %1696 = vmatprep.subr.mxu0 0.0
  %1697 = vmatpush1.msra.mxu0 0.0
  %1698 = vmatprep.subr.mxu0 0.0
  %1699 = vmatpush1.msra.mxu0 0.0
  %1700 = vmatprep.subr.mxu0 0.0
  %1701 = vmatpush1.msra.mxu0 0.0
  %1702 = vmatprep.subr.mxu0 0.0
  %1703 = vmatpush1.msra.mxu0 0.0
  %1704 = vmatprep.subr.mxu0 0.0
  %1705 = vmatpush1.msra.mxu0 0.0
  %1706 = vmatprep.subr.mxu0 0.0
  %1707 = vmatpush1.msra.mxu0 0.0
  %1708 = vmatprep.subr.mxu0 0.0
  %1709 = vmatpush1.msra.mxu0 0.0
  %1710 = vmatprep.subr.mxu0 0.0
  %1711 = vmatpush1.msra.mxu0 0.0
  %1712 = vmatprep.subr.mxu0 0.0
  %1713 = vmatpush1.msra.mxu0 0.0
  %1714 = vmatprep.subr.mxu0 0.0
  %1715 = vmatpush1.msra.mxu0 0.0
  %1716 = vmatprep.mubr.f32.mxu0 0.0
  %1717 = vmatmul.mubr.f32.gmra.mrb[0].mxu0 %v372
  %v1718 = vpop.f32.mrb[0].mxu0
  %v1719 = vadd.f32 0.0, %v1718
  %v1720 = vpop.f32.mrb[0].mxu0
  %1721 = vmatprep.mubr.f32.mxu0 0.0
  %1722 = vmatmul.mubr.f32.gmra.mrb[0].mxu0 %v375
  %v1723 = vpop.f32.mrb[0].mxu0
  %v1724 = vadd.f32 0.0, %v1723
  %v1725 = vpop.f32.mrb[0].mxu0
  %1726 = vdwg.mxu0
  %1727 = vmatprep.subr.mxu0 0.0
  %1728 = vmatpush1.msra.mxu0 %v301
  %1729 = vmatprep.subr.mxu0 0.0
  %1730 = vmatpush1.msra.mxu0 0.0
  %1731 = vmatprep.subr.mxu0 0.0
  %1732 = vmatpush1.msra.mxu0 0.0
  %1733 = vmatprep.subr.mxu0 0.0
  %1734 = vmatpush1.msra.mxu0 0.0
  %1735 = vmatprep.subr.mxu0 0.0
  %1736 = vmatpush1.msra.mxu0 0.0
  %1737 = vmatprep.subr.mxu0 0.0
  %1738 = vmatpush1.msra.mxu0 0.0
  %1739 = vmatprep.subr.mxu0 0.0
  %1740 = vmatpush1.msra.mxu0 0.0
  %1741 = vmatprep.subr.mxu0 0.0
  %1742 = vmatpush1.msra.mxu0 0.0
  %1743 = vmatprep.subr.mxu0 0.0
  %1744 = vmatpush1.msra.mxu0 0.0
  %1745 = vmatprep.subr.mxu0 0.0
  %1746 = vmatpush1.msra.mxu0 0.0
  %1747 = vmatprep.subr.mxu0 0.0
  %1748 = vmatpush1.msra.mxu0 0.0
  %1749 = vmatprep.subr.mxu0 0.0
  %1750 = vmatpush1.msra.mxu0 0.0
  %1751 = vmatprep.subr.mxu0 0.0
  %1752 = vmatpush1.msra.mxu0 0.0
  %1753 = vmatprep.subr.mxu0 0.0
  %1754 = vmatpush1.msra.mxu0 0.0
  %1755 = vmatprep.subr.mxu0 0.0
  %1756 = vmatpush1.msra.mxu0 0.0
  %1757 = vmatprep.subr.mxu0 0.0
  %1758 = vmatpush1.msra.mxu0 0.0
  %1759 = vmatprep.subr.mxu0 0.0
  %1760 = vmatpush1.msra.mxu0 0.0
  %1761 = vmatprep.subr.mxu0 0.0
  %1762 = vmatpush1.msra.mxu0 0.0
  %1763 = vmatprep.subr.mxu0 0.0
  %1764 = vmatpush1.msra.mxu0 0.0
  %1765 = vmatprep.subr.mxu0 0.0
  %1766 = vmatpush1.msra.mxu0 0.0
  %1767 = vmatprep.subr.mxu0 0.0
  %1768 = vmatpush1.msra.mxu0 0.0
  %1769 = vmatprep.subr.mxu0 0.0
  %1770 = vmatpush1.msra.mxu0 0.0
  %1771 = vmatprep.subr.mxu0 0.0
  %1772 = vmatpush1.msra.mxu0 0.0
  %1773 = vmatprep.subr.mxu0 0.0
  %1774 = vmatpush1.msra.mxu0 0.0
  %1775 = vmatprep.subr.mxu0 0.0
  %1776 = vmatpush1.msra.mxu0 0.0
  %1777 = vmatprep.subr.mxu0 0.0
  %1778 = vmatpush1.msra.mxu0 0.0
  %1779 = vmatprep.subr.mxu0 0.0
  %1780 = vmatpush1.msra.mxu0 0.0
  %1781 = vmatprep.subr.mxu0 0.0
  %1782 = vmatpush1.msra.mxu0 0.0
  %1783 = vmatprep.subr.mxu0 0.0
  %1784 = vmatpush1.msra.mxu0 0.0
  %1785 = vmatprep.subr.mxu0 0.0
  %1786 = vmatpush1.msra.mxu0 0.0
  %1787 = vmatprep.subr.mxu0 0.0
  %1788 = vmatpush1.msra.mxu0 0.0
  %1789 = vmatprep.subr.mxu0 0.0
  %1790 = vmatpush1.msra.mxu0 0.0
  %1791 = vmatprep.mubr.f32.mxu0 0.0
  %1792 = vmatmul.mubr.f32.gmra.mrb[0].mxu0 %v372
  %v1793 = vpop.f32.mrb[0].mxu0
  %v1794 = vadd.f32 0.0, %v1793
  %v1795 = vpop.f32.mrb[0].mxu0
  %1796 = vmatprep.mubr.f32.mxu0 0.0
  %1797 = vmatmul.mubr.f32.gmra.mrb[0].mxu0 %v375
  %v1798 = vpop.f32.mrb[0].mxu0
  %v1799 = vadd.f32 0.0, %v1798
  %v1800 = vpop.f32.mrb[0].mxu0
  %1801 = vdwg.mxu0
  %1802 = vmatprep.subr.mxu0 0.0
  %1803 = vmatpush1.msra.mxu0 %v306
  %1804 = vmatprep.subr.mxu0 0.0
  %1805 = vmatpush1.msra.mxu0 0.0
  %1806 = vmatprep.subr.mxu0 0.0
  %1807 = vmatpush1.msra.mxu0 0.0
  %1808 = vmatprep.subr.mxu0 0.0
  %1809 = vmatpush1.msra.mxu0 0.0
  %1810 = vmatprep.subr.mxu0 0.0
  %1811 = vmatpush1.msra.mxu0 0.0
  %1812 = vmatprep.subr.mxu0 0.0
  %1813 = vmatpush1.msra.mxu0 0.0
  %1814 = vmatprep.subr.mxu0 0.0
  %1815 = vmatpush1.msra.mxu0 0.0
  %1816 = vmatprep.subr.mxu0 0.0
  %1817 = vmatpush1.msra.mxu0 0.0
  %1818 = vmatprep.subr.mxu0 0.0
  %1819 = vmatpush1.msra.mxu0 0.0
  %1820 = vmatprep.subr.mxu0 0.0
  %1821 = vmatpush1.msra.mxu0 0.0
  %1822 = vmatprep.subr.mxu0 0.0
  %1823 = vmatpush1.msra.mxu0 0.0
  %1824 = vmatprep.subr.mxu0 0.0
  %1825 = vmatpush1.msra.mxu0 0.0
  %1826 = vmatprep.subr.mxu0 0.0
  %1827 = vmatpush1.msra.mxu0 0.0
  %1828 = vmatprep.subr.mxu0 0.0
  %1829 = vmatpush1.msra.mxu0 0.0
  %1830 = vmatprep.subr.mxu0 0.0
  %1831 = vmatpush1.msra.mxu0 0.0
  %1832 = vmatprep.subr.mxu0 0.0
  %1833 = vmatpush1.msra.mxu0 0.0
  %1834 = vmatprep.subr.mxu0 0.0
  %1835 = vmatpush1.msra.mxu0 0.0
  %1836 = vmatprep.subr.mxu0 0.0
  %1837 = vmatpush1.msra.mxu0 0.0
  %1838 = vmatprep.subr.mxu0 0.0
  %1839 = vmatpush1.msra.mxu0 0.0
  %1840 = vmatprep.subr.mxu0 0.0
  %1841 = vmatpush1.msra.mxu0 0.0
  %1842 = vmatprep.subr.mxu0 0.0
  %1843 = vmatpush1.msra.mxu0 0.0
  %1844 = vmatprep.subr.mxu0 0.0
  %1845 = vmatpush1.msra.mxu0 0.0
  %1846 = vmatprep.subr.mxu0 0.0
  %1847 = vmatpush1.msra.mxu0 0.0
  %1848 = vmatprep.subr.mxu0 0.0
  %1849 = vmatpush1.msra.mxu0 0.0
  %1850 = vmatprep.subr.mxu0 0.0
  %1851 = vmatpush1.msra.mxu0 0.0
  %1852 = vmatprep.subr.mxu0 0.0
  %1853 = vmatpush1.msra.mxu0 0.0
  %1854 = vmatprep.subr.mxu0 0.0
  %1855 = vmatpush1.msra.mxu0 0.0
  %1856 = vmatprep.subr.mxu0 0.0
  %1857 = vmatpush1.msra.mxu0 0.0
  %1858 = vmatprep.subr.mxu0 0.0
  %1859 = vmatpush1.msra.mxu0 0.0
  %1860 = vmatprep.subr.mxu0 0.0
  %1861 = vmatpush1.msra.mxu0 0.0
  %1862 = vmatprep.subr.mxu0 0.0
  %1863 = vmatpush1.msra.mxu0 0.0
  %1864 = vmatprep.subr.mxu0 0.0
  %1865 = vmatpush1.msra.mxu0 0.0
  %1866 = vmatprep.mubr.f32.mxu0 0.0
  %1867 = vmatmul.mubr.f32.gmra.mrb[0].mxu0 %v372
  %v1868 = vpop.f32.mrb[0].mxu0
  %v1869 = vadd.f32 0.0, %v1868
  %v1870 = vpop.f32.mrb[0].mxu0
  %1871 = vmatprep.mubr.f32.mxu0 0.0
  %1872 = vmatmul.mubr.f32.gmra.mrb[0].mxu0 %v375
  %v1873 = vpop.f32.mrb[0].mxu0
  %v1874 = vadd.f32 0.0, %v1873
  %v1875 = vpop.f32.mrb[0].mxu0
  %1876 = vdwg.mxu0
  %1877 = vmatprep.subr.mxu0 0.0
  %1878 = vmatpush1.msra.mxu0 %v311
  %1879 = vmatprep.subr.mxu0 0.0
  %1880 = vmatpush1.msra.mxu0 0.0
  %1881 = vmatprep.subr.mxu0 0.0
  %1882 = vmatpush1.msra.mxu0 0.0
  %1883 = vmatprep.subr.mxu0 0.0
  %1884 = vmatpush1.msra.mxu0 0.0
  %1885 = vmatprep.subr.mxu0 0.0
  %1886 = vmatpush1.msra.mxu0 0.0
  %1887 = vmatprep.subr.mxu0 0.0
  %1888 = vmatpush1.msra.mxu0 0.0
  %1889 = vmatprep.subr.mxu0 0.0
  %1890 = vmatpush1.msra.mxu0 0.0
  %1891 = vmatprep.subr.mxu0 0.0
  %1892 = vmatpush1.msra.mxu0 0.0
  %1893 = vmatprep.subr.mxu0 0.0
  %1894 = vmatpush1.msra.mxu0 0.0
  %1895 = vmatprep.subr.mxu0 0.0
  %1896 = vmatpush1.msra.mxu0 0.0
  %1897 = vmatprep.subr.mxu0 0.0
  %1898 = vmatpush1.msra.mxu0 0.0
  %1899 = vmatprep.subr.mxu0 0.0
  %1900 = vmatpush1.msra.mxu0 0.0
  %1901 = vmatprep.subr.mxu0 0.0
  %1902 = vmatpush1.msra.mxu0 0.0
  %1903 = vmatprep.subr.mxu0 0.0
  %1904 = vmatpush1.msra.mxu0 0.0
  %1905 = vmatprep.subr.mxu0 0.0
  %1906 = vmatpush1.msra.mxu0 0.0
  %1907 = vmatprep.subr.mxu0 0.0
  %1908 = vmatpush1.msra.mxu0 0.0
  %1909 = vmatprep.subr.mxu0 0.0
  %1910 = vmatpush1.msra.mxu0 0.0
  %1911 = vmatprep.subr.mxu0 0.0
  %1912 = vmatpush1.msra.mxu0 0.0
  %1913 = vmatprep.subr.mxu0 0.0
  %1914 = vmatpush1.msra.mxu0 0.0
  %1915 = vmatprep.subr.mxu0 0.0
  %1916 = vmatpush1.msra.mxu0 0.0
  %1917 = vmatprep.subr.mxu0 0.0
  %1918 = vmatpush1.msra.mxu0 0.0
  %1919 = vmatprep.subr.mxu0 0.0
  %1920 = vmatpush1.msra.mxu0 0.0
  %1921 = vmatprep.subr.mxu0 0.0
  %1922 = vmatpush1.msra.mxu0 0.0
  %1923 = vmatprep.subr.mxu0 0.0
  %1924 = vmatpush1.msra.mxu0 0.0
  %1925 = vmatprep.subr.mxu0 0.0
  %1926 = vmatpush1.msra.mxu0 0.0
  %1927 = vmatprep.subr.mxu0 0.0
  %1928 = vmatpush1.msra.mxu0 0.0
  %1929 = vmatprep.subr.mxu0 0.0
  %1930 = vmatpush1.msra.mxu0 0.0
  %1931 = vmatprep.subr.mxu0 0.0
  %1932 = vmatpush1.msra.mxu0 0.0
  %1933 = vmatprep.subr.mxu0 0.0
  %1934 = vmatpush1.msra.mxu0 0.0
  %1935 = vmatprep.subr.mxu0 0.0
  %1936 = vmatpush1.msra.mxu0 0.0
  %1937 = vmatprep.subr.mxu0 0.0
  %1938 = vmatpush1.msra.mxu0 0.0
  %1939 = vmatprep.subr.mxu0 0.0
  %1940 = vmatpush1.msra.mxu0 0.0
  %1941 = vmatprep.mubr.f32.mxu0 0.0
  %1942 = vmatmul.mubr.f32.gmra.mrb[0].mxu0 %v372
  %v1943 = vpop.f32.mrb[0].mxu0
  %v1944 = vadd.f32 0.0, %v1943
  %v1945 = vpop.f32.mrb[0].mxu0
  %1946 = vmatprep.mubr.f32.mxu0 0.0
  %1947 = vmatmul.mubr.f32.gmra.mrb[0].mxu0 %v375
  %v1948 = vpop.f32.mrb[0].mxu0
  %v1949 = vadd.f32 0.0, %v1948
  %v1950 = vpop.f32.mrb[0].mxu0
  %1951 = vdwg.mxu0
  %1952 = vmatprep.subr.mxu0 0.0
  %1953 = vmatpush1.msra.mxu0 %v316
  %1954 = vmatprep.subr.mxu0 0.0
  %1955 = vmatpush1.msra.mxu0 0.0
  %1956 = vmatprep.subr.mxu0 0.0
  %1957 = vmatpush1.msra.mxu0 0.0
  %1958 = vmatprep.subr.mxu0 0.0
  %1959 = vmatpush1.msra.mxu0 0.0
  %1960 = vmatprep.subr.mxu0 0.0
  %1961 = vmatpush1.msra.mxu0 0.0
  %1962 = vmatprep.subr.mxu0 0.0
  %1963 = vmatpush1.msra.mxu0 0.0
  %1964 = vmatprep.subr.mxu0 0.0
  %1965 = vmatpush1.msra.mxu0 0.0
  %1966 = vmatprep.subr.mxu0 0.0
  %1967 = vmatpush1.msra.mxu0 0.0
  %1968 = vmatprep.subr.mxu0 0.0
  %1969 = vmatpush1.msra.mxu0 0.0
  %1970 = vmatprep.subr.mxu0 0.0
  %1971 = vmatpush1.msra.mxu0 0.0
  %1972 = vmatprep.subr.mxu0 0.0
  %1973 = vmatpush1.msra.mxu0 0.0
  %1974 = vmatprep.subr.mxu0 0.0
  %1975 = vmatpush1.msra.mxu0 0.0
  %1976 = vmatprep.subr.mxu0 0.0
  %1977 = vmatpush1.msra.mxu0 0.0
  %1978 = vmatprep.subr.mxu0 0.0
  %1979 = vmatpush1.msra.mxu0 0.0
  %1980 = vmatprep.subr.mxu0 0.0
  %1981 = vmatpush1.msra.mxu0 0.0
  %1982 = vmatprep.subr.mxu0 0.0
  %1983 = vmatpush1.msra.mxu0 0.0
  %1984 = vmatprep.subr.mxu0 0.0
  %1985 = vmatpush1.msra.mxu0 0.0
  %1986 = vmatprep.subr.mxu0 0.0
  %1987 = vmatpush1.msra.mxu0 0.0
  %1988 = vmatprep.subr.mxu0 0.0
  %1989 = vmatpush1.msra.mxu0 0.0
  %1990 = vmatprep.subr.mxu0 0.0
  %1991 = vmatpush1.msra.mxu0 0.0
  %1992 = vmatprep.subr.mxu0 0.0
  %1993 = vmatpush1.msra.mxu0 0.0
  %1994 = vmatprep.subr.mxu0 0.0
  %1995 = vmatpush1.msra.mxu0 0.0
  %1996 = vmatprep.subr.mxu0 0.0
  %1997 = vmatpush1.msra.mxu0 0.0
  %1998 = vmatprep.subr.mxu0 0.0
  %1999 = vmatpush1.msra.mxu0 0.0
  %2000 = vmatprep.subr.mxu0 0.0
  %2001 = vmatpush1.msra.mxu0 0.0
  %2002 = vmatprep.subr.mxu0 0.0
  %2003 = vmatpush1.msra.mxu0 0.0
  %2004 = vmatprep.subr.mxu0 0.0
  %2005 = vmatpush1.msra.mxu0 0.0
  %2006 = vmatprep.subr.mxu0 0.0
  %2007 = vmatpush1.msra.mxu0 0.0
  %2008 = vmatprep.subr.mxu0 0.0
  %2009 = vmatpush1.msra.mxu0 0.0
  %2010 = vmatprep.subr.mxu0 0.0
  %2011 = vmatpush1.msra.mxu0 0.0
  %2012 = vmatprep.subr.mxu0 0.0
  %2013 = vmatpush1.msra.mxu0 0.0
  %2014 = vmatprep.subr.mxu0 0.0
  %2015 = vmatpush1.msra.mxu0 0.0
  %2016 = vmatprep.mubr.f32.mxu0 0.0
  %2017 = vmatmul.mubr.f32.gmra.mrb[0].mxu0 %v372
  %v2018 = vpop.f32.mrb[0].mxu0
  %v2019 = vadd.f32 0.0, %v2018
  %v2020 = vpop.f32.mrb[0].mxu0
  %2021 = vmatprep.mubr.f32.mxu0 0.0
  %2022 = vmatmul.mubr.f32.gmra.mrb[0].mxu0 %v375
  %v2023 = vpop.f32.mrb[0].mxu0
  %v2024 = vadd.f32 0.0, %v2023
  %v2025 = vpop.f32.mrb[0].mxu0
  %2026 = vdwg.mxu0
  %2027 = vmatprep.subr.mxu0 0.0
  %2028 = vmatpush1.msra.mxu0 %v321
  %2029 = vmatprep.subr.mxu0 0.0
  %2030 = vmatpush1.msra.mxu0 0.0
  %2031 = vmatprep.subr.mxu0 0.0
  %2032 = vmatpush1.msra.mxu0 0.0
  %2033 = vmatprep.subr.mxu0 0.0
  %2034 = vmatpush1.msra.mxu0 0.0
  %2035 = vmatprep.subr.mxu0 0.0
  %2036 = vmatpush1.msra.mxu0 0.0
  %2037 = vmatprep.subr.mxu0 0.0
  %2038 = vmatpush1.msra.mxu0 0.0
  %2039 = vmatprep.subr.mxu0 0.0
  %2040 = vmatpush1.msra.mxu0 0.0
  %2041 = vmatprep.subr.mxu0 0.0
  %2042 = vmatpush1.msra.mxu0 0.0
  %2043 = vmatprep.subr.mxu0 0.0
  %2044 = vmatpush1.msra.mxu0 0.0
  %2045 = vmatprep.subr.mxu0 0.0
  %2046 = vmatpush1.msra.mxu0 0.0
  %2047 = vmatprep.subr.mxu0 0.0
  %2048 = vmatpush1.msra.mxu0 0.0
  %2049 = vmatprep.subr.mxu0 0.0
  %2050 = vmatpush1.msra.mxu0 0.0
  %2051 = vmatprep.subr.mxu0 0.0
  %2052 = vmatpush1.msra.mxu0 0.0
  %2053 = vmatprep.subr.mxu0 0.0
  %2054 = vmatpush1.msra.mxu0 0.0
  %2055 = vmatprep.subr.mxu0 0.0
  %2056 = vmatpush1.msra.mxu0 0.0
  %2057 = vmatprep.subr.mxu0 0.0
  %2058 = vmatpush1.msra.mxu0 0.0
  %2059 = vmatprep.subr.mxu0 0.0
  %2060 = vmatpush1.msra.mxu0 0.0
  %2061 = vmatprep.subr.mxu0 0.0
  %2062 = vmatpush1.msra.mxu0 0.0
  %2063 = vmatprep.subr.mxu0 0.0
  %2064 = vmatpush1.msra.mxu0 0.0
  %2065 = vmatprep.subr.mxu0 0.0
  %2066 = vmatpush1.msra.mxu0 0.0
  %2067 = vmatprep.subr.mxu0 0.0
  %2068 = vmatpush1.msra.mxu0 0.0
  %2069 = vmatprep.subr.mxu0 0.0
  %2070 = vmatpush1.msra.mxu0 0.0
  %2071 = vmatprep.subr.mxu0 0.0
  %2072 = vmatpush1.msra.mxu0 0.0
  %2073 = vmatprep.subr.mxu0 0.0
  %2074 = vmatpush1.msra.mxu0 0.0
  %2075 = vmatprep.subr.mxu0 0.0
  %2076 = vmatpush1.msra.mxu0 0.0
  %2077 = vmatprep.subr.mxu0 0.0
  %2078 = vmatpush1.msra.mxu0 0.0
  %2079 = vmatprep.subr.mxu0 0.0
  %2080 = vmatpush1.msra.mxu0 0.0
  %2081 = vmatprep.subr.mxu0 0.0
  %2082 = vmatpush1.msra.mxu0 0.0
  %2083 = vmatprep.subr.mxu0 0.0
  %2084 = vmatpush1.msra.mxu0 0.0
  %2085 = vmatprep.subr.mxu0 0.0
  %2086 = vmatpush1.msra.mxu0 0.0
  %2087 = vmatprep.subr.mxu0 0.0
  %2088 = vmatpush1.msra.mxu0 0.0
  %2089 = vmatprep.subr.mxu0 0.0
  %2090 = vmatpush1.msra.mxu0 0.0
  %2091 = vmatprep.mubr.f32.mxu0 0.0
  %2092 = vmatmul.mubr.f32.gmra.mrb[0].mxu0 %v372
  %v2093 = vpop.f32.mrb[0].mxu0
  %v2094 = vadd.f32 0.0, %v2093
  %v2095 = vpop.f32.mrb[0].mxu0
  %2096 = vmatprep.mubr.f32.mxu0 0.0
  %2097 = vmatmul.mubr.f32.gmra.mrb[0].mxu0 %v375
  %v2098 = vpop.f32.mrb[0].mxu0
  %v2099 = vadd.f32 0.0, %v2098
  %v2100 = vpop.f32.mrb[0].mxu0
  %2101 = vdwg.mxu0
  %2102 = vmatprep.subr.mxu0 0.0
  %2103 = vmatpush1.msra.mxu0 %v326
  %2104 = vmatprep.subr.mxu0 0.0
  %2105 = vmatpush1.msra.mxu0 0.0
  %2106 = vmatprep.subr.mxu0 0.0
  %2107 = vmatpush1.msra.mxu0 0.0
  %2108 = vmatprep.subr.mxu0 0.0
  %2109 = vmatpush1.msra.mxu0 0.0
  %2110 = vmatprep.subr.mxu0 0.0
  %2111 = vmatpush1.msra.mxu0 0.0
  %2112 = vmatprep.subr.mxu0 0.0
  %2113 = vmatpush1.msra.mxu0 0.0
  %2114 = vmatprep.subr.mxu0 0.0
  %2115 = vmatpush1.msra.mxu0 0.0
  %2116 = vmatprep.subr.mxu0 0.0
  %2117 = vmatpush1.msra.mxu0 0.0
  %2118 = vmatprep.subr.mxu0 0.0
  %2119 = vmatpush1.msra.mxu0 0.0
  %2120 = vmatprep.subr.mxu0 0.0
  %2121 = vmatpush1.msra.mxu0 0.0
  %2122 = vmatprep.subr.mxu0 0.0
  %2123 = vmatpush1.msra.mxu0 0.0
  %2124 = vmatprep.subr.mxu0 0.0
  %2125 = vmatpush1.msra.mxu0 0.0
  %2126 = vmatprep.subr.mxu0 0.0
  %2127 = vmatpush1.msra.mxu0 0.0
  %2128 = vmatprep.subr.mxu0 0.0
  %2129 = vmatpush1.msra.mxu0 0.0
  %2130 = vmatprep.subr.mxu0 0.0
  %2131 = vmatpush1.msra.mxu0 0.0
  %2132 = vmatprep.subr.mxu0 0.0
  %2133 = vmatpush1.msra.mxu0 0.0
  %2134 = vmatprep.subr.mxu0 0.0
  %2135 = vmatpush1.msra.mxu0 0.0
  %2136 = vmatprep.subr.mxu0 0.0
  %2137 = vmatpush1.msra.mxu0 0.0
  %2138 = vmatprep.subr.mxu0 0.0
  %2139 = vmatpush1.msra.mxu0 0.0
  %2140 = vmatprep.subr.mxu0 0.0
  %2141 = vmatpush1.msra.mxu0 0.0
  %2142 = vmatprep.subr.mxu0 0.0
  %2143 = vmatpush1.msra.mxu0 0.0
  %2144 = vmatprep.subr.mxu0 0.0
  %2145 = vmatpush1.msra.mxu0 0.0
  %2146 = vmatprep.subr.mxu0 0.0
  %2147 = vmatpush1.msra.mxu0 0.0
  %2148 = vmatprep.subr.mxu0 0.0
  %2149 = vmatpush1.msra.mxu0 0.0
  %2150 = vmatprep.subr.mxu0 0.0
  %2151 = vmatpush1.msra.mxu0 0.0
  %2152 = vmatprep.subr.mxu0 0.0
  %2153 = vmatpush1.msra.mxu0 0.0
  %2154 = vmatprep.subr.mxu0 0.0
  %2155 = vmatpush1.msra.mxu0 0.0
  %2156 = vmatprep.subr.mxu0 0.0
  %2157 = vmatpush1.msra.mxu0 0.0
  %2158 = vmatprep.subr.mxu0 0.0
  %2159 = vmatpush1.msra.mxu0 0.0
  %2160 = vmatprep.subr.mxu0 0.0
  %2161 = vmatpush1.msra.mxu0 0.0
  %2162 = vmatprep.subr.mxu0 0.0
  %2163 = vmatpush1.msra.mxu0 0.0
  %2164 = vmatprep.subr.mxu0 0.0
  %2165 = vmatpush1.msra.mxu0 0.0
  %2166 = vmatprep.mubr.f32.mxu0 0.0
  %2167 = vmatmul.mubr.f32.gmra.mrb[0].mxu0 %v372
  %v2168 = vpop.f32.mrb[0].mxu0
  %v2169 = vadd.f32 0.0, %v2168
  %v2170 = vpop.f32.mrb[0].mxu0
  %2171 = vmatprep.mubr.f32.mxu0 0.0
  %2172 = vmatmul.mubr.f32.gmra.mrb[0].mxu0 %v375
  %v2173 = vpop.f32.mrb[0].mxu0
  %v2174 = vadd.f32 0.0, %v2173
  %v2175 = vpop.f32.mrb[0].mxu0
  %2176 = vdwg.mxu0
  %2177 = vmatprep.subr.mxu0 0.0
  %2178 = vmatpush1.msra.mxu0 %v331
  %2179 = vmatprep.subr.mxu0 0.0
  %2180 = vmatpush1.msra.mxu0 0.0
  %2181 = vmatprep.subr.mxu0 0.0
  %2182 = vmatpush1.msra.mxu0 0.0
  %2183 = vmatprep.subr.mxu0 0.0
  %2184 = vmatpush1.msra.mxu0 0.0
  %2185 = vmatprep.subr.mxu0 0.0
  %2186 = vmatpush1.msra.mxu0 0.0
  %2187 = vmatprep.subr.mxu0 0.0
  %2188 = vmatpush1.msra.mxu0 0.0
  %2189 = vmatprep.subr.mxu0 0.0
  %2190 = vmatpush1.msra.mxu0 0.0
  %2191 = vmatprep.subr.mxu0 0.0
  %2192 = vmatpush1.msra.mxu0 0.0
  %2193 = vmatprep.subr.mxu0 0.0
  %2194 = vmatpush1.msra.mxu0 0.0
  %2195 = vmatprep.subr.mxu0 0.0
  %2196 = vmatpush1.msra.mxu0 0.0
  %2197 = vmatprep.subr.mxu0 0.0
  %2198 = vmatpush1.msra.mxu0 0.0
  %2199 = vmatprep.subr.mxu0 0.0
  %2200 = vmatpush1.msra.mxu0 0.0
  %2201 = vmatprep.subr.mxu0 0.0
  %2202 = vmatpush1.msra.mxu0 0.0
  %2203 = vmatprep.subr.mxu0 0.0
  %2204 = vmatpush1.msra.mxu0 0.0
  %2205 = vmatprep.subr.mxu0 0.0
  %2206 = vmatpush1.msra.mxu0 0.0
  %2207 = vmatprep.subr.mxu0 0.0
  %2208 = vmatpush1.msra.mxu0 0.0
  %2209 = vmatprep.subr.mxu0 0.0
  %2210 = vmatpush1.msra.mxu0 0.0
  %2211 = vmatprep.subr.mxu0 0.0
  %2212 = vmatpush1.msra.mxu0 0.0
  %2213 = vmatprep.subr.mxu0 0.0
  %2214 = vmatpush1.msra.mxu0 0.0
  %2215 = vmatprep.subr.mxu0 0.0
  %2216 = vmatpush1.msra.mxu0 0.0
  %2217 = vmatprep.subr.mxu0 0.0
  %2218 = vmatpush1.msra.mxu0 0.0
  %2219 = vmatprep.subr.mxu0 0.0
  %2220 = vmatpush1.msra.mxu0 0.0
  %2221 = vmatprep.subr.mxu0 0.0
  %2222 = vmatpush1.msra.mxu0 0.0
  %2223 = vmatprep.subr.mxu0 0.0
  %2224 = vmatpush1.msra.mxu0 0.0
  %2225 = vmatprep.subr.mxu0 0.0
  %2226 = vmatpush1.msra.mxu0 0.0
  %2227 = vmatprep.subr.mxu0 0.0
  %2228 = vmatpush1.msra.mxu0 0.0
  %2229 = vmatprep.subr.mxu0 0.0
  %2230 = vmatpush1.msra.mxu0 0.0
  %2231 = vmatprep.subr.mxu0 0.0
  %2232 = vmatpush1.msra.mxu0 0.0
  %2233 = vmatprep.subr.mxu0 0.0
  %2234 = vmatpush1.msra.mxu0 0.0
  %2235 = vmatprep.subr.mxu0 0.0
  %2236 = vmatpush1.msra.mxu0 0.0
  %2237 = vmatprep.subr.mxu0 0.0
  %2238 = vmatpush1.msra.mxu0 0.0
  %2239 = vmatprep.subr.mxu0 0.0
  %2240 = vmatpush1.msra.mxu0 0.0
  %2241 = vmatprep.mubr.f32.mxu0 0.0
  %2242 = vmatmul.mubr.f32.gmra.mrb[0].mxu0 %v372
  %v2243 = vpop.f32.mrb[0].mxu0
  %v2244 = vadd.f32 0.0, %v2243
  %v2245 = vpop.f32.mrb[0].mxu0
  %2246 = vmatprep.mubr.f32.mxu0 0.0
  %2247 = vmatmul.mubr.f32.gmra.mrb[0].mxu0 %v375
  %v2248 = vpop.f32.mrb[0].mxu0
  %v2249 = vadd.f32 0.0, %v2248
  %v2250 = vpop.f32.mrb[0].mxu0
  %2251 = vdwg.mxu0
  %2252 = vmatprep.subr.mxu0 0.0
  %2253 = vmatpush1.msra.mxu0 %v336
  %2254 = vmatprep.subr.mxu0 0.0
  %2255 = vmatpush1.msra.mxu0 0.0
  %2256 = vmatprep.subr.mxu0 0.0
  %2257 = vmatpush1.msra.mxu0 0.0
  %2258 = vmatprep.subr.mxu0 0.0
  %2259 = vmatpush1.msra.mxu0 0.0
  %2260 = vmatprep.subr.mxu0 0.0
  %2261 = vmatpush1.msra.mxu0 0.0
  %2262 = vmatprep.subr.mxu0 0.0
  %2263 = vmatpush1.msra.mxu0 0.0
  %2264 = vmatprep.subr.mxu0 0.0
  %2265 = vmatpush1.msra.mxu0 0.0
  %2266 = vmatprep.subr.mxu0 0.0
  %2267 = vmatpush1.msra.mxu0 0.0
  %2268 = vmatprep.subr.mxu0 0.0
  %2269 = vmatpush1.msra.mxu0 0.0
  %2270 = vmatprep.subr.mxu0 0.0
  %2271 = vmatpush1.msra.mxu0 0.0
  %2272 = vmatprep.subr.mxu0 0.0
  %2273 = vmatpush1.msra.mxu0 0.0
  %2274 = vmatprep.subr.mxu0 0.0
  %2275 = vmatpush1.msra.mxu0 0.0
  %2276 = vmatprep.subr.mxu0 0.0
  %2277 = vmatpush1.msra.mxu0 0.0
  %2278 = vmatprep.subr.mxu0 0.0
  %2279 = vmatpush1.msra.mxu0 0.0
  %2280 = vmatprep.subr.mxu0 0.0
  %2281 = vmatpush1.msra.mxu0 0.0
  %2282 = vmatprep.subr.mxu0 0.0
  %2283 = vmatpush1.msra.mxu0 0.0
  %2284 = vmatprep.subr.mxu0 0.0
  %2285 = vmatpush1.msra.mxu0 0.0
  %2286 = vmatprep.subr.mxu0 0.0
  %2287 = vmatpush1.msra.mxu0 0.0
  %2288 = vmatprep.subr.mxu0 0.0
  %2289 = vmatpush1.msra.mxu0 0.0
  %2290 = vmatprep.subr.mxu0 0.0
  %2291 = vmatpush1.msra.mxu0 0.0
  %2292 = vmatprep.subr.mxu0 0.0
  %2293 = vmatpush1.msra.mxu0 0.0
  %2294 = vmatprep.subr.mxu0 0.0
  %2295 = vmatpush1.msra.mxu0 0.0
  %2296 = vmatprep.subr.mxu0 0.0
  %2297 = vmatpush1.msra.mxu0 0.0
  %2298 = vmatprep.subr.mxu0 0.0
  %2299 = vmatpush1.msra.mxu0 0.0
  %2300 = vmatprep.subr.mxu0 0.0
  %2301 = vmatpush1.msra.mxu0 0.0
  %2302 = vmatprep.subr.mxu0 0.0
  %2303 = vmatpush1.msra.mxu0 0.0
  %2304 = vmatprep.subr.mxu0 0.0
  %2305 = vmatpush1.msra.mxu0 0.0
  %2306 = vmatprep.subr.mxu0 0.0
  %2307 = vmatpush1.msra.mxu0 0.0
  %2308 = vmatprep.subr.mxu0 0.0
  %2309 = vmatpush1.msra.mxu0 0.0
  %2310 = vmatprep.subr.mxu0 0.0
  %2311 = vmatpush1.msra.mxu0 0.0
  %2312 = vmatprep.subr.mxu0 0.0
  %2313 = vmatpush1.msra.mxu0 0.0
  %2314 = vmatprep.subr.mxu0 0.0
  %2315 = vmatpush1.msra.mxu0 0.0
  %2316 = vmatprep.mubr.f32.mxu0 0.0
  %2317 = vmatmul.mubr.f32.gmra.mrb[0].mxu0 %v372
  %v2318 = vpop.f32.mrb[0].mxu0
  %v2319 = vadd.f32 0.0, %v2318
  %v2320 = vpop.f32.mrb[0].mxu0
  %2321 = vmatprep.mubr.f32.mxu0 0.0
  %2322 = vmatmul.mubr.f32.gmra.mrb[0].mxu0 %v375
  %v2323 = vpop.f32.mrb[0].mxu0
  %v2324 = vadd.f32 0.0, %v2323
  %v2325 = vpop.f32.mrb[0].mxu0
  %2326 = vdwg.mxu0
  %2327 = vmatprep.subr.mxu0 0.0
  %2328 = vmatpush1.msra.mxu0 %v341
  %2329 = vmatprep.subr.mxu0 0.0
  %2330 = vmatpush1.msra.mxu0 0.0
  %2331 = vmatprep.subr.mxu0 0.0
  %2332 = vmatpush1.msra.mxu0 0.0
  %2333 = vmatprep.subr.mxu0 0.0
  %2334 = vmatpush1.msra.mxu0 0.0
  %2335 = vmatprep.subr.mxu0 0.0
  %2336 = vmatpush1.msra.mxu0 0.0
  %2337 = vmatprep.subr.mxu0 0.0
  %2338 = vmatpush1.msra.mxu0 0.0
  %2339 = vmatprep.subr.mxu0 0.0
  %2340 = vmatpush1.msra.mxu0 0.0
  %2341 = vmatprep.subr.mxu0 0.0
  %2342 = vmatpush1.msra.mxu0 0.0
  %2343 = vmatprep.subr.mxu0 0.0
  %2344 = vmatpush1.msra.mxu0 0.0
  %2345 = vmatprep.subr.mxu0 0.0
  %2346 = vmatpush1.msra.mxu0 0.0
  %2347 = vmatprep.subr.mxu0 0.0
  %2348 = vmatpush1.msra.mxu0 0.0
  %2349 = vmatprep.subr.mxu0 0.0
  %2350 = vmatpush1.msra.mxu0 0.0
  %2351 = vmatprep.subr.mxu0 0.0
  %2352 = vmatpush1.msra.mxu0 0.0
  %2353 = vmatprep.subr.mxu0 0.0
  %2354 = vmatpush1.msra.mxu0 0.0
  %2355 = vmatprep.subr.mxu0 0.0
  %2356 = vmatpush1.msra.mxu0 0.0
  %2357 = vmatprep.subr.mxu0 0.0
  %2358 = vmatpush1.msra.mxu0 0.0
  %2359 = vmatprep.subr.mxu0 0.0
  %2360 = vmatpush1.msra.mxu0 0.0
  %2361 = vmatprep.subr.mxu0 0.0
  %2362 = vmatpush1.msra.mxu0 0.0
  %2363 = vmatprep.subr.mxu0 0.0
  %2364 = vmatpush1.msra.mxu0 0.0
  %2365 = vmatprep.subr.mxu0 0.0
  %2366 = vmatpush1.msra.mxu0 0.0
  %2367 = vmatprep.subr.mxu0 0.0
  %2368 = vmatpush1.msra.mxu0 0.0
  %2369 = vmatprep.subr.mxu0 0.0
  %2370 = vmatpush1.msra.mxu0 0.0
  %2371 = vmatprep.subr.mxu0 0.0
  %2372 = vmatpush1.msra.mxu0 0.0
  %2373 = vmatprep.subr.mxu0 0.0
  %2374 = vmatpush1.msra.mxu0 0.0
  %2375 = vmatprep.subr.mxu0 0.0
  %2376 = vmatpush1.msra.mxu0 0.0
  %2377 = vmatprep.subr.mxu0 0.0
  %2378 = vmatpush1.msra.mxu0 0.0
  %2379 = vmatprep.subr.mxu0 0.0
  %2380 = vmatpush1.msra.mxu0 0.0
  %2381 = vmatprep.subr.mxu0 0.0
  %2382 = vmatpush1.msra.mxu0 0.0
  %2383 = vmatprep.subr.mxu0 0.0
  %2384 = vmatpush1.msra.mxu0 0.0
  %2385 = vmatprep.subr.mxu0 0.0
  %2386 = vmatpush1.msra.mxu0 0.0
  %2387 = vmatprep.subr.mxu0 0.0
  %2388 = vmatpush1.msra.mxu0 0.0
  %2389 = vmatprep.subr.mxu0 0.0
  %2390 = vmatpush1.msra.mxu0 0.0
  %2391 = vmatprep.mubr.f32.mxu0 0.0
  %2392 = vmatmul.mubr.f32.gmra.mrb[0].mxu0 %v372
  %v2393 = vpop.f32.mrb[0].mxu0
  %v2394 = vadd.f32 0.0, %v2393
  %v2395 = vpop.f32.mrb[0].mxu0
  %2396 = vmatprep.mubr.f32.mxu0 0.0
  %2397 = vmatmul.mubr.f32.gmra.mrb[0].mxu0 %v375
  %v2398 = vpop.f32.mrb[0].mxu0
  %v2399 = vadd.f32 0.0, %v2398
  %v2400 = vpop.f32.mrb[0].mxu0
  %2401 = vdwg.mxu0
  %2402 = vmatprep.subr.mxu0 0.0
  %2403 = vmatpush1.msra.mxu0 %v346
  %2404 = vmatprep.subr.mxu0 0.0
  %2405 = vmatpush1.msra.mxu0 0.0
  %2406 = vmatprep.subr.mxu0 0.0
  %2407 = vmatpush1.msra.mxu0 0.0
  %2408 = vmatprep.subr.mxu0 0.0
  %2409 = vmatpush1.msra.mxu0 0.0
  %2410 = vmatprep.subr.mxu0 0.0
  %2411 = vmatpush1.msra.mxu0 0.0
  %2412 = vmatprep.subr.mxu0 0.0
  %2413 = vmatpush1.msra.mxu0 0.0
  %2414 = vmatprep.subr.mxu0 0.0
  %2415 = vmatpush1.msra.mxu0 0.0
  %2416 = vmatprep.subr.mxu0 0.0
  %2417 = vmatpush1.msra.mxu0 0.0
  %2418 = vmatprep.subr.mxu0 0.0
  %2419 = vmatpush1.msra.mxu0 0.0
  %2420 = vmatprep.subr.mxu0 0.0
  %2421 = vmatpush1.msra.mxu0 0.0
  %2422 = vmatprep.subr.mxu0 0.0
  %2423 = vmatpush1.msra.mxu0 0.0
  %2424 = vmatprep.subr.mxu0 0.0
  %2425 = vmatpush1.msra.mxu0 0.0
  %2426 = vmatprep.subr.mxu0 0.0
  %2427 = vmatpush1.msra.mxu0 0.0
  %2428 = vmatprep.subr.mxu0 0.0
  %2429 = vmatpush1.msra.mxu0 0.0
  %2430 = vmatprep.subr.mxu0 0.0
  %2431 = vmatpush1.msra.mxu0 0.0
  %2432 = vmatprep.subr.mxu0 0.0
  %2433 = vmatpush1.msra.mxu0 0.0
  %2434 = vmatprep.subr.mxu0 0.0
  %2435 = vmatpush1.msra.mxu0 0.0
  %2436 = vmatprep.subr.mxu0 0.0
  %2437 = vmatpush1.msra.mxu0 0.0
  %2438 = vmatprep.subr.mxu0 0.0
  %2439 = vmatpush1.msra.mxu0 0.0
  %2440 = vmatprep.subr.mxu0 0.0
  %2441 = vmatpush1.msra.mxu0 0.0
  %2442 = vmatprep.subr.mxu0 0.0
  %2443 = vmatpush1.msra.mxu0 0.0
  %2444 = vmatprep.subr.mxu0 0.0
  %2445 = vmatpush1.msra.mxu0 0.0
  %2446 = vmatprep.subr.mxu0 0.0
  %2447 = vmatpush1.msra.mxu0 0.0
  %2448 = vmatprep.subr.mxu0 0.0
  %2449 = vmatpush1.msra.mxu0 0.0
  %2450 = vmatprep.subr.mxu0 0.0
  %2451 = vmatpush1.msra.mxu0 0.0
  %2452 = vmatprep.subr.mxu0 0.0
  %2453 = vmatpush1.msra.mxu0 0.0
  %2454 = vmatprep.subr.mxu0 0.0
  %2455 = vmatpush1.msra.mxu0 0.0
  %2456 = vmatprep.subr.mxu0 0.0
  %2457 = vmatpush1.msra.mxu0 0.0
  %2458 = vmatprep.subr.mxu0 0.0
  %2459 = vmatpush1.msra.mxu0 0.0
  %2460 = vmatprep.subr.mxu0 0.0
  %2461 = vmatpush1.msra.mxu0 0.0
  %2462 = vmatprep.subr.mxu0 0.0
  %2463 = vmatpush1.msra.mxu0 0.0
  %2464 = vmatprep.subr.mxu0 0.0
  %2465 = vmatpush1.msra.mxu0 0.0
  %2466 = vmatprep.mubr.f32.mxu0 0.0
  %2467 = vmatmul.mubr.f32.gmra.mrb[0].mxu0 %v372
  %v2468 = vpop.f32.mrb[0].mxu0
  %v2469 = vadd.f32 0.0, %v2468
  %v2470 = vpop.f32.mrb[0].mxu0
  %2471 = vmatprep.mubr.f32.mxu0 0.0
  %2472 = vmatmul.mubr.f32.gmra.mrb[0].mxu0 %v375
  %v2473 = vpop.f32.mrb[0].mxu0
  %v2474 = vadd.f32 0.0, %v2473
  %v2475 = vpop.f32.mrb[0].mxu0
  %2476 = vdwg.mxu0
  %2477 = vmatprep.subr.mxu0 0.0
  %2478 = vmatpush1.msra.mxu0 %v351
  %2479 = vmatprep.subr.mxu0 0.0
  %2480 = vmatpush1.msra.mxu0 0.0
  %2481 = vmatprep.subr.mxu0 0.0
  %2482 = vmatpush1.msra.mxu0 0.0
  %2483 = vmatprep.subr.mxu0 0.0
  %2484 = vmatpush1.msra.mxu0 0.0
  %2485 = vmatprep.subr.mxu0 0.0
  %2486 = vmatpush1.msra.mxu0 0.0
  %2487 = vmatprep.subr.mxu0 0.0
  %2488 = vmatpush1.msra.mxu0 0.0
  %2489 = vmatprep.subr.mxu0 0.0
  %2490 = vmatpush1.msra.mxu0 0.0
  %2491 = vmatprep.subr.mxu0 0.0
  %2492 = vmatpush1.msra.mxu0 0.0
  %2493 = vmatprep.subr.mxu0 0.0
  %2494 = vmatpush1.msra.mxu0 0.0
  %2495 = vmatprep.subr.mxu0 0.0
  %2496 = vmatpush1.msra.mxu0 0.0
  %2497 = vmatprep.subr.mxu0 0.0
  %2498 = vmatpush1.msra.mxu0 0.0
  %2499 = vmatprep.subr.mxu0 0.0
  %2500 = vmatpush1.msra.mxu0 0.0
  %2501 = vmatprep.subr.mxu0 0.0
  %2502 = vmatpush1.msra.mxu0 0.0
  %2503 = vmatprep.subr.mxu0 0.0
  %2504 = vmatpush1.msra.mxu0 0.0
  %2505 = vmatprep.subr.mxu0 0.0
  %2506 = vmatpush1.msra.mxu0 0.0
  %2507 = vmatprep.subr.mxu0 0.0
  %2508 = vmatpush1.msra.mxu0 0.0
  %2509 = vmatprep.subr.mxu0 0.0
  %2510 = vmatpush1.msra.mxu0 0.0
  %2511 = vmatprep.subr.mxu0 0.0
  %2512 = vmatpush1.msra.mxu0 0.0
  %2513 = vmatprep.subr.mxu0 0.0
  %2514 = vmatpush1.msra.mxu0 0.0
  %2515 = vmatprep.subr.mxu0 0.0
  %2516 = vmatpush1.msra.mxu0 0.0
  %2517 = vmatprep.subr.mxu0 0.0
  %2518 = vmatpush1.msra.mxu0 0.0
  %2519 = vmatprep.subr.mxu0 0.0
  %2520 = vmatpush1.msra.mxu0 0.0
  %2521 = vmatprep.subr.mxu0 0.0
  %2522 = vmatpush1.msra.mxu0 0.0
  %2523 = vmatprep.subr.mxu0 0.0
  %2524 = vmatpush1.msra.mxu0 0.0
  %2525 = vmatprep.subr.mxu0 0.0
  %2526 = vmatpush1.msra.mxu0 0.0
  %2527 = vmatprep.subr.mxu0 0.0
  %2528 = vmatpush1.msra.mxu0 0.0
  %2529 = vmatprep.subr.mxu0 0.0
  %2530 = vmatpush1.msra.mxu0 0.0
  %2531 = vmatprep.subr.mxu0 0.0
  %2532 = vmatpush1.msra.mxu0 0.0
  %2533 = vmatprep.subr.mxu0 0.0
  %2534 = vmatpush1.msra.mxu0 0.0
  %2535 = vmatprep.subr.mxu0 0.0
  %2536 = vmatpush1.msra.mxu0 0.0
  %2537 = vmatprep.subr.mxu0 0.0
  %2538 = vmatpush1.msra.mxu0 0.0
  %2539 = vmatprep.subr.mxu0 0.0
  %2540 = vmatpush1.msra.mxu0 0.0
  %2541 = vmatprep.mubr.f32.mxu0 0.0
  %2542 = vmatmul.mubr.f32.gmra.mrb[0].mxu0 %v372
  %v2543 = vpop.f32.mrb[0].mxu0
  %v2544 = vadd.f32 0.0, %v2543
  %v2545 = vpop.f32.mrb[0].mxu0
  %2546 = vmatprep.mubr.f32.mxu0 0.0
  %2547 = vmatmul.mubr.f32.gmra.mrb[0].mxu0 %v375
  %v2548 = vpop.f32.mrb[0].mxu0
  %v2549 = vadd.f32 0.0, %v2548
  %v2550 = vpop.f32.mrb[0].mxu0
  %2551 = vdwg.mxu0
  %2552 = vmatprep.subr.mxu0 0.0
  %2553 = vmatpush1.msra.mxu0 %v356
  %2554 = vmatprep.subr.mxu0 0.0
  %2555 = vmatpush1.msra.mxu0 0.0
  %2556 = vmatprep.subr.mxu0 0.0
  %2557 = vmatpush1.msra.mxu0 0.0
  %2558 = vmatprep.subr.mxu0 0.0
  %2559 = vmatpush1.msra.mxu0 0.0
  %2560 = vmatprep.subr.mxu0 0.0
  %2561 = vmatpush1.msra.mxu0 0.0
  %2562 = vmatprep.subr.mxu0 0.0
  %2563 = vmatpush1.msra.mxu0 0.0
  %2564 = vmatprep.subr.mxu0 0.0
  %2565 = vmatpush1.msra.mxu0 0.0
  %2566 = vmatprep.subr.mxu0 0.0
  %2567 = vmatpush1.msra.mxu0 0.0
  %2568 = vmatprep.subr.mxu0 0.0
  %2569 = vmatpush1.msra.mxu0 0.0
  %2570 = vmatprep.subr.mxu0 0.0
  %2571 = vmatpush1.msra.mxu0 0.0
  %2572 = vmatprep.subr.mxu0 0.0
  %2573 = vmatpush1.msra.mxu0 0.0
  %2574 = vmatprep.subr.mxu0 0.0
  %2575 = vmatpush1.msra.mxu0 0.0
  %2576 = vmatprep.subr.mxu0 0.0
  %2577 = vmatpush1.msra.mxu0 0.0
  %2578 = vmatprep.subr.mxu0 0.0
  %2579 = vmatpush1.msra.mxu0 0.0
  %2580 = vmatprep.subr.mxu0 0.0
  %2581 = vmatpush1.msra.mxu0 0.0
  %2582 = vmatprep.subr.mxu0 0.0
  %2583 = vmatpush1.msra.mxu0 0.0
  %2584 = vmatprep.subr.mxu0 0.0
  %2585 = vmatpush1.msra.mxu0 0.0
  %2586 = vmatprep.subr.mxu0 0.0
  %2587 = vmatpush1.msra.mxu0 0.0
  %2588 = vmatprep.subr.mxu0 0.0
  %2589 = vmatpush1.msra.mxu0 0.0
  %2590 = vmatprep.subr.mxu0 0.0
  %2591 = vmatpush1.msra.mxu0 0.0
  %2592 = vmatprep.subr.mxu0 0.0
  %2593 = vmatpush1.msra.mxu0 0.0
  %2594 = vmatprep.subr.mxu0 0.0
  %2595 = vmatpush1.msra.mxu0 0.0
  %2596 = vmatprep.subr.mxu0 0.0
  %2597 = vmatpush1.msra.mxu0 0.0
  %2598 = vmatprep.subr.mxu0 0.0
  %2599 = vmatpush1.msra.mxu0 0.0
  %2600 = vmatprep.subr.mxu0 0.0
  %2601 = vmatpush1.msra.mxu0 0.0
  %2602 = vmatprep.subr.mxu0 0.0
  %2603 = vmatpush1.msra.mxu0 0.0
  %2604 = vmatprep.subr.mxu0 0.0
  %2605 = vmatpush1.msra.mxu0 0.0
  %2606 = vmatprep.subr.mxu0 0.0
  %2607 = vmatpush1.msra.mxu0 0.0
  %2608 = vmatprep.subr.mxu0 0.0
  %2609 = vmatpush1.msra.mxu0 0.0
  %2610 = vmatprep.subr.mxu0 0.0
  %2611 = vmatpush1.msra.mxu0 0.0
  %2612 = vmatprep.subr.mxu0 0.0
  %2613 = vmatpush1.msra.mxu0 0.0
  %2614 = vmatprep.subr.mxu0 0.0
  %2615 = vmatpush1.msra.mxu0 0.0
  %2616 = vmatprep.mubr.f32.mxu0 0.0
  %2617 = vmatmul.mubr.f32.gmra.mrb[0].mxu0 %v372
  %v2618 = vpop.f32.mrb[0].mxu0
  %v2619 = vadd.f32 0.0, %v2618
  %v2620 = vpop.f32.mrb[0].mxu0
  %2621 = vmatprep.mubr.f32.mxu0 0.0
  %2622 = vmatmul.mubr.f32.gmra.mrb[0].mxu0 %v375
  %v2623 = vpop.f32.mrb[0].mxu0
  %v2624 = vadd.f32 0.0, %v2623
  %v2625 = vpop.f32.mrb[0].mxu0
  %2626 = vdwg.mxu0
  %2627 = vmatprep.subr.mxu0 0.0
  %2628 = vmatpush1.msra.mxu0 %v361
  %2629 = vmatprep.subr.mxu0 0.0
  %2630 = vmatpush1.msra.mxu0 0.0
  %2631 = vmatprep.subr.mxu0 0.0
  %2632 = vmatpush1.msra.mxu0 0.0
  %2633 = vmatprep.subr.mxu0 0.0
  %2634 = vmatpush1.msra.mxu0 0.0
  %2635 = vmatprep.subr.mxu0 0.0
  %2636 = vmatpush1.msra.mxu0 0.0
  %2637 = vmatprep.subr.mxu0 0.0
  %2638 = vmatpush1.msra.mxu0 0.0
  %2639 = vmatprep.subr.mxu0 0.0
  %2640 = vmatpush1.msra.mxu0 0.0
  %2641 = vmatprep.subr.mxu0 0.0
  %2642 = vmatpush1.msra.mxu0 0.0
  %2643 = vmatprep.subr.mxu0 0.0
  %2644 = vmatpush1.msra.mxu0 0.0
  %2645 = vmatprep.subr.mxu0 0.0
  %2646 = vmatpush1.msra.mxu0 0.0
  %2647 = vmatprep.subr.mxu0 0.0
  %2648 = vmatpush1.msra.mxu0 0.0
  %2649 = vmatprep.subr.mxu0 0.0
  %2650 = vmatpush1.msra.mxu0 0.0
  %2651 = vmatprep.subr.mxu0 0.0
  %2652 = vmatpush1.msra.mxu0 0.0
  %2653 = vmatprep.subr.mxu0 0.0
  %2654 = vmatpush1.msra.mxu0 0.0
  %2655 = vmatprep.subr.mxu0 0.0
  %2656 = vmatpush1.msra.mxu0 0.0
  %2657 = vmatprep.subr.mxu0 0.0
  %2658 = vmatpush1.msra.mxu0 0.0
  %2659 = vmatprep.subr.mxu0 0.0
  %2660 = vmatpush1.msra.mxu0 0.0
  %2661 = vmatprep.subr.mxu0 0.0
  %2662 = vmatpush1.msra.mxu0 0.0
  %2663 = vmatprep.subr.mxu0 0.0
  %2664 = vmatpush1.msra.mxu0 0.0
  %2665 = vmatprep.subr.mxu0 0.0
  %2666 = vmatpush1.msra.mxu0 0.0
  %2667 = vmatprep.subr.mxu0 0.0
  %2668 = vmatpush1.msra.mxu0 0.0
  %2669 = vmatprep.subr.mxu0 0.0
  %2670 = vmatpush1.msra.mxu0 0.0
  %2671 = vmatprep.subr.mxu0 0.0
  %2672 = vmatpush1.msra.mxu0 0.0
  %2673 = vmatprep.subr.mxu0 0.0
  %2674 = vmatpush1.msra.mxu0 0.0
  %2675 = vmatprep.subr.mxu0 0.0
  %2676 = vmatpush1.msra.mxu0 0.0
  %2677 = vmatprep.subr.mxu0 0.0
  %2678 = vmatpush1.msra.mxu0 0.0
  %2679 = vmatprep.subr.mxu0 0.0
  %2680 = vmatpush1.msra.mxu0 0.0
  %2681 = vmatprep.subr.mxu0 0.0
  %2682 = vmatpush1.msra.mxu0 0.0
  %2683 = vmatprep.subr.mxu0 0.0
  %2684 = vmatpush1.msra.mxu0 0.0
  %2685 = vmatprep.subr.mxu0 0.0
  %2686 = vmatpush1.msra.mxu0 0.0
  %2687 = vmatprep.subr.mxu0 0.0
  %2688 = vmatpush1.msra.mxu0 0.0
  %2689 = vmatprep.subr.mxu0 0.0
  %2690 = vmatpush1.msra.mxu0 0.0
  %2691 = vmatprep.mubr.f32.mxu0 0.0
  %2692 = vmatmul.mubr.f32.gmra.mrb[0].mxu0 %v372
  %v2693 = vpop.f32.mrb[0].mxu0
  %v2694 = vadd.f32 0.0, %v2693
  %v2695 = vpop.f32.mrb[0].mxu0
  %2696 = vmatprep.mubr.f32.mxu0 0.0
  %2697 = vmatmul.mubr.f32.gmra.mrb[0].mxu0 %v375
  %v2698 = vpop.f32.mrb[0].mxu0
  %v2699 = vadd.f32 0.0, %v2698
  %v2700 = vpop.f32.mrb[0].mxu0
  %2701 = vdwg.mxu0
  %2702 = vmatprep.subr.mxu0 0.0
  %2703 = vmatpush1.msra.mxu0 %v366
  %2704 = vmatprep.subr.mxu0 0.0
  %2705 = vmatpush1.msra.mxu0 0.0
  %2706 = vmatprep.subr.mxu0 0.0
  %2707 = vmatpush1.msra.mxu0 0.0
  %2708 = vmatprep.subr.mxu0 0.0
  %2709 = vmatpush1.msra.mxu0 0.0
  %2710 = vmatprep.subr.mxu0 0.0
  %2711 = vmatpush1.msra.mxu0 0.0
  %2712 = vmatprep.subr.mxu0 0.0
  %2713 = vmatpush1.msra.mxu0 0.0
  %2714 = vmatprep.subr.mxu0 0.0
  %2715 = vmatpush1.msra.mxu0 0.0
  %2716 = vmatprep.subr.mxu0 0.0
  %2717 = vmatpush1.msra.mxu0 0.0
  %2718 = vmatprep.subr.mxu0 0.0
  %2719 = vmatpush1.msra.mxu0 0.0
  %2720 = vmatprep.subr.mxu0 0.0
  %2721 = vmatpush1.msra.mxu0 0.0
  %2722 = vmatprep.subr.mxu0 0.0
  %2723 = vmatpush1.msra.mxu0 0.0
  %2724 = vmatprep.subr.mxu0 0.0
  %2725 = vmatpush1.msra.mxu0 0.0
  %2726 = vmatprep.subr.mxu0 0.0
  %2727 = vmatpush1.msra.mxu0 0.0
  %2728 = vmatprep.subr.mxu0 0.0
  %2729 = vmatpush1.msra.mxu0 0.0
  %2730 = vmatprep.subr.mxu0 0.0
  %2731 = vmatpush1.msra.mxu0 0.0
  %2732 = vmatprep.subr.mxu0 0.0
  %2733 = vmatpush1.msra.mxu0 0.0
  %2734 = vmatprep.subr.mxu0 0.0
  %2735 = vmatpush1.msra.mxu0 0.0
  %2736 = vmatprep.subr.mxu0 0.0
  %2737 = vmatpush1.msra.mxu0 0.0
  %2738 = vmatprep.subr.mxu0 0.0
  %2739 = vmatpush1.msra.mxu0 0.0
  %2740 = vmatprep.subr.mxu0 0.0
  %2741 = vmatpush1.msra.mxu0 0.0
  %2742 = vmatprep.subr.mxu0 0.0
  %2743 = vmatpush1.msra.mxu0 0.0
  %2744 = vmatprep.subr.mxu0 0.0
  %2745 = vmatpush1.msra.mxu0 0.0
  %2746 = vmatprep.subr.mxu0 0.0
  %2747 = vmatpush1.msra.mxu0 0.0
  %2748 = vmatprep.subr.mxu0 0.0
  %2749 = vmatpush1.msra.mxu0 0.0
  %2750 = vmatprep.subr.mxu0 0.0
  %2751 = vmatpush1.msra.mxu0 0.0
  %2752 = vmatprep.subr.mxu0 0.0
  %2753 = vmatpush1.msra.mxu0 0.0
  %2754 = vmatprep.subr.mxu0 0.0
  %2755 = vmatpush1.msra.mxu0 0.0
  %2756 = vmatprep.subr.mxu0 0.0
  %2757 = vmatpush1.msra.mxu0 0.0
  %2758 = vmatprep.subr.mxu0 0.0
  %2759 = vmatpush1.msra.mxu0 0.0
  %2760 = vmatprep.subr.mxu0 0.0
  %2761 = vmatpush1.msra.mxu0 0.0
  %2762 = vmatprep.subr.mxu0 0.0
  %2763 = vmatpush1.msra.mxu0 0.0
  %2764 = vmatprep.subr.mxu0 0.0
  %2765 = vmatpush1.msra.mxu0 0.0
  %2766 = vmatprep.mubr.f32.mxu0 0.0
  %2767 = vmatmul.mubr.f32.gmra.mrb[0].mxu0 %v372
  %v2768 = vpop.f32.mrb[0].mxu0
  %v2769 = vadd.f32 0.0, %v2768
  %v2770 = vpop.f32.mrb[0].mxu0
  %2771 = vmatprep.mubr.f32.mxu0 0.0
  %2772 = vmatmul.mubr.f32.gmra.mrb[0].mxu0 %v375
  %v2773 = vpop.f32.mrb[0].mxu0
  %v2774 = vadd.f32 0.0, %v2773
  %v2775 = vpop.f32.mrb[0].mxu0
  %2776 = vdwg.mxu0
  %vm2777 = vcmask 130048
  %2778 = vst.msk [vmem:[%s3] sm:$0xff] %vm2777, %v444
  %2779 = vst.msk [vmem:[%s3 + $0x8] sm:$0xff] %vm2777, %v449
  %2780 = vst.msk [vmem:[%s3 + $0x10] sm:$0xff] %vm2777, %v519
  %2781 = vst.msk [vmem:[%s3 + $0x18] sm:$0xff] %vm2777, %v524
  %2782 = vst.msk [vmem:[%s3 + $0x20] sm:$0xff] %vm2777, %v594
  %2783 = vst.msk [vmem:[%s3 + $0x28] sm:$0xff] %vm2777, %v599
  %2784 = vst.msk [vmem:[%s3 + $0x30] sm:$0xff] %vm2777, %v669
  %2785 = vst.msk [vmem:[%s3 + $0x38] sm:$0xff] %vm2777, %v674
  %2786 = vst.msk [vmem:[%s3 + $0x40] sm:$0xff] %vm2777, %v744
  %2787 = vst.msk [vmem:[%s3 + $0x48] sm:$0xff] %vm2777, %v749
  %2788 = vst.msk [vmem:[%s3 + $0x50] sm:$0xff] %vm2777, %v819
  %2789 = vst.msk [vmem:[%s3 + $0x58] sm:$0xff] %vm2777, %v824
  %2790 = vst.msk [vmem:[%s3 + $0x60] sm:$0xff] %vm2777, %v894
  %2791 = vst.msk [vmem:[%s3 + $0x68] sm:$0xff] %vm2777, %v899
  %2792 = vst.msk [vmem:[%s3 + $0x70] sm:$0xff] %vm2777, %v969
  %2793 = vst.msk [vmem:[%s3 + $0x78] sm:$0xff] %vm2777, %v974
  %2794 = vst.msk [vmem:[%s3 + $0x80] sm:$0xff] %vm2777, %v1044
  %2795 = vst.msk [vmem:[%s3 + $0x88] sm:$0xff] %vm2777, %v1049
  %2796 = vst.msk [vmem:[%s3 + $0x90] sm:$0xff] %vm2777, %v1119
  %2797 = vst.msk [vmem:[%s3 + $0x98] sm:$0xff] %vm2777, %v1124
  %2798 = vst.msk [vmem:[%s3 + $0xa0] sm:$0xff] %vm2777, %v1194
  %2799 = vst.msk [vmem:[%s3 + $0xa8] sm:$0xff] %vm2777, %v1199
  %2800 = vst.msk [vmem:[%s3 + $0xb0] sm:$0xff] %vm2777, %v1269
  %2801 = vst.msk [vmem:[%s3 + $0xb8] sm:$0xff] %vm2777, %v1274
  %2802 = vst.msk [vmem:[%s3 + $0xc0] sm:$0xff] %vm2777, %v1344
  %2803 = vst.msk [vmem:[%s3 + $0xc8] sm:$0xff] %vm2777, %v1349
  %2804 = vst.msk [vmem:[%s3 + $0xd0] sm:$0xff] %vm2777, %v1419
  %2805 = vst.msk [vmem:[%s3 + $0xd8] sm:$0xff] %vm2777, %v1424
  %2806 = vst.msk [vmem:[%s3 + $0xe0] sm:$0xff] %vm2777, %v1494
  %2807 = vst.msk [vmem:[%s3 + $0xe8] sm:$0xff] %vm2777, %v1499
  %2808 = vst.msk [vmem:[%s3 + $0xf0] sm:$0xff] %vm2777, %v1569
  %2809 = vst.msk [vmem:[%s3 + $0xf8] sm:$0xff] %vm2777, %v1574
  %2810 = vst.msk [vmem:[%s3 + $0x100] sm:$0xff] %vm2777, %v1644
  %2811 = vst.msk [vmem:[%s3 + $0x108] sm:$0xff] %vm2777, %v1649
  %2812 = vst.msk [vmem:[%s3 + $0x110] sm:$0xff] %vm2777, %v1719
  %2813 = vst.msk [vmem:[%s3 + $0x118] sm:$0xff] %vm2777, %v1724
  %2814 = vst.msk [vmem:[%s3 + $0x120] sm:$0xff] %vm2777, %v1794
  %2815 = vst.msk [vmem:[%s3 + $0x128] sm:$0xff] %vm2777, %v1799
  %2816 = vst.msk [vmem:[%s3 + $0x130] sm:$0xff] %vm2777, %v1869
  %2817 = vst.msk [vmem:[%s3 + $0x138] sm:$0xff] %vm2777, %v1874
  %2818 = vst.msk [vmem:[%s3 + $0x140] sm:$0xff] %vm2777, %v1944
  %2819 = vst.msk [vmem:[%s3 + $0x148] sm:$0xff] %vm2777, %v1949
  %2820 = vst.msk [vmem:[%s3 + $0x150] sm:$0xff] %vm2777, %v2019
  %2821 = vst.msk [vmem:[%s3 + $0x158] sm:$0xff] %vm2777, %v2024
  %2822 = vst.msk [vmem:[%s3 + $0x160] sm:$0xff] %vm2777, %v2094
  %2823 = vst.msk [vmem:[%s3 + $0x168] sm:$0xff] %vm2777, %v2099
  %2824 = vst.msk [vmem:[%s3 + $0x170] sm:$0xff] %vm2777, %v2169
  %2825 = vst.msk [vmem:[%s3 + $0x178] sm:$0xff] %vm2777, %v2174
  %2826 = vst.msk [vmem:[%s3 + $0x180] sm:$0xff] %vm2777, %v2244
  %2827 = vst.msk [vmem:[%s3 + $0x188] sm:$0xff] %vm2777, %v2249
  %2828 = vst.msk [vmem:[%s3 + $0x190] sm:$0xff] %vm2777, %v2319
  %2829 = vst.msk [vmem:[%s3 + $0x198] sm:$0xff] %vm2777, %v2324
  %2830 = vst.msk [vmem:[%s3 + $0x1a0] sm:$0xff] %vm2777, %v2394
  %2831 = vst.msk [vmem:[%s3 + $0x1a8] sm:$0xff] %vm2777, %v2399
  %2832 = vst.msk [vmem:[%s3 + $0x1b0] sm:$0xff] %vm2777, %v2469
  %2833 = vst.msk [vmem:[%s3 + $0x1b8] sm:$0xff] %vm2777, %v2474
  %2834 = vst.msk [vmem:[%s3 + $0x1c0] sm:$0xff] %vm2777, %v2544
  %2835 = vst.msk [vmem:[%s3 + $0x1c8] sm:$0xff] %vm2777, %v2549
  %2836 = vst.msk [vmem:[%s3 + $0x1d0] sm:$0xff] %vm2777, %v2619
  %2837 = vst.msk [vmem:[%s3 + $0x1d8] sm:$0xff] %vm2777, %v2624
  %2838 = vst.msk [vmem:[%s3 + $0x1e0] sm:$0xff] %vm2777, %v2694
  %2839 = vst.msk [vmem:[%s3 + $0x1e8] sm:$0xff] %vm2777, %v2699
  %2840 = vst.msk [vmem:[%s3 + $0x1f0] sm:$0xff] %vm2777, %v2769
  %2841 = vst.msk [vmem:[%s3 + $0x1f8] sm:$0xff] %vm2777, %v2774
  // Predicated region
  $region14: #{_lambda_.5} parent=0 // pred_check
    _
  $region15: #{_lambda_.5} parent=0 // pred_check_branch
    %2843 = sbr.rel (0) target = $region17
  $region16: #{_lambda_.5} parent=0 // pred_region
    _
  $region17: #{_lambda_.5} parent=0 // pred_fallthru
    _
  // Predicated region
  $region18: #{_lambda_.5} parent=0 // pred_check
    _
  $region19: #{_lambda_.5} parent=0 // pred_check_branch
    %2845 = sbr.rel (0) target = $region21
  $region20: #{_lambda_.5} parent=0 // pred_region
    _
  $region21: #{_lambda_.5} parent=0 // pred_fallthru
    _

</llo_original>
